<compile_context>
chip_gen: v6e
topology: v6e:2x2x1
jax: 0.10.0
libtpu: 0.0.40
codegen_flags: <defaults>
</compile_context>

<pallas_src>
import functools

import jax
import jax.numpy as jnp
from jax import lax
from jax.experimental import pallas as pl
from jax.experimental.pallas import tpu as pltpu


def _lstm_fc_kernel(x_ref, wih0_ref, wihr_ref, whhs_ref, whht_ref, bias_ref,
                    w3_ref, b3_ref, out_ref, *scratch,
                    num_layers, seq_len, t_chunk, hidden, b_tile):
    """Stacked LSTM + Linear(hidden -> 1) for one batch tile.

    x_ref    : (T, Bt, D)           input sequence (time-major, padded batch)
    wih0_ref : (D, 4H)              layer-0 input weights  (T, cols [i,f,o,g])
    wihr_ref : (max(L-1,1), H, 4H)  layer-1.. input weights (T, cols [i,f,o,g])
    whhs_ref : (L, H, 3H)           recurrent weights, sigmoid gates [i,f,o]
    whht_ref : (L, H, H)            recurrent weights, tanh gate [g]
    bias_ref : (L, 1, 4H)           b_ih + b_hh merged, cols [i,f,o,g]
    w3_ref   : (1, H)               fc3 weight row
    b3_ref   : (1, 1)               fc3 bias
    out_ref  : (Bt, 1)
    scratch  : gin (Tc, Bt, 4H)  [+ seq (T, Bt, H) when num_layers > 1]
    """
    H = hidden
    T = seq_len
    Tc = t_chunk
    B = b_tile
    gin_scr = scratch[0]
    seq_scr = scratch[1] if num_layers > 1 else None

    # Static chunk schedule (T, Tc are trace-time constants).
    chunk_bounds = [(t0, min(Tc, T - t0)) for t0 in range(0, T, Tc)]

    def run_layer(inp_ref, wih, whh_s, whh_t, bias, write_seq):
        h = jnp.zeros((B, H), jnp.float32)
        c = jnp.zeros((B, H), jnp.float32)

        for t0, tc in chunk_bounds:
            # ---- input path off the serial h->h chain: one big matmul + bias
            # per chunk of timesteps, stored in the gin scratch.
            inp2d = inp_ref[pl.ds(t0, tc)].reshape(tc * B, -1)
            # TODO(synk): optionally cast inp2d/wih to bf16 (f32 accumulate)
            # for higher MXU throughput on this off-chain matmul (needs a
            # looser tolerance vs the f32 reference).
            g_all = jnp.dot(inp2d, wih,
                            preferred_element_type=jnp.float32) + bias
            gin_scr[pl.ds(0, tc)] = g_all.reshape(tc, B, 4 * H)

            # ---- recurrence: only h @ W_hh plus VPU/EUP gate math per step.
            # TODO(synk): hold W_hh weight-stationary across the time loop with
            # pltpu.matmul_push_rhs / matmul_acc_lhs / matmul_pop (tiled to the
            # per-generation MXU width) to stop re-streaming weight rows every
            # step of the serial chain.
            def step(t, carry):
                h, c = carry
                gin = gin_scr[t]
                # Split by gate block so sigmoid work on [i,f,o] overlaps the
                # MXU producing the tanh-gate columns.
                pre_s = gin[:, :3 * H] + jnp.dot(
                    h, whh_s, preferred_element_type=jnp.float32)
                pre_t = gin[:, 3 * H:] + jnp.dot(
                    h, whh_t, preferred_element_type=jnp.float32)
                # sigmoid(x) = 0.5*tanh(0.5*x) + 0.5 -> one EUP tanh per gate;
                # [i,f,o] is one contiguous lane-aligned slab after repacking.
                sg = 0.5 * jnp.tanh(0.5 * pre_s) + 0.5
                i = sg[:, 0 * H:1 * H]
                f = sg[:, 1 * H:2 * H]
                o = sg[:, 2 * H:3 * H]
                g = jnp.tanh(pre_t)
                c_new = f * c + i * g
                h_new = o * jnp.tanh(c_new)
                if write_seq:
                    seq_scr[t0 + t] = h_new
                return (h_new, c_new)

            # Partial unroll: lets the LLO scheduler overlap the next step's
            # gin load / MXU issue with the current step's EUP tail.
            h, c = lax.fori_loop(0, tc, step, (h, c), unroll=min(tc, 8))
        return h

    # ---- layer 0 (reads directly from x) -----------------------------------
    h = run_layer(x_ref, wih0_ref[...], whhs_ref[0], whht_ref[0], bias_ref[0],
                  write_seq=num_layers > 1)

    # ---- layers 1 .. L-1 (consume/refill the sequence scratch) -------------
    for l in range(1, num_layers):
        h = run_layer(seq_scr, wihr_ref[l - 1], whhs_ref[l], whht_ref[l],
                      bias_ref[l], write_seq=l < num_layers - 1)

    # ---- fc3 on the final hidden state: VPU mul + lane reduce (no MXU) -----
    out_ref[...] = (jnp.sum(h * w3_ref[...], axis=-1, keepdims=True)
                    + b3_ref[...])


def _pick_b_tile(batch):
    """Batch tile: whole 8-row sublane groups, capped at 64 rows so the f32
    gate tiles stay in the 64-vreg file, and >=2 grid programs whenever
    B > 8 so v7x's second TensorCore gets work."""
    b8 = ((batch + 7) // 8) * 8
    if b8 <= 8:
        return 8
    half = ((b8 // 2 + 7) // 8) * 8
    return min(64, half)


def _vmem_bytes_estimate(T, t_chunk, b_tile, D, H, L):
    """Rough resident VMEM footprint (operands double-buffered by default)."""
    f32 = 4
    n_rest = max(L - 1, 1)
    dbl = 2
    x_tile = dbl * T * b_tile * D * f32
    weights = dbl * f32 * (D * 4 * H + n_rest * H * 4 * H
                           + L * H * 3 * H + L * H * H + L * 4 * H + H + 1)
    gin = t_chunk * b_tile * 4 * H * f32
    seq = T * b_tile * H * f32 if L > 1 else 0
    return x_tile + weights + gin + seq + (2 << 20)   # + slack


def model_lstm_forward(x, params, *, num_layers, hidden):
    """x: (B, T, D) batch_first f32.  params pre-packed (see __main__)."""
    B, T, D = x.shape
    H = hidden
    wih0, wihr, whhs, whht, bias, w3, b3 = params

    b_tile = _pick_b_tile(B)
    b_pad = ((B + b_tile - 1) // b_tile) * b_tile
    t_chunk = min(T, 32)      # bound the gin scratch (v7x: 64 MiB VMEM)

    # (B, T, D) -> (T, B_pad, D): contiguous rows per timestep, padded batch.
    x_tbd = jnp.transpose(x, (1, 0, 2))
    if b_pad != B:
        x_tbd = jnp.pad(x_tbd, ((0, 0), (0, b_pad - B), (0, 0)))

    kernel = functools.partial(_lstm_fc_kernel, num_layers=num_layers,
                               seq_len=T, t_chunk=t_chunk, hidden=H,
                               b_tile=b_tile)

    n_rest = max(num_layers - 1, 1)
    scratch_shapes = [pltpu.VMEM((t_chunk, b_tile, 4 * H), jnp.float32)]
    if num_layers > 1:                      # inter-layer sequence buffer
        scratch_shapes.append(pltpu.VMEM((T, b_tile, H), jnp.float32))

    # Raise the scoped VMEM limit only when the resident footprint outgrows
    # the conservative per-generation defaults.
    est = _vmem_bytes_estimate(T, t_chunk, b_tile, D, H, num_layers)
    cp_kwargs = dict(dimension_semantics=("parallel",))
    if est > 16 * 1024 * 1024:
        cp_kwargs["vmem_limit_bytes"] = int(min(est, 100 * 1024 * 1024))

    out = pl.pallas_call(
        kernel,
        out_shape=jax.ShapeDtypeStruct((b_pad, 1), jnp.float32),
        grid_spec=pltpu.PrefetchScalarGridSpec(
            num_scalar_prefetch=0,
            grid=(b_pad // b_tile,),
            in_specs=[
                pl.BlockSpec((T, b_tile, D), lambda i: (0, i, 0)),            # x
                pl.BlockSpec((D, 4 * H), lambda i: (0, 0)),                   # wih0
                pl.BlockSpec((n_rest, H, 4 * H), lambda i: (0, 0, 0)),        # wihr
                pl.BlockSpec((num_layers, H, 3 * H), lambda i: (0, 0, 0)),    # whh sig
                pl.BlockSpec((num_layers, H, H), lambda i: (0, 0, 0)),        # whh tanh
                pl.BlockSpec((num_layers, 1, 4 * H), lambda i: (0, 0, 0)),    # bias
                pl.BlockSpec((1, H), lambda i: (0, 0)),                       # w3
                pl.BlockSpec((1, 1), lambda i: (0, 0)),                       # b3
                # TODO(synk): single-buffer the grid-invariant weight operands
                # (pipeline_mode=pl.Buffered(1)) to halve their VMEM footprint
                # for large H/L on v7x once confirmed supported by pallas_call.
            ],
            out_specs=pl.BlockSpec((b_tile, 1), lambda i: (i, 0)),
            scratch_shapes=scratch_shapes,
        ),
        compiler_params=pltpu.CompilerParams(**cp_kwargs),
    )(x_tbd, wih0, wihr, whhs, whht, bias, w3, b3)
    return out[:B]


# ---------------------------------------------------------------------------
# pure-JAX reference (mirrors torch.nn.LSTM + Linear) for correctness check
# ---------------------------------------------------------------------------
def _reference_forward(x, raw):
    W_ih, W_hh, b_ih, b_hh, W3, b3 = raw      # PyTorch-shaped weights
    L = len(W_ih)
    B, T, _ = x.shape
    H = W_hh[0].shape[1]
    seq = x
    h_last = None
    for l in range(L):
        h = jnp.zeros((B, H), jnp.float32)
        c = jnp.zeros((B, H), jnp.float32)
        outs = []
        for t in range(T):
            g = seq[:, t, :] @ W_ih[l].T + h @ W_hh[l].T + b_ih[l] + b_hh[l]
            i = jax.nn.sigmoid(g[:, 0 * H:1 * H])
            f = jax.nn.sigmoid(g[:, 1 * H:2 * H])
            gg = jnp.tanh(g[:, 2 * H:3 * H])
            o = jax.nn.sigmoid(g[:, 3 * H:4 * H])
            c = f * c + i * gg
            h = o * jnp.tanh(c)
            outs.append(h)
        seq = jnp.stack(outs, axis=1)
        h_last = h
    return h_last @ W3.T + b3


if __name__ == "__main__":
    # small shapes consistent with the module (input_size=128 default)
    B, T, D, H, L = 2, 8, 128, 128, 2

    key = jax.random.PRNGKey(0)
    ks = jax.random.split(key, 4 * L + 3)
    u = lambda k, shape: jax.random.uniform(k, shape, jnp.float32, -0.08, 0.08)

    # PyTorch-shaped parameters (deterministic init, like init_weights)
    W_ih = [u(ks[4 * l + 0], (4 * H, D if l == 0 else H)) for l in range(L)]
    W_hh = [u(ks[4 * l + 1], (4 * H, H)) for l in range(L)]
    b_ih = [u(ks[4 * l + 2], (4 * H,)) for l in range(L)]
    b_hh = [u(ks[4 * l + 3], (4 * H,)) for l in range(L)]
    W3 = u(ks[4 * L + 0], (1, H))
    b3 = u(ks[4 * L + 1], (1,))
    x = jax.random.normal(ks[4 * L + 2], (B, T, D), jnp.float32)

    # --- kernel-friendly packing --------------------------------------------
    # PyTorch gate row order is [i, f, g, o]; repack to [i, f, o, g] so the
    # three sigmoid gates form one contiguous 3H-column slab in the kernel.
    def repack(w):   # works for (4H, K) matrices and (4H,) vectors
        return jnp.concatenate(
            [w[0:H], w[H:2 * H], w[3 * H:4 * H], w[2 * H:3 * H]], axis=0)

    wih0 = repack(W_ih[0]).T                                          # (D, 4H)
    if L > 1:
        wihr = jnp.stack([repack(W_ih[l]).T for l in range(1, L)])    # (L-1,H,4H)
    else:
        wihr = jnp.zeros((1, H, 4 * H), jnp.float32)                  # dummy
    whh_all = [repack(W_hh[l]).T for l in range(L)]                   # (H, 4H) each
    whhs = jnp.stack([w[:, :3 * H] for w in whh_all])                 # (L, H, 3H)
    whht = jnp.stack([w[:, 3 * H:] for w in whh_all])                 # (L, H, H)
    bias = jnp.stack([repack(b_ih[l] + b_hh[l])[None, :]
                      for l in range(L)])                             # (L, 1, 4H)
    w3 = W3                                                           # (1, H)
    b3k = b3.reshape(1, 1)                                            # (1, 1)

    out = model_lstm_forward(x, (wih0, wihr, whhs, whht, bias, w3, b3k),
                             num_layers=L, hidden=H)
    jax.block_until_ready(out)

    ref = _reference_forward(x, (W_ih, W_hh, b_ih, b_hh, W3, b3))
    assert out.shape == (B, 1)
    assert jnp.allclose(out, ref, atol=1e-4, rtol=1e-4), (out, ref)

    print("KERNEL_OK")
</pallas_src>

<mosaic_0001>
module attributes {stable_mosaic.version = 11 : i64} {
  func.func @_lstm_fc_kernel(%arg0: i32, %arg1: memref<8x8x128xf32, #tpu.memory_space<vmem>>, %arg2: memref<128x512xf32, #tpu.memory_space<vmem>>, %arg3: memref<1x128x512xf32, #tpu.memory_space<vmem>>, %arg4: memref<2x128x384xf32, #tpu.memory_space<vmem>>, %arg5: memref<2x128x128xf32, #tpu.memory_space<vmem>>, %arg6: memref<2x1x512xf32, #tpu.memory_space<vmem>>, %arg7: memref<1x128xf32, #tpu.memory_space<vmem>>, %arg8: memref<1x1xf32, #tpu.memory_space<vmem>>, %arg9: memref<8x1xf32, #tpu.memory_space<vmem>>, %arg10: memref<8x8x512xf32, #tpu.memory_space<vmem>>, %arg11: memref<8x8x128xf32, #tpu.memory_space<vmem>>) attributes {dimension_semantics = [#tpu.dimension_semantics<parallel>], iteration_bounds = array<i64: 1>, scalar_prefetch = 0 : i64, scratch_operands = 2 : i64, tpu.core_type = #tpu.core_type<tc>, window_params = [{transform_indices = @transform_0, window_bounds = array<i64: 8, 8, 128>}, {pipeline_mode = #tpu.pipeline_mode<synchronous>, transform_indices = @transform_1, window_bounds = array<i64: 128, 512>}, {pipeline_mode = #tpu.pipeline_mode<synchronous>, transform_indices = @transform_2, window_bounds = array<i64: 1, 128, 512>}, {pipeline_mode = #tpu.pipeline_mode<synchronous>, transform_indices = @transform_3, window_bounds = array<i64: 2, 128, 384>}, {pipeline_mode = #tpu.pipeline_mode<synchronous>, transform_indices = @transform_4, window_bounds = array<i64: 2, 128, 128>}, {pipeline_mode = #tpu.pipeline_mode<synchronous>, transform_indices = @transform_5, window_bounds = array<i64: 2, 1, 512>}, {pipeline_mode = #tpu.pipeline_mode<synchronous>, transform_indices = @transform_6, window_bounds = array<i64: 1, 128>}, {pipeline_mode = #tpu.pipeline_mode<synchronous>, transform_indices = @transform_7, window_bounds = array<i64: 1, 1>}, {transform_indices = @transform_8, window_bounds = array<i64: 8, 1>}]} {
    %c0 = arith.constant 0 : index
    %c0_0 = arith.constant 0 : index
    %0 = vector.load %arg2[%c0, %c0_0] : memref<128x512xf32, #tpu.memory_space<vmem>>, vector<128x512xf32>
    %c0_1 = arith.constant 0 : index
    %c0_2 = arith.constant 0 : index
    %c0_3 = arith.constant 0 : index
    %1 = vector.load %arg4[%c0_1, %c0_2, %c0_3] : memref<2x128x384xf32, #tpu.memory_space<vmem>>, vector<1x128x384xf32>
    %2 = vector.shape_cast %1 : vector<1x128x384xf32> to vector<128x384xf32>
    %c0_4 = arith.constant 0 : index
    %c0_5 = arith.constant 0 : index
    %c0_6 = arith.constant 0 : index
    %3 = vector.load %arg5[%c0_4, %c0_5, %c0_6] : memref<2x128x128xf32, #tpu.memory_space<vmem>>, vector<1x128x128xf32>
    %4 = vector.shape_cast %3 : vector<1x128x128xf32> to vector<128x128xf32>
    %c0_7 = arith.constant 0 : index
    %c0_8 = arith.constant 0 : index
    %c0_9 = arith.constant 0 : index
    %5 = vector.load %arg6[%c0_7, %c0_8, %c0_9] : memref<2x1x512xf32, #tpu.memory_space<vmem>>, vector<1x1x512xf32>
    %6 = vector.shape_cast %5 : vector<1x1x512xf32> to vector<1x512xf32>
    %cst = arith.constant 0.000000e+00 : f32
    %7 = vector.broadcast %cst : f32 to vector<8x128xf32>
    %cst_10 = arith.constant 0.000000e+00 : f32
    %8 = vector.broadcast %cst_10 : f32 to vector<8x128xf32>
    %c0_11 = arith.constant 0 : index
    %c0_12 = arith.constant 0 : index
    %c0_13 = arith.constant 0 : index
    %9 = vector.load %arg1[%c0_11, %c0_12, %c0_13] : memref<8x8x128xf32, #tpu.memory_space<vmem>>, vector<8x8x128xf32>
    %10 = vector.shape_cast %9 : vector<8x8x128xf32> to vector<64x128xf32>
    %cst_14 = arith.constant dense<0.000000e+00> : vector<64x512xf32>
    %11 = tpu.matmul %10, %0, %cst_14 {dimension_numbers = #tpu.dot_dimension_numbers<[1], [0], [0], [1], [0, 0, 1, 1], [], []>} : vector<64x128xf32>, vector<128x512xf32>, vector<64x512xf32> -> vector<64x512xf32>
    %12 = vector.broadcast %6 : vector<1x512xf32> to vector<64x512xf32>
    %13 = arith.addf %11, %12 : vector<64x512xf32>
    %14 = vector.shape_cast %13 : vector<64x512xf32> to vector<8x8x512xf32>
    %c0_15 = arith.constant 0 : index
    %c0_16 = arith.constant 0 : index
    %c0_17 = arith.constant 0 : index
    %15 = vector.load %arg10[%c0_15, %c0_16, %c0_17] : memref<8x8x512xf32, #tpu.memory_space<vmem>>, vector<8x8x512xf32>
    tpu.vector_store %arg10[%c0_15, %c0_16, %c0_17], %14 {strides = array<i32>} : memref<8x8x512xf32, #tpu.memory_space<vmem>>, vector<8x8x512xf32>,
    %c0_i32 = arith.constant 0 : i32
    %16 = arith.index_cast %c0_i32 : i32 to index
    %c0_18 = arith.constant 0 : index
    %c0_19 = arith.constant 0 : index
    %17 = vector.load %arg10[%16, %c0_18, %c0_19] : memref<8x8x512xf32, #tpu.memory_space<vmem>>, vector<1x8x512xf32>
    %18 = vector.shape_cast %17 : vector<1x8x512xf32> to vector<8x512xf32>
    %19 = vector.extract_strided_slice %18 {offsets = [0, 0], sizes = [8, 384], strides = [1, 1]} : vector<8x512xf32> to vector<8x384xf32>
    %cst_20 = arith.constant dense<0.000000e+00> : vector<8x384xf32>
    %20 = tpu.matmul %7, %2, %cst_20 {dimension_numbers = #tpu.dot_dimension_numbers<[1], [0], [0], [1], [0, 0, 1, 1], [], []>} : vector<8x128xf32>, vector<128x384xf32>, vector<8x384xf32> -> vector<8x384xf32>
    %21 = arith.addf %19, %20 : vector<8x384xf32>
    %22 = vector.extract_strided_slice %18 {offsets = [0, 384], sizes = [8, 128], strides = [1, 1]} : vector<8x512xf32> to vector<8x128xf32>
    %cst_21 = arith.constant dense<0.000000e+00> : vector<8x128xf32>
    %23 = tpu.matmul %7, %4, %cst_21 {dimension_numbers = #tpu.dot_dimension_numbers<[1], [0], [0], [1], [0, 0, 1, 1], [], []>} : vector<8x128xf32>, vector<128x128xf32>, vector<8x128xf32> -> vector<8x128xf32>
    %24 = arith.addf %22, %23 : vector<8x128xf32>
    %cst_22 = arith.constant 5.000000e-01 : f32
    %25 = vector.broadcast %cst_22 : f32 to vector<8x384xf32>
    %26 = arith.mulf %25, %21 : vector<8x384xf32>
    %27 = math.tanh %26 : vector<8x384xf32>
    %cst_23 = arith.constant 5.000000e-01 : f32
    %28 = vector.broadcast %cst_23 : f32 to vector<8x384xf32>
    %29 = arith.mulf %28, %27 : vector<8x384xf32>
    %cst_24 = arith.constant 5.000000e-01 : f32
    %30 = vector.broadcast %cst_24 : f32 to vector<8x384xf32>
    %31 = arith.addf %29, %30 : vector<8x384xf32>
    %32 = vector.extract_strided_slice %31 {offsets = [0, 0], sizes = [8, 128], strides = [1, 1]} : vector<8x384xf32> to vector<8x128xf32>
    %33 = vector.extract_strided_slice %31 {offsets = [0, 128], sizes = [8, 128], strides = [1, 1]} : vector<8x384xf32> to vector<8x128xf32>
    %34 = vector.extract_strided_slice %31 {offsets = [0, 256], sizes = [8, 128], strides = [1, 1]} : vector<8x384xf32> to vector<8x128xf32>
    %35 = math.tanh %24 : vector<8x128xf32>
    %36 = arith.mulf %33, %8 : vector<8x128xf32>
    %37 = arith.mulf %32, %35 : vector<8x128xf32>
    %38 = arith.addf %36, %37 : vector<8x128xf32>
    %39 = math.tanh %38 : vector<8x128xf32>
    %40 = arith.mulf %34, %39 : vector<8x128xf32>
    %c0_i32_25 = arith.constant 0 : i32
    %41 = arith.addi %c0_i32_25, %c0_i32 : i32
    %42 = arith.index_cast %41 : i32 to index
    %c0_26 = arith.constant 0 : index
    %c0_27 = arith.constant 0 : index
    %43 = vector.load %arg11[%42, %c0_26, %c0_27] : memref<8x8x128xf32, #tpu.memory_space<vmem>>, vector<1x8x128xf32>
    %44 = vector.shape_cast %43 : vector<1x8x128xf32> to vector<8x128xf32>
    %45 = vector.shape_cast %40 : vector<8x128xf32> to vector<1x8x128xf32>
    tpu.vector_store %arg11[%42, %c0_26, %c0_27], %45 {strides = array<i32>} : memref<8x8x128xf32, #tpu.memory_space<vmem>>, vector<1x8x128xf32>,
    %c1_i32 = arith.constant 1 : i32
    %46 = arith.index_cast %c1_i32 : i32 to index
    %c0_28 = arith.constant 0 : index
    %c0_29 = arith.constant 0 : index
    %47 = vector.load %arg10[%46, %c0_28, %c0_29] : memref<8x8x512xf32, #tpu.memory_space<vmem>>, vector<1x8x512xf32>
    %48 = vector.shape_cast %47 : vector<1x8x512xf32> to vector<8x512xf32>
    %49 = vector.extract_strided_slice %48 {offsets = [0, 0], sizes = [8, 384], strides = [1, 1]} : vector<8x512xf32> to vector<8x384xf32>
    %cst_30 = arith.constant dense<0.000000e+00> : vector<8x384xf32>
    %50 = tpu.matmul %40, %2, %cst_30 {dimension_numbers = #tpu.dot_dimension_numbers<[1], [0], [0], [1], [0, 0, 1, 1], [], []>} : vector<8x128xf32>, vector<128x384xf32>, vector<8x384xf32> -> vector<8x384xf32>
    %51 = arith.addf %49, %50 : vector<8x384xf32>
    %52 = vector.extract_strided_slice %48 {offsets = [0, 384], sizes = [8, 128], strides = [1, 1]} : vector<8x512xf32> to vector<8x128xf32>
    %cst_31 = arith.constant dense<0.000000e+00> : vector<8x128xf32>
    %53 = tpu.matmul %40, %4, %cst_31 {dimension_numbers = #tpu.dot_dimension_numbers<[1], [0], [0], [1], [0, 0, 1, 1], [], []>} : vector<8x128xf32>, vector<128x128xf32>, vector<8x128xf32> -> vector<8x128xf32>
    %54 = arith.addf %52, %53 : vector<8x128xf32>
    %cst_32 = arith.constant 5.000000e-01 : f32
    %55 = vector.broadcast %cst_32 : f32 to vector<8x384xf32>
    %56 = arith.mulf %55, %51 : vector<8x384xf32>
    %57 = math.tanh %56 : vector<8x384xf32>
    %cst_33 = arith.constant 5.000000e-01 : f32
    %58 = vector.broadcast %cst_33 : f32 to vector<8x384xf32>
    %59 = arith.mulf %58, %57 : vector<8x384xf32>
    %cst_34 = arith.constant 5.000000e-01 : f32
    %60 = vector.broadcast %cst_34 : f32 to vector<8x384xf32>
    %61 = arith.addf %59, %60 : vector<8x384xf32>
    %62 = vector.extract_strided_slice %61 {offsets = [0, 0], sizes = [8, 128], strides = [1, 1]} : vector<8x384xf32> to vector<8x128xf32>
    %63 = vector.extract_strided_slice %61 {offsets = [0, 128], sizes = [8, 128], strides = [1, 1]} : vector<8x384xf32> to vector<8x128xf32>
    %64 = vector.extract_strided_slice %61 {offsets = [0, 256], sizes = [8, 128], strides = [1, 1]} : vector<8x384xf32> to vector<8x128xf32>
    %65 = math.tanh %54 : vector<8x128xf32>
    %66 = arith.mulf %63, %38 : vector<8x128xf32>
    %67 = arith.mulf %62, %65 : vector<8x128xf32>
    %68 = arith.addf %66, %67 : vector<8x128xf32>
    %69 = math.tanh %68 : vector<8x128xf32>
    %70 = arith.mulf %64, %69 : vector<8x128xf32>
    %c0_i32_35 = arith.constant 0 : i32
    %71 = arith.addi %c0_i32_35, %c1_i32 : i32
    %72 = arith.index_cast %71 : i32 to index
    %c0_36 = arith.constant 0 : index
    %c0_37 = arith.constant 0 : index
    %73 = vector.load %arg11[%72, %c0_36, %c0_37] : memref<8x8x128xf32, #tpu.memory_space<vmem>>, vector<1x8x128xf32>
    %74 = vector.shape_cast %73 : vector<1x8x128xf32> to vector<8x128xf32>
    %75 = vector.shape_cast %70 : vector<8x128xf32> to vector<1x8x128xf32>
    tpu.vector_store %arg11[%72, %c0_36, %c0_37], %75 {strides = array<i32>} : memref<8x8x128xf32, #tpu.memory_space<vmem>>, vector<1x8x128xf32>,
    %c2_i32 = arith.constant 2 : i32
    %76 = arith.index_cast %c2_i32 : i32 to index
    %c0_38 = arith.constant 0 : index
    %c0_39 = arith.constant 0 : index
    %77 = vector.load %arg10[%76, %c0_38, %c0_39] : memref<8x8x512xf32, #tpu.memory_space<vmem>>, vector<1x8x512xf32>
    %78 = vector.shape_cast %77 : vector<1x8x512xf32> to vector<8x512xf32>
    %79 = vector.extract_strided_slice %78 {offsets = [0, 0], sizes = [8, 384], strides = [1, 1]} : vector<8x512xf32> to vector<8x384xf32>
    %cst_40 = arith.constant dense<0.000000e+00> : vector<8x384xf32>
    %80 = tpu.matmul %70, %2, %cst_40 {dimension_numbers = #tpu.dot_dimension_numbers<[1], [0], [0], [1], [0, 0, 1, 1], [], []>} : vector<8x128xf32>, vector<128x384xf32>, vector<8x384xf32> -> vector<8x384xf32>
    %81 = arith.addf %79, %80 : vector<8x384xf32>
    %82 = vector.extract_strided_slice %78 {offsets = [0, 384], sizes = [8, 128], strides = [1, 1]} : vector<8x512xf32> to vector<8x128xf32>
    %cst_41 = arith.constant dense<0.000000e+00> : vector<8x128xf32>
    %83 = tpu.matmul %70, %4, %cst_41 {dimension_numbers = #tpu.dot_dimension_numbers<[1], [0], [0], [1], [0, 0, 1, 1], [], []>} : vector<8x128xf32>, vector<128x128xf32>, vector<8x128xf32> -> vector<8x128xf32>
    %84 = arith.addf %82, %83 : vector<8x128xf32>
    %cst_42 = arith.constant 5.000000e-01 : f32
    %85 = vector.broadcast %cst_42 : f32 to vector<8x384xf32>
    %86 = arith.mulf %85, %81 : vector<8x384xf32>
    %87 = math.tanh %86 : vector<8x384xf32>
    %cst_43 = arith.constant 5.000000e-01 : f32
    %88 = vector.broadcast %cst_43 : f32 to vector<8x384xf32>
    %89 = arith.mulf %88, %87 : vector<8x384xf32>
    %cst_44 = arith.constant 5.000000e-01 : f32
    %90 = vector.broadcast %cst_44 : f32 to vector<8x384xf32>
    %91 = arith.addf %89, %90 : vector<8x384xf32>
    %92 = vector.extract_strided_slice %91 {offsets = [0, 0], sizes = [8, 128], strides = [1, 1]} : vector<8x384xf32> to vector<8x128xf32>
    %93 = vector.extract_strided_slice %91 {offsets = [0, 128], sizes = [8, 128], strides = [1, 1]} : vector<8x384xf32> to vector<8x128xf32>
    %94 = vector.extract_strided_slice %91 {offsets = [0, 256], sizes = [8, 128], strides = [1, 1]} : vector<8x384xf32> to vector<8x128xf32>
    %95 = math.tanh %84 : vector<8x128xf32>
    %96 = arith.mulf %93, %68 : vector<8x128xf32>
    %97 = arith.mulf %92, %95 : vector<8x128xf32>
    %98 = arith.addf %96, %97 : vector<8x128xf32>
    %99 = math.tanh %98 : vector<8x128xf32>
    %100 = arith.mulf %94, %99 : vector<8x128xf32>
    %c0_i32_45 = arith.constant 0 : i32
    %101 = arith.addi %c0_i32_45, %c2_i32 : i32
    %102 = arith.index_cast %101 : i32 to index
    %c0_46 = arith.constant 0 : index
    %c0_47 = arith.constant 0 : index
    %103 = vector.load %arg11[%102, %c0_46, %c0_47] : memref<8x8x128xf32, #tpu.memory_space<vmem>>, vector<1x8x128xf32>
    %104 = vector.shape_cast %103 : vector<1x8x128xf32> to vector<8x128xf32>
    %105 = vector.shape_cast %100 : vector<8x128xf32> to vector<1x8x128xf32>
    tpu.vector_store %arg11[%102, %c0_46, %c0_47], %105 {strides = array<i32>} : memref<8x8x128xf32, #tpu.memory_space<vmem>>, vector<1x8x128xf32>,
    %c3_i32 = arith.constant 3 : i32
    %106 = arith.index_cast %c3_i32 : i32 to index
    %c0_48 = arith.constant 0 : index
    %c0_49 = arith.constant 0 : index
    %107 = vector.load %arg10[%106, %c0_48, %c0_49] : memref<8x8x512xf32, #tpu.memory_space<vmem>>, vector<1x8x512xf32>
    %108 = vector.shape_cast %107 : vector<1x8x512xf32> to vector<8x512xf32>
    %109 = vector.extract_strided_slice %108 {offsets = [0, 0], sizes = [8, 384], strides = [1, 1]} : vector<8x512xf32> to vector<8x384xf32>
    %cst_50 = arith.constant dense<0.000000e+00> : vector<8x384xf32>
    %110 = tpu.matmul %100, %2, %cst_50 {dimension_numbers = #tpu.dot_dimension_numbers<[1], [0], [0], [1], [0, 0, 1, 1], [], []>} : vector<8x128xf32>, vector<128x384xf32>, vector<8x384xf32> -> vector<8x384xf32>
    %111 = arith.addf %109, %110 : vector<8x384xf32>
    %112 = vector.extract_strided_slice %108 {offsets = [0, 384], sizes = [8, 128], strides = [1, 1]} : vector<8x512xf32> to vector<8x128xf32>
    %cst_51 = arith.constant dense<0.000000e+00> : vector<8x128xf32>
    %113 = tpu.matmul %100, %4, %cst_51 {dimension_numbers = #tpu.dot_dimension_numbers<[1], [0], [0], [1], [0, 0, 1, 1], [], []>} : vector<8x128xf32>, vector<128x128xf32>, vector<8x128xf32> -> vector<8x128xf32>
    %114 = arith.addf %112, %113 : vector<8x128xf32>
    %cst_52 = arith.constant 5.000000e-01 : f32
    %115 = vector.broadcast %cst_52 : f32 to vector<8x384xf32>
    %116 = arith.mulf %115, %111 : vector<8x384xf32>
    %117 = math.tanh %116 : vector<8x384xf32>
    %cst_53 = arith.constant 5.000000e-01 : f32
    %118 = vector.broadcast %cst_53 : f32 to vector<8x384xf32>
    %119 = arith.mulf %118, %117 : vector<8x384xf32>
    %cst_54 = arith.constant 5.000000e-01 : f32
    %120 = vector.broadcast %cst_54 : f32 to vector<8x384xf32>
    %121 = arith.addf %119, %120 : vector<8x384xf32>
    %122 = vector.extract_strided_slice %121 {offsets = [0, 0], sizes = [8, 128], strides = [1, 1]} : vector<8x384xf32> to vector<8x128xf32>
    %123 = vector.extract_strided_slice %121 {offsets = [0, 128], sizes = [8, 128], strides = [1, 1]} : vector<8x384xf32> to vector<8x128xf32>
    %124 = vector.extract_strided_slice %121 {offsets = [0, 256], sizes = [8, 128], strides = [1, 1]} : vector<8x384xf32> to vector<8x128xf32>
    %125 = math.tanh %114 : vector<8x128xf32>
    %126 = arith.mulf %123, %98 : vector<8x128xf32>
    %127 = arith.mulf %122, %125 : vector<8x128xf32>
    %128 = arith.addf %126, %127 : vector<8x128xf32>
    %129 = math.tanh %128 : vector<8x128xf32>
    %130 = arith.mulf %124, %129 : vector<8x128xf32>
    %c0_i32_55 = arith.constant 0 : i32
    %131 = arith.addi %c0_i32_55, %c3_i32 : i32
    %132 = arith.index_cast %131 : i32 to index
    %c0_56 = arith.constant 0 : index
    %c0_57 = arith.constant 0 : index
    %133 = vector.load %arg11[%132, %c0_56, %c0_57] : memref<8x8x128xf32, #tpu.memory_space<vmem>>, vector<1x8x128xf32>
    %134 = vector.shape_cast %133 : vector<1x8x128xf32> to vector<8x128xf32>
    %135 = vector.shape_cast %130 : vector<8x128xf32> to vector<1x8x128xf32>
    tpu.vector_store %arg11[%132, %c0_56, %c0_57], %135 {strides = array<i32>} : memref<8x8x128xf32, #tpu.memory_space<vmem>>, vector<1x8x128xf32>,
    %c4_i32 = arith.constant 4 : i32
    %136 = arith.index_cast %c4_i32 : i32 to index
    %c0_58 = arith.constant 0 : index
    %c0_59 = arith.constant 0 : index
    %137 = vector.load %arg10[%136, %c0_58, %c0_59] : memref<8x8x512xf32, #tpu.memory_space<vmem>>, vector<1x8x512xf32>
    %138 = vector.shape_cast %137 : vector<1x8x512xf32> to vector<8x512xf32>
    %139 = vector.extract_strided_slice %138 {offsets = [0, 0], sizes = [8, 384], strides = [1, 1]} : vector<8x512xf32> to vector<8x384xf32>
    %cst_60 = arith.constant dense<0.000000e+00> : vector<8x384xf32>
    %140 = tpu.matmul %130, %2, %cst_60 {dimension_numbers = #tpu.dot_dimension_numbers<[1], [0], [0], [1], [0, 0, 1, 1], [], []>} : vector<8x128xf32>, vector<128x384xf32>, vector<8x384xf32> -> vector<8x384xf32>
    %141 = arith.addf %139, %140 : vector<8x384xf32>
    %142 = vector.extract_strided_slice %138 {offsets = [0, 384], sizes = [8, 128], strides = [1, 1]} : vector<8x512xf32> to vector<8x128xf32>
    %cst_61 = arith.constant dense<0.000000e+00> : vector<8x128xf32>
    %143 = tpu.matmul %130, %4, %cst_61 {dimension_numbers = #tpu.dot_dimension_numbers<[1], [0], [0], [1], [0, 0, 1, 1], [], []>} : vector<8x128xf32>, vector<128x128xf32>, vector<8x128xf32> -> vector<8x128xf32>
    %144 = arith.addf %142, %143 : vector<8x128xf32>
    %cst_62 = arith.constant 5.000000e-01 : f32
    %145 = vector.broadcast %cst_62 : f32 to vector<8x384xf32>
    %146 = arith.mulf %145, %141 : vector<8x384xf32>
    %147 = math.tanh %146 : vector<8x384xf32>
    %cst_63 = arith.constant 5.000000e-01 : f32
    %148 = vector.broadcast %cst_63 : f32 to vector<8x384xf32>
    %149 = arith.mulf %148, %147 : vector<8x384xf32>
    %cst_64 = arith.constant 5.000000e-01 : f32
    %150 = vector.broadcast %cst_64 : f32 to vector<8x384xf32>
    %151 = arith.addf %149, %150 : vector<8x384xf32>
    %152 = vector.extract_strided_slice %151 {offsets = [0, 0], sizes = [8, 128], strides = [1, 1]} : vector<8x384xf32> to vector<8x128xf32>
    %153 = vector.extract_strided_slice %151 {offsets = [0, 128], sizes = [8, 128], strides = [1, 1]} : vector<8x384xf32> to vector<8x128xf32>
    %154 = vector.extract_strided_slice %151 {offsets = [0, 256], sizes = [8, 128], strides = [1, 1]} : vector<8x384xf32> to vector<8x128xf32>
    %155 = math.tanh %144 : vector<8x128xf32>
    %156 = arith.mulf %153, %128 : vector<8x128xf32>
    %157 = arith.mulf %152, %155 : vector<8x128xf32>
    %158 = arith.addf %156, %157 : vector<8x128xf32>
    %159 = math.tanh %158 : vector<8x128xf32>
    %160 = arith.mulf %154, %159 : vector<8x128xf32>
    %c0_i32_65 = arith.constant 0 : i32
    %161 = arith.addi %c0_i32_65, %c4_i32 : i32
    %162 = arith.index_cast %161 : i32 to index
    %c0_66 = arith.constant 0 : index
    %c0_67 = arith.constant 0 : index
    %163 = vector.load %arg11[%162, %c0_66, %c0_67] : memref<8x8x128xf32, #tpu.memory_space<vmem>>, vector<1x8x128xf32>
    %164 = vector.shape_cast %163 : vector<1x8x128xf32> to vector<8x128xf32>
    %165 = vector.shape_cast %160 : vector<8x128xf32> to vector<1x8x128xf32>
    tpu.vector_store %arg11[%162, %c0_66, %c0_67], %165 {strides = array<i32>} : memref<8x8x128xf32, #tpu.memory_space<vmem>>, vector<1x8x128xf32>,
    %c5_i32 = arith.constant 5 : i32
    %166 = arith.index_cast %c5_i32 : i32 to index
    %c0_68 = arith.constant 0 : index
    %c0_69 = arith.constant 0 : index
    %167 = vector.load %arg10[%166, %c0_68, %c0_69] : memref<8x8x512xf32, #tpu.memory_space<vmem>>, vector<1x8x512xf32>
    %168 = vector.shape_cast %167 : vector<1x8x512xf32> to vector<8x512xf32>
    %169 = vector.extract_strided_slice %168 {offsets = [0, 0], sizes = [8, 384], strides = [1, 1]} : vector<8x512xf32> to vector<8x384xf32>
    %cst_70 = arith.constant dense<0.000000e+00> : vector<8x384xf32>
    %170 = tpu.matmul %160, %2, %cst_70 {dimension_numbers = #tpu.dot_dimension_numbers<[1], [0], [0], [1], [0, 0, 1, 1], [], []>} : vector<8x128xf32>, vector<128x384xf32>, vector<8x384xf32> -> vector<8x384xf32>
    %171 = arith.addf %169, %170 : vector<8x384xf32>
    %172 = vector.extract_strided_slice %168 {offsets = [0, 384], sizes = [8, 128], strides = [1, 1]} : vector<8x512xf32> to vector<8x128xf32>
    %cst_71 = arith.constant dense<0.000000e+00> : vector<8x128xf32>
    %173 = tpu.matmul %160, %4, %cst_71 {dimension_numbers = #tpu.dot_dimension_numbers<[1], [0], [0], [1], [0, 0, 1, 1], [], []>} : vector<8x128xf32>, vector<128x128xf32>, vector<8x128xf32> -> vector<8x128xf32>
    %174 = arith.addf %172, %173 : vector<8x128xf32>
    %cst_72 = arith.constant 5.000000e-01 : f32
    %175 = vector.broadcast %cst_72 : f32 to vector<8x384xf32>
    %176 = arith.mulf %175, %171 : vector<8x384xf32>
    %177 = math.tanh %176 : vector<8x384xf32>
    %cst_73 = arith.constant 5.000000e-01 : f32
    %178 = vector.broadcast %cst_73 : f32 to vector<8x384xf32>
    %179 = arith.mulf %178, %177 : vector<8x384xf32>
    %cst_74 = arith.constant 5.000000e-01 : f32
    %180 = vector.broadcast %cst_74 : f32 to vector<8x384xf32>
    %181 = arith.addf %179, %180 : vector<8x384xf32>
    %182 = vector.extract_strided_slice %181 {offsets = [0, 0], sizes = [8, 128], strides = [1, 1]} : vector<8x384xf32> to vector<8x128xf32>
    %183 = vector.extract_strided_slice %181 {offsets = [0, 128], sizes = [8, 128], strides = [1, 1]} : vector<8x384xf32> to vector<8x128xf32>
    %184 = vector.extract_strided_slice %181 {offsets = [0, 256], sizes = [8, 128], strides = [1, 1]} : vector<8x384xf32> to vector<8x128xf32>
    %185 = math.tanh %174 : vector<8x128xf32>
    %186 = arith.mulf %183, %158 : vector<8x128xf32>
    %187 = arith.mulf %182, %185 : vector<8x128xf32>
    %188 = arith.addf %186, %187 : vector<8x128xf32>
    %189 = math.tanh %188 : vector<8x128xf32>
    %190 = arith.mulf %184, %189 : vector<8x128xf32>
    %c0_i32_75 = arith.constant 0 : i32
    %191 = arith.addi %c0_i32_75, %c5_i32 : i32
    %192 = arith.index_cast %191 : i32 to index
    %c0_76 = arith.constant 0 : index
    %c0_77 = arith.constant 0 : index
    %193 = vector.load %arg11[%192, %c0_76, %c0_77] : memref<8x8x128xf32, #tpu.memory_space<vmem>>, vector<1x8x128xf32>
    %194 = vector.shape_cast %193 : vector<1x8x128xf32> to vector<8x128xf32>
    %195 = vector.shape_cast %190 : vector<8x128xf32> to vector<1x8x128xf32>
    tpu.vector_store %arg11[%192, %c0_76, %c0_77], %195 {strides = array<i32>} : memref<8x8x128xf32, #tpu.memory_space<vmem>>, vector<1x8x128xf32>,
    %c6_i32 = arith.constant 6 : i32
    %196 = arith.index_cast %c6_i32 : i32 to index
    %c0_78 = arith.constant 0 : index
    %c0_79 = arith.constant 0 : index
    %197 = vector.load %arg10[%196, %c0_78, %c0_79] : memref<8x8x512xf32, #tpu.memory_space<vmem>>, vector<1x8x512xf32>
    %198 = vector.shape_cast %197 : vector<1x8x512xf32> to vector<8x512xf32>
    %199 = vector.extract_strided_slice %198 {offsets = [0, 0], sizes = [8, 384], strides = [1, 1]} : vector<8x512xf32> to vector<8x384xf32>
    %cst_80 = arith.constant dense<0.000000e+00> : vector<8x384xf32>
    %200 = tpu.matmul %190, %2, %cst_80 {dimension_numbers = #tpu.dot_dimension_numbers<[1], [0], [0], [1], [0, 0, 1, 1], [], []>} : vector<8x128xf32>, vector<128x384xf32>, vector<8x384xf32> -> vector<8x384xf32>
    %201 = arith.addf %199, %200 : vector<8x384xf32>
    %202 = vector.extract_strided_slice %198 {offsets = [0, 384], sizes = [8, 128], strides = [1, 1]} : vector<8x512xf32> to vector<8x128xf32>
    %cst_81 = arith.constant dense<0.000000e+00> : vector<8x128xf32>
    %203 = tpu.matmul %190, %4, %cst_81 {dimension_numbers = #tpu.dot_dimension_numbers<[1], [0], [0], [1], [0, 0, 1, 1], [], []>} : vector<8x128xf32>, vector<128x128xf32>, vector<8x128xf32> -> vector<8x128xf32>
    %204 = arith.addf %202, %203 : vector<8x128xf32>
    %cst_82 = arith.constant 5.000000e-01 : f32
    %205 = vector.broadcast %cst_82 : f32 to vector<8x384xf32>
    %206 = arith.mulf %205, %201 : vector<8x384xf32>
    %207 = math.tanh %206 : vector<8x384xf32>
    %cst_83 = arith.constant 5.000000e-01 : f32
    %208 = vector.broadcast %cst_83 : f32 to vector<8x384xf32>
    %209 = arith.mulf %208, %207 : vector<8x384xf32>
    %cst_84 = arith.constant 5.000000e-01 : f32
    %210 = vector.broadcast %cst_84 : f32 to vector<8x384xf32>
    %211 = arith.addf %209, %210 : vector<8x384xf32>
    %212 = vector.extract_strided_slice %211 {offsets = [0, 0], sizes = [8, 128], strides = [1, 1]} : vector<8x384xf32> to vector<8x128xf32>
    %213 = vector.extract_strided_slice %211 {offsets = [0, 128], sizes = [8, 128], strides = [1, 1]} : vector<8x384xf32> to vector<8x128xf32>
    %214 = vector.extract_strided_slice %211 {offsets = [0, 256], sizes = [8, 128], strides = [1, 1]} : vector<8x384xf32> to vector<8x128xf32>
    %215 = math.tanh %204 : vector<8x128xf32>
    %216 = arith.mulf %213, %188 : vector<8x128xf32>
    %217 = arith.mulf %212, %215 : vector<8x128xf32>
    %218 = arith.addf %216, %217 : vector<8x128xf32>
    %219 = math.tanh %218 : vector<8x128xf32>
    %220 = arith.mulf %214, %219 : vector<8x128xf32>
    %c0_i32_85 = arith.constant 0 : i32
    %221 = arith.addi %c0_i32_85, %c6_i32 : i32
    %222 = arith.index_cast %221 : i32 to index
    %c0_86 = arith.constant 0 : index
    %c0_87 = arith.constant 0 : index
    %223 = vector.load %arg11[%222, %c0_86, %c0_87] : memref<8x8x128xf32, #tpu.memory_space<vmem>>, vector<1x8x128xf32>
    %224 = vector.shape_cast %223 : vector<1x8x128xf32> to vector<8x128xf32>
    %225 = vector.shape_cast %220 : vector<8x128xf32> to vector<1x8x128xf32>
    tpu.vector_store %arg11[%222, %c0_86, %c0_87], %225 {strides = array<i32>} : memref<8x8x128xf32, #tpu.memory_space<vmem>>, vector<1x8x128xf32>,
    %c7_i32 = arith.constant 7 : i32
    %226 = arith.index_cast %c7_i32 : i32 to index
    %c0_88 = arith.constant 0 : index
    %c0_89 = arith.constant 0 : index
    %227 = vector.load %arg10[%226, %c0_88, %c0_89] : memref<8x8x512xf32, #tpu.memory_space<vmem>>, vector<1x8x512xf32>
    %228 = vector.shape_cast %227 : vector<1x8x512xf32> to vector<8x512xf32>
    %229 = vector.extract_strided_slice %228 {offsets = [0, 0], sizes = [8, 384], strides = [1, 1]} : vector<8x512xf32> to vector<8x384xf32>
    %cst_90 = arith.constant dense<0.000000e+00> : vector<8x384xf32>
    %230 = tpu.matmul %220, %2, %cst_90 {dimension_numbers = #tpu.dot_dimension_numbers<[1], [0], [0], [1], [0, 0, 1, 1], [], []>} : vector<8x128xf32>, vector<128x384xf32>, vector<8x384xf32> -> vector<8x384xf32>
    %231 = arith.addf %229, %230 : vector<8x384xf32>
    %232 = vector.extract_strided_slice %228 {offsets = [0, 384], sizes = [8, 128], strides = [1, 1]} : vector<8x512xf32> to vector<8x128xf32>
    %cst_91 = arith.constant dense<0.000000e+00> : vector<8x128xf32>
    %233 = tpu.matmul %220, %4, %cst_91 {dimension_numbers = #tpu.dot_dimension_numbers<[1], [0], [0], [1], [0, 0, 1, 1], [], []>} : vector<8x128xf32>, vector<128x128xf32>, vector<8x128xf32> -> vector<8x128xf32>
    %234 = arith.addf %232, %233 : vector<8x128xf32>
    %cst_92 = arith.constant 5.000000e-01 : f32
    %235 = vector.broadcast %cst_92 : f32 to vector<8x384xf32>
    %236 = arith.mulf %235, %231 : vector<8x384xf32>
    %237 = math.tanh %236 : vector<8x384xf32>
    %cst_93 = arith.constant 5.000000e-01 : f32
    %238 = vector.broadcast %cst_93 : f32 to vector<8x384xf32>
    %239 = arith.mulf %238, %237 : vector<8x384xf32>
    %cst_94 = arith.constant 5.000000e-01 : f32
    %240 = vector.broadcast %cst_94 : f32 to vector<8x384xf32>
    %241 = arith.addf %239, %240 : vector<8x384xf32>
    %242 = vector.extract_strided_slice %241 {offsets = [0, 0], sizes = [8, 128], strides = [1, 1]} : vector<8x384xf32> to vector<8x128xf32>
    %243 = vector.extract_strided_slice %241 {offsets = [0, 128], sizes = [8, 128], strides = [1, 1]} : vector<8x384xf32> to vector<8x128xf32>
    %244 = vector.extract_strided_slice %241 {offsets = [0, 256], sizes = [8, 128], strides = [1, 1]} : vector<8x384xf32> to vector<8x128xf32>
    %245 = math.tanh %234 : vector<8x128xf32>
    %246 = arith.mulf %243, %218 : vector<8x128xf32>
    %247 = arith.mulf %242, %245 : vector<8x128xf32>
    %248 = arith.addf %246, %247 : vector<8x128xf32>
    %249 = math.tanh %248 : vector<8x128xf32>
    %250 = arith.mulf %244, %249 : vector<8x128xf32>
    %c0_i32_95 = arith.constant 0 : i32
    %251 = arith.addi %c0_i32_95, %c7_i32 : i32
    %252 = arith.index_cast %251 : i32 to index
    %c0_96 = arith.constant 0 : index
    %c0_97 = arith.constant 0 : index
    %253 = vector.load %arg11[%252, %c0_96, %c0_97] : memref<8x8x128xf32, #tpu.memory_space<vmem>>, vector<1x8x128xf32>
    %254 = vector.shape_cast %253 : vector<1x8x128xf32> to vector<8x128xf32>
    %255 = vector.shape_cast %250 : vector<8x128xf32> to vector<1x8x128xf32>
    tpu.vector_store %arg11[%252, %c0_96, %c0_97], %255 {strides = array<i32>} : memref<8x8x128xf32, #tpu.memory_space<vmem>>, vector<1x8x128xf32>,
    %c8_i32 = arith.constant 8 : i32
    %c0_98 = arith.constant 0 : index
    %c0_99 = arith.constant 0 : index
    %c0_100 = arith.constant 0 : index
    %256 = vector.load %arg3[%c0_98, %c0_99, %c0_100] : memref<1x128x512xf32, #tpu.memory_space<vmem>>, vector<1x128x512xf32>
    %257 = vector.shape_cast %256 : vector<1x128x512xf32> to vector<128x512xf32>
    %c1 = arith.constant 1 : index
    %c0_101 = arith.constant 0 : index
    %c0_102 = arith.constant 0 : index
    %258 = vector.load %arg4[%c1, %c0_101, %c0_102] : memref<2x128x384xf32, #tpu.memory_space<vmem>>, vector<1x128x384xf32>
    %259 = vector.shape_cast %258 : vector<1x128x384xf32> to vector<128x384xf32>
    %c1_103 = arith.constant 1 : index
    %c0_104 = arith.constant 0 : index
    %c0_105 = arith.constant 0 : index
    %260 = vector.load %arg5[%c1_103, %c0_104, %c0_105] : memref<2x128x128xf32, #tpu.memory_space<vmem>>, vector<1x128x128xf32>
    %261 = vector.shape_cast %260 : vector<1x128x128xf32> to vector<128x128xf32>
    %c1_106 = arith.constant 1 : index
    %c0_107 = arith.constant 0 : index
    %c0_108 = arith.constant 0 : index
    %262 = vector.load %arg6[%c1_106, %c0_107, %c0_108] : memref<2x1x512xf32, #tpu.memory_space<vmem>>, vector<1x1x512xf32>
    %263 = vector.shape_cast %262 : vector<1x1x512xf32> to vector<1x512xf32>
    %cst_109 = arith.constant 0.000000e+00 : f32
    %264 = vector.broadcast %cst_109 : f32 to vector<8x128xf32>
    %cst_110 = arith.constant 0.000000e+00 : f32
    %265 = vector.broadcast %cst_110 : f32 to vector<8x128xf32>
    %c0_111 = arith.constant 0 : index
    %c0_112 = arith.constant 0 : index
    %c0_113 = arith.constant 0 : index
    %266 = vector.load %arg11[%c0_111, %c0_112, %c0_113] : memref<8x8x128xf32, #tpu.memory_space<vmem>>, vector<8x8x128xf32>
    %267 = vector.shape_cast %266 : vector<8x8x128xf32> to vector<64x128xf32>
    %cst_114 = arith.constant dense<0.000000e+00> : vector<64x512xf32>
    %268 = tpu.matmul %267, %257, %cst_114 {dimension_numbers = #tpu.dot_dimension_numbers<[1], [0], [0], [1], [0, 0, 1, 1], [], []>} : vector<64x128xf32>, vector<128x512xf32>, vector<64x512xf32> -> vector<64x512xf32>
    %269 = vector.broadcast %263 : vector<1x512xf32> to vector<64x512xf32>
    %270 = arith.addf %268, %269 : vector<64x512xf32>
    %271 = vector.shape_cast %270 : vector<64x512xf32> to vector<8x8x512xf32>
    %c0_115 = arith.constant 0 : index
    %c0_116 = arith.constant 0 : index
    %c0_117 = arith.constant 0 : index
    %272 = vector.load %arg10[%c0_115, %c0_116, %c0_117] : memref<8x8x512xf32, #tpu.memory_space<vmem>>, vector<8x8x512xf32>
    tpu.vector_store %arg10[%c0_115, %c0_116, %c0_117], %271 {strides = array<i32>} : memref<8x8x512xf32, #tpu.memory_space<vmem>>, vector<8x8x512xf32>,
    %c0_i32_118 = arith.constant 0 : i32
    %273 = arith.index_cast %c0_i32_118 : i32 to index
    %c0_119 = arith.constant 0 : index
    %c0_120 = arith.constant 0 : index
    %274 = vector.load %arg10[%273, %c0_119, %c0_120] : memref<8x8x512xf32, #tpu.memory_space<vmem>>, vector<1x8x512xf32>
    %275 = vector.shape_cast %274 : vector<1x8x512xf32> to vector<8x512xf32>
    %276 = vector.extract_strided_slice %275 {offsets = [0, 0], sizes = [8, 384], strides = [1, 1]} : vector<8x512xf32> to vector<8x384xf32>
    %cst_121 = arith.constant dense<0.000000e+00> : vector<8x384xf32>
    %277 = tpu.matmul %264, %259, %cst_121 {dimension_numbers = #tpu.dot_dimension_numbers<[1], [0], [0], [1], [0, 0, 1, 1], [], []>} : vector<8x128xf32>, vector<128x384xf32>, vector<8x384xf32> -> vector<8x384xf32>
    %278 = arith.addf %276, %277 : vector<8x384xf32>
    %279 = vector.extract_strided_slice %275 {offsets = [0, 384], sizes = [8, 128], strides = [1, 1]} : vector<8x512xf32> to vector<8x128xf32>
    %cst_122 = arith.constant dense<0.000000e+00> : vector<8x128xf32>
    %280 = tpu.matmul %264, %261, %cst_122 {dimension_numbers = #tpu.dot_dimension_numbers<[1], [0], [0], [1], [0, 0, 1, 1], [], []>} : vector<8x128xf32>, vector<128x128xf32>, vector<8x128xf32> -> vector<8x128xf32>
    %281 = arith.addf %279, %280 : vector<8x128xf32>
    %cst_123 = arith.constant 5.000000e-01 : f32
    %282 = vector.broadcast %cst_123 : f32 to vector<8x384xf32>
    %283 = arith.mulf %282, %278 : vector<8x384xf32>
    %284 = math.tanh %283 : vector<8x384xf32>
    %cst_124 = arith.constant 5.000000e-01 : f32
    %285 = vector.broadcast %cst_124 : f32 to vector<8x384xf32>
    %286 = arith.mulf %285, %284 : vector<8x384xf32>
    %cst_125 = arith.constant 5.000000e-01 : f32
    %287 = vector.broadcast %cst_125 : f32 to vector<8x384xf32>
    %288 = arith.addf %286, %287 : vector<8x384xf32>
    %289 = vector.extract_strided_slice %288 {offsets = [0, 0], sizes = [8, 128], strides = [1, 1]} : vector<8x384xf32> to vector<8x128xf32>
    %290 = vector.extract_strided_slice %288 {offsets = [0, 128], sizes = [8, 128], strides = [1, 1]} : vector<8x384xf32> to vector<8x128xf32>
    %291 = vector.extract_strided_slice %288 {offsets = [0, 256], sizes = [8, 128], strides = [1, 1]} : vector<8x384xf32> to vector<8x128xf32>
    %292 = math.tanh %281 : vector<8x128xf32>
    %293 = arith.mulf %290, %265 : vector<8x128xf32>
    %294 = arith.mulf %289, %292 : vector<8x128xf32>
    %295 = arith.addf %293, %294 : vector<8x128xf32>
    %296 = math.tanh %295 : vector<8x128xf32>
    %297 = arith.mulf %291, %296 : vector<8x128xf32>
    %c1_i32_126 = arith.constant 1 : i32
    %298 = arith.index_cast %c1_i32_126 : i32 to index
    %c0_127 = arith.constant 0 : index
    %c0_128 = arith.constant 0 : index
    %299 = vector.load %arg10[%298, %c0_127, %c0_128] : memref<8x8x512xf32, #tpu.memory_space<vmem>>, vector<1x8x512xf32>
    %300 = vector.shape_cast %299 : vector<1x8x512xf32> to vector<8x512xf32>
    %301 = vector.extract_strided_slice %300 {offsets = [0, 0], sizes = [8, 384], strides = [1, 1]} : vector<8x512xf32> to vector<8x384xf32>
    %cst_129 = arith.constant dense<0.000000e+00> : vector<8x384xf32>
    %302 = tpu.matmul %297, %259, %cst_129 {dimension_numbers = #tpu.dot_dimension_numbers<[1], [0], [0], [1], [0, 0, 1, 1], [], []>} : vector<8x128xf32>, vector<128x384xf32>, vector<8x384xf32> -> vector<8x384xf32>
    %303 = arith.addf %301, %302 : vector<8x384xf32>
    %304 = vector.extract_strided_slice %300 {offsets = [0, 384], sizes = [8, 128], strides = [1, 1]} : vector<8x512xf32> to vector<8x128xf32>
    %cst_130 = arith.constant dense<0.000000e+00> : vector<8x128xf32>
    %305 = tpu.matmul %297, %261, %cst_130 {dimension_numbers = #tpu.dot_dimension_numbers<[1], [0], [0], [1], [0, 0, 1, 1], [], []>} : vector<8x128xf32>, vector<128x128xf32>, vector<8x128xf32> -> vector<8x128xf32>
    %306 = arith.addf %304, %305 : vector<8x128xf32>
    %cst_131 = arith.constant 5.000000e-01 : f32
    %307 = vector.broadcast %cst_131 : f32 to vector<8x384xf32>
    %308 = arith.mulf %307, %303 : vector<8x384xf32>
    %309 = math.tanh %308 : vector<8x384xf32>
    %cst_132 = arith.constant 5.000000e-01 : f32
    %310 = vector.broadcast %cst_132 : f32 to vector<8x384xf32>
    %311 = arith.mulf %310, %309 : vector<8x384xf32>
    %cst_133 = arith.constant 5.000000e-01 : f32
    %312 = vector.broadcast %cst_133 : f32 to vector<8x384xf32>
    %313 = arith.addf %311, %312 : vector<8x384xf32>
    %314 = vector.extract_strided_slice %313 {offsets = [0, 0], sizes = [8, 128], strides = [1, 1]} : vector<8x384xf32> to vector<8x128xf32>
    %315 = vector.extract_strided_slice %313 {offsets = [0, 128], sizes = [8, 128], strides = [1, 1]} : vector<8x384xf32> to vector<8x128xf32>
    %316 = vector.extract_strided_slice %313 {offsets = [0, 256], sizes = [8, 128], strides = [1, 1]} : vector<8x384xf32> to vector<8x128xf32>
    %317 = math.tanh %306 : vector<8x128xf32>
    %318 = arith.mulf %315, %295 : vector<8x128xf32>
    %319 = arith.mulf %314, %317 : vector<8x128xf32>
    %320 = arith.addf %318, %319 : vector<8x128xf32>
    %321 = math.tanh %320 : vector<8x128xf32>
    %322 = arith.mulf %316, %321 : vector<8x128xf32>
    %c2_i32_134 = arith.constant 2 : i32
    %323 = arith.index_cast %c2_i32_134 : i32 to index
    %c0_135 = arith.constant 0 : index
    %c0_136 = arith.constant 0 : index
    %324 = vector.load %arg10[%323, %c0_135, %c0_136] : memref<8x8x512xf32, #tpu.memory_space<vmem>>, vector<1x8x512xf32>
    %325 = vector.shape_cast %324 : vector<1x8x512xf32> to vector<8x512xf32>
    %326 = vector.extract_strided_slice %325 {offsets = [0, 0], sizes = [8, 384], strides = [1, 1]} : vector<8x512xf32> to vector<8x384xf32>
    %cst_137 = arith.constant dense<0.000000e+00> : vector<8x384xf32>
    %327 = tpu.matmul %322, %259, %cst_137 {dimension_numbers = #tpu.dot_dimension_numbers<[1], [0], [0], [1], [0, 0, 1, 1], [], []>} : vector<8x128xf32>, vector<128x384xf32>, vector<8x384xf32> -> vector<8x384xf32>
    %328 = arith.addf %326, %327 : vector<8x384xf32>
    %329 = vector.extract_strided_slice %325 {offsets = [0, 384], sizes = [8, 128], strides = [1, 1]} : vector<8x512xf32> to vector<8x128xf32>
    %cst_138 = arith.constant dense<0.000000e+00> : vector<8x128xf32>
    %330 = tpu.matmul %322, %261, %cst_138 {dimension_numbers = #tpu.dot_dimension_numbers<[1], [0], [0], [1], [0, 0, 1, 1], [], []>} : vector<8x128xf32>, vector<128x128xf32>, vector<8x128xf32> -> vector<8x128xf32>
    %331 = arith.addf %329, %330 : vector<8x128xf32>
    %cst_139 = arith.constant 5.000000e-01 : f32
    %332 = vector.broadcast %cst_139 : f32 to vector<8x384xf32>
    %333 = arith.mulf %332, %328 : vector<8x384xf32>
    %334 = math.tanh %333 : vector<8x384xf32>
    %cst_140 = arith.constant 5.000000e-01 : f32
    %335 = vector.broadcast %cst_140 : f32 to vector<8x384xf32>
    %336 = arith.mulf %335, %334 : vector<8x384xf32>
    %cst_141 = arith.constant 5.000000e-01 : f32
    %337 = vector.broadcast %cst_141 : f32 to vector<8x384xf32>
    %338 = arith.addf %336, %337 : vector<8x384xf32>
    %339 = vector.extract_strided_slice %338 {offsets = [0, 0], sizes = [8, 128], strides = [1, 1]} : vector<8x384xf32> to vector<8x128xf32>
    %340 = vector.extract_strided_slice %338 {offsets = [0, 128], sizes = [8, 128], strides = [1, 1]} : vector<8x384xf32> to vector<8x128xf32>
    %341 = vector.extract_strided_slice %338 {offsets = [0, 256], sizes = [8, 128], strides = [1, 1]} : vector<8x384xf32> to vector<8x128xf32>
    %342 = math.tanh %331 : vector<8x128xf32>
    %343 = arith.mulf %340, %320 : vector<8x128xf32>
    %344 = arith.mulf %339, %342 : vector<8x128xf32>
    %345 = arith.addf %343, %344 : vector<8x128xf32>
    %346 = math.tanh %345 : vector<8x128xf32>
    %347 = arith.mulf %341, %346 : vector<8x128xf32>
    %c3_i32_142 = arith.constant 3 : i32
    %348 = arith.index_cast %c3_i32_142 : i32 to index
    %c0_143 = arith.constant 0 : index
    %c0_144 = arith.constant 0 : index
    %349 = vector.load %arg10[%348, %c0_143, %c0_144] : memref<8x8x512xf32, #tpu.memory_space<vmem>>, vector<1x8x512xf32>
    %350 = vector.shape_cast %349 : vector<1x8x512xf32> to vector<8x512xf32>
    %351 = vector.extract_strided_slice %350 {offsets = [0, 0], sizes = [8, 384], strides = [1, 1]} : vector<8x512xf32> to vector<8x384xf32>
    %cst_145 = arith.constant dense<0.000000e+00> : vector<8x384xf32>
    %352 = tpu.matmul %347, %259, %cst_145 {dimension_numbers = #tpu.dot_dimension_numbers<[1], [0], [0], [1], [0, 0, 1, 1], [], []>} : vector<8x128xf32>, vector<128x384xf32>, vector<8x384xf32> -> vector<8x384xf32>
    %353 = arith.addf %351, %352 : vector<8x384xf32>
    %354 = vector.extract_strided_slice %350 {offsets = [0, 384], sizes = [8, 128], strides = [1, 1]} : vector<8x512xf32> to vector<8x128xf32>
    %cst_146 = arith.constant dense<0.000000e+00> : vector<8x128xf32>
    %355 = tpu.matmul %347, %261, %cst_146 {dimension_numbers = #tpu.dot_dimension_numbers<[1], [0], [0], [1], [0, 0, 1, 1], [], []>} : vector<8x128xf32>, vector<128x128xf32>, vector<8x128xf32> -> vector<8x128xf32>
    %356 = arith.addf %354, %355 : vector<8x128xf32>
    %cst_147 = arith.constant 5.000000e-01 : f32
    %357 = vector.broadcast %cst_147 : f32 to vector<8x384xf32>
    %358 = arith.mulf %357, %353 : vector<8x384xf32>
    %359 = math.tanh %358 : vector<8x384xf32>
    %cst_148 = arith.constant 5.000000e-01 : f32
    %360 = vector.broadcast %cst_148 : f32 to vector<8x384xf32>
    %361 = arith.mulf %360, %359 : vector<8x384xf32>
    %cst_149 = arith.constant 5.000000e-01 : f32
    %362 = vector.broadcast %cst_149 : f32 to vector<8x384xf32>
    %363 = arith.addf %361, %362 : vector<8x384xf32>
    %364 = vector.extract_strided_slice %363 {offsets = [0, 0], sizes = [8, 128], strides = [1, 1]} : vector<8x384xf32> to vector<8x128xf32>
    %365 = vector.extract_strided_slice %363 {offsets = [0, 128], sizes = [8, 128], strides = [1, 1]} : vector<8x384xf32> to vector<8x128xf32>
    %366 = vector.extract_strided_slice %363 {offsets = [0, 256], sizes = [8, 128], strides = [1, 1]} : vector<8x384xf32> to vector<8x128xf32>
    %367 = math.tanh %356 : vector<8x128xf32>
    %368 = arith.mulf %365, %345 : vector<8x128xf32>
    %369 = arith.mulf %364, %367 : vector<8x128xf32>
    %370 = arith.addf %368, %369 : vector<8x128xf32>
    %371 = math.tanh %370 : vector<8x128xf32>
    %372 = arith.mulf %366, %371 : vector<8x128xf32>
    %c4_i32_150 = arith.constant 4 : i32
    %373 = arith.index_cast %c4_i32_150 : i32 to index
    %c0_151 = arith.constant 0 : index
    %c0_152 = arith.constant 0 : index
    %374 = vector.load %arg10[%373, %c0_151, %c0_152] : memref<8x8x512xf32, #tpu.memory_space<vmem>>, vector<1x8x512xf32>
    %375 = vector.shape_cast %374 : vector<1x8x512xf32> to vector<8x512xf32>
    %376 = vector.extract_strided_slice %375 {offsets = [0, 0], sizes = [8, 384], strides = [1, 1]} : vector<8x512xf32> to vector<8x384xf32>
    %cst_153 = arith.constant dense<0.000000e+00> : vector<8x384xf32>
    %377 = tpu.matmul %372, %259, %cst_153 {dimension_numbers = #tpu.dot_dimension_numbers<[1], [0], [0], [1], [0, 0, 1, 1], [], []>} : vector<8x128xf32>, vector<128x384xf32>, vector<8x384xf32> -> vector<8x384xf32>
    %378 = arith.addf %376, %377 : vector<8x384xf32>
    %379 = vector.extract_strided_slice %375 {offsets = [0, 384], sizes = [8, 128], strides = [1, 1]} : vector<8x512xf32> to vector<8x128xf32>
    %cst_154 = arith.constant dense<0.000000e+00> : vector<8x128xf32>
    %380 = tpu.matmul %372, %261, %cst_154 {dimension_numbers = #tpu.dot_dimension_numbers<[1], [0], [0], [1], [0, 0, 1, 1], [], []>} : vector<8x128xf32>, vector<128x128xf32>, vector<8x128xf32> -> vector<8x128xf32>
    %381 = arith.addf %379, %380 : vector<8x128xf32>
    %cst_155 = arith.constant 5.000000e-01 : f32
    %382 = vector.broadcast %cst_155 : f32 to vector<8x384xf32>
    %383 = arith.mulf %382, %378 : vector<8x384xf32>
    %384 = math.tanh %383 : vector<8x384xf32>
    %cst_156 = arith.constant 5.000000e-01 : f32
    %385 = vector.broadcast %cst_156 : f32 to vector<8x384xf32>
    %386 = arith.mulf %385, %384 : vector<8x384xf32>
    %cst_157 = arith.constant 5.000000e-01 : f32
    %387 = vector.broadcast %cst_157 : f32 to vector<8x384xf32>
    %388 = arith.addf %386, %387 : vector<8x384xf32>
    %389 = vector.extract_strided_slice %388 {offsets = [0, 0], sizes = [8, 128], strides = [1, 1]} : vector<8x384xf32> to vector<8x128xf32>
    %390 = vector.extract_strided_slice %388 {offsets = [0, 128], sizes = [8, 128], strides = [1, 1]} : vector<8x384xf32> to vector<8x128xf32>
    %391 = vector.extract_strided_slice %388 {offsets = [0, 256], sizes = [8, 128], strides = [1, 1]} : vector<8x384xf32> to vector<8x128xf32>
    %392 = math.tanh %381 : vector<8x128xf32>
    %393 = arith.mulf %390, %370 : vector<8x128xf32>
    %394 = arith.mulf %389, %392 : vector<8x128xf32>
    %395 = arith.addf %393, %394 : vector<8x128xf32>
    %396 = math.tanh %395 : vector<8x128xf32>
    %397 = arith.mulf %391, %396 : vector<8x128xf32>
    %c5_i32_158 = arith.constant 5 : i32
    %398 = arith.index_cast %c5_i32_158 : i32 to index
    %c0_159 = arith.constant 0 : index
    %c0_160 = arith.constant 0 : index
    %399 = vector.load %arg10[%398, %c0_159, %c0_160] : memref<8x8x512xf32, #tpu.memory_space<vmem>>, vector<1x8x512xf32>
    %400 = vector.shape_cast %399 : vector<1x8x512xf32> to vector<8x512xf32>
    %401 = vector.extract_strided_slice %400 {offsets = [0, 0], sizes = [8, 384], strides = [1, 1]} : vector<8x512xf32> to vector<8x384xf32>
    %cst_161 = arith.constant dense<0.000000e+00> : vector<8x384xf32>
    %402 = tpu.matmul %397, %259, %cst_161 {dimension_numbers = #tpu.dot_dimension_numbers<[1], [0], [0], [1], [0, 0, 1, 1], [], []>} : vector<8x128xf32>, vector<128x384xf32>, vector<8x384xf32> -> vector<8x384xf32>
    %403 = arith.addf %401, %402 : vector<8x384xf32>
    %404 = vector.extract_strided_slice %400 {offsets = [0, 384], sizes = [8, 128], strides = [1, 1]} : vector<8x512xf32> to vector<8x128xf32>
    %cst_162 = arith.constant dense<0.000000e+00> : vector<8x128xf32>
    %405 = tpu.matmul %397, %261, %cst_162 {dimension_numbers = #tpu.dot_dimension_numbers<[1], [0], [0], [1], [0, 0, 1, 1], [], []>} : vector<8x128xf32>, vector<128x128xf32>, vector<8x128xf32> -> vector<8x128xf32>
    %406 = arith.addf %404, %405 : vector<8x128xf32>
    %cst_163 = arith.constant 5.000000e-01 : f32
    %407 = vector.broadcast %cst_163 : f32 to vector<8x384xf32>
    %408 = arith.mulf %407, %403 : vector<8x384xf32>
    %409 = math.tanh %408 : vector<8x384xf32>
    %cst_164 = arith.constant 5.000000e-01 : f32
    %410 = vector.broadcast %cst_164 : f32 to vector<8x384xf32>
    %411 = arith.mulf %410, %409 : vector<8x384xf32>
    %cst_165 = arith.constant 5.000000e-01 : f32
    %412 = vector.broadcast %cst_165 : f32 to vector<8x384xf32>
    %413 = arith.addf %411, %412 : vector<8x384xf32>
    %414 = vector.extract_strided_slice %413 {offsets = [0, 0], sizes = [8, 128], strides = [1, 1]} : vector<8x384xf32> to vector<8x128xf32>
    %415 = vector.extract_strided_slice %413 {offsets = [0, 128], sizes = [8, 128], strides = [1, 1]} : vector<8x384xf32> to vector<8x128xf32>
    %416 = vector.extract_strided_slice %413 {offsets = [0, 256], sizes = [8, 128], strides = [1, 1]} : vector<8x384xf32> to vector<8x128xf32>
    %417 = math.tanh %406 : vector<8x128xf32>
    %418 = arith.mulf %415, %395 : vector<8x128xf32>
    %419 = arith.mulf %414, %417 : vector<8x128xf32>
    %420 = arith.addf %418, %419 : vector<8x128xf32>
    %421 = math.tanh %420 : vector<8x128xf32>
    %422 = arith.mulf %416, %421 : vector<8x128xf32>
    %c6_i32_166 = arith.constant 6 : i32
    %423 = arith.index_cast %c6_i32_166 : i32 to index
    %c0_167 = arith.constant 0 : index
    %c0_168 = arith.constant 0 : index
    %424 = vector.load %arg10[%423, %c0_167, %c0_168] : memref<8x8x512xf32, #tpu.memory_space<vmem>>, vector<1x8x512xf32>
    %425 = vector.shape_cast %424 : vector<1x8x512xf32> to vector<8x512xf32>
    %426 = vector.extract_strided_slice %425 {offsets = [0, 0], sizes = [8, 384], strides = [1, 1]} : vector<8x512xf32> to vector<8x384xf32>
    %cst_169 = arith.constant dense<0.000000e+00> : vector<8x384xf32>
    %427 = tpu.matmul %422, %259, %cst_169 {dimension_numbers = #tpu.dot_dimension_numbers<[1], [0], [0], [1], [0, 0, 1, 1], [], []>} : vector<8x128xf32>, vector<128x384xf32>, vector<8x384xf32> -> vector<8x384xf32>
    %428 = arith.addf %426, %427 : vector<8x384xf32>
    %429 = vector.extract_strided_slice %425 {offsets = [0, 384], sizes = [8, 128], strides = [1, 1]} : vector<8x512xf32> to vector<8x128xf32>
    %cst_170 = arith.constant dense<0.000000e+00> : vector<8x128xf32>
    %430 = tpu.matmul %422, %261, %cst_170 {dimension_numbers = #tpu.dot_dimension_numbers<[1], [0], [0], [1], [0, 0, 1, 1], [], []>} : vector<8x128xf32>, vector<128x128xf32>, vector<8x128xf32> -> vector<8x128xf32>
    %431 = arith.addf %429, %430 : vector<8x128xf32>
    %cst_171 = arith.constant 5.000000e-01 : f32
    %432 = vector.broadcast %cst_171 : f32 to vector<8x384xf32>
    %433 = arith.mulf %432, %428 : vector<8x384xf32>
    %434 = math.tanh %433 : vector<8x384xf32>
    %cst_172 = arith.constant 5.000000e-01 : f32
    %435 = vector.broadcast %cst_172 : f32 to vector<8x384xf32>
    %436 = arith.mulf %435, %434 : vector<8x384xf32>
    %cst_173 = arith.constant 5.000000e-01 : f32
    %437 = vector.broadcast %cst_173 : f32 to vector<8x384xf32>
    %438 = arith.addf %436, %437 : vector<8x384xf32>
    %439 = vector.extract_strided_slice %438 {offsets = [0, 0], sizes = [8, 128], strides = [1, 1]} : vector<8x384xf32> to vector<8x128xf32>
    %440 = vector.extract_strided_slice %438 {offsets = [0, 128], sizes = [8, 128], strides = [1, 1]} : vector<8x384xf32> to vector<8x128xf32>
    %441 = vector.extract_strided_slice %438 {offsets = [0, 256], sizes = [8, 128], strides = [1, 1]} : vector<8x384xf32> to vector<8x128xf32>
    %442 = math.tanh %431 : vector<8x128xf32>
    %443 = arith.mulf %440, %420 : vector<8x128xf32>
    %444 = arith.mulf %439, %442 : vector<8x128xf32>
    %445 = arith.addf %443, %444 : vector<8x128xf32>
    %446 = math.tanh %445 : vector<8x128xf32>
    %447 = arith.mulf %441, %446 : vector<8x128xf32>
    %c7_i32_174 = arith.constant 7 : i32
    %448 = arith.index_cast %c7_i32_174 : i32 to index
    %c0_175 = arith.constant 0 : index
    %c0_176 = arith.constant 0 : index
    %449 = vector.load %arg10[%448, %c0_175, %c0_176] : memref<8x8x512xf32, #tpu.memory_space<vmem>>, vector<1x8x512xf32>
    %450 = vector.shape_cast %449 : vector<1x8x512xf32> to vector<8x512xf32>
    %451 = vector.extract_strided_slice %450 {offsets = [0, 0], sizes = [8, 384], strides = [1, 1]} : vector<8x512xf32> to vector<8x384xf32>
    %cst_177 = arith.constant dense<0.000000e+00> : vector<8x384xf32>
    %452 = tpu.matmul %447, %259, %cst_177 {dimension_numbers = #tpu.dot_dimension_numbers<[1], [0], [0], [1], [0, 0, 1, 1], [], []>} : vector<8x128xf32>, vector<128x384xf32>, vector<8x384xf32> -> vector<8x384xf32>
    %453 = arith.addf %451, %452 : vector<8x384xf32>
    %454 = vector.extract_strided_slice %450 {offsets = [0, 384], sizes = [8, 128], strides = [1, 1]} : vector<8x512xf32> to vector<8x128xf32>
    %cst_178 = arith.constant dense<0.000000e+00> : vector<8x128xf32>
    %455 = tpu.matmul %447, %261, %cst_178 {dimension_numbers = #tpu.dot_dimension_numbers<[1], [0], [0], [1], [0, 0, 1, 1], [], []>} : vector<8x128xf32>, vector<128x128xf32>, vector<8x128xf32> -> vector<8x128xf32>
    %456 = arith.addf %454, %455 : vector<8x128xf32>
    %cst_179 = arith.constant 5.000000e-01 : f32
    %457 = vector.broadcast %cst_179 : f32 to vector<8x384xf32>
    %458 = arith.mulf %457, %453 : vector<8x384xf32>
    %459 = math.tanh %458 : vector<8x384xf32>
    %cst_180 = arith.constant 5.000000e-01 : f32
    %460 = vector.broadcast %cst_180 : f32 to vector<8x384xf32>
    %461 = arith.mulf %460, %459 : vector<8x384xf32>
    %cst_181 = arith.constant 5.000000e-01 : f32
    %462 = vector.broadcast %cst_181 : f32 to vector<8x384xf32>
    %463 = arith.addf %461, %462 : vector<8x384xf32>
    %464 = vector.extract_strided_slice %463 {offsets = [0, 0], sizes = [8, 128], strides = [1, 1]} : vector<8x384xf32> to vector<8x128xf32>
    %465 = vector.extract_strided_slice %463 {offsets = [0, 128], sizes = [8, 128], strides = [1, 1]} : vector<8x384xf32> to vector<8x128xf32>
    %466 = vector.extract_strided_slice %463 {offsets = [0, 256], sizes = [8, 128], strides = [1, 1]} : vector<8x384xf32> to vector<8x128xf32>
    %467 = math.tanh %456 : vector<8x128xf32>
    %468 = arith.mulf %465, %445 : vector<8x128xf32>
    %469 = arith.mulf %464, %467 : vector<8x128xf32>
    %470 = arith.addf %468, %469 : vector<8x128xf32>
    %471 = math.tanh %470 : vector<8x128xf32>
    %472 = arith.mulf %466, %471 : vector<8x128xf32>
    %c8_i32_182 = arith.constant 8 : i32
    %c0_183 = arith.constant 0 : index
    %c0_184 = arith.constant 0 : index
    %473 = vector.load %arg7[%c0_183, %c0_184] : memref<1x128xf32, #tpu.memory_space<vmem>>, vector<1x128xf32>
    %474 = vector.broadcast %473 : vector<1x128xf32> to vector<8x128xf32>
    %475 = arith.mulf %472, %474 : vector<8x128xf32>
    %cst_185 = arith.constant dense<0.000000e+00> : vector<8xf32>
    %476 = vector.multi_reduction <add>, %475, %cst_185 [1] : vector<8x128xf32> to vector<8xf32>
    %477 = vector.shape_cast %476 : vector<8xf32> to vector<8x1xf32>
    %c0_186 = arith.constant 0 : index
    %c0_187 = arith.constant 0 : index
    %478 = vector.load %arg8[%c0_186, %c0_187] : memref<1x1xf32, #tpu.memory_space<vmem>>, vector<1x1xf32>
    %479 = vector.broadcast %478 : vector<1x1xf32> to vector<8x1xf32>
    %480 = arith.addf %477, %479 : vector<8x1xf32>
    %c0_188 = arith.constant 0 : index
    %c0_189 = arith.constant 0 : index
    %481 = vector.load %arg9[%c0_188, %c0_189] : memref<8x1xf32, #tpu.memory_space<vmem>>, vector<8x1xf32>
    tpu.vector_store %arg9[%c0_188, %c0_189], %480 {strides = array<i32>} : memref<8x1xf32, #tpu.memory_space<vmem>>, vector<8x1xf32>,
    return
  }
  func.func @transform_0(%arg0: i32) -> (i32, i32, i32) {
    %c0_i32 = arith.constant 0 : i32
    %c0_i32_0 = arith.constant 0 : i32
    %c0_i32_1 = arith.constant 0 : i32
    return %c0_i32, %arg0, %c0_i32_0 : i32, i32, i32
  }
  func.func @transform_1(%arg0: i32) -> (i32, i32) {
    %c0_i32 = arith.constant 0 : i32
    %c0_i32_0 = arith.constant 0 : i32
    %c0_i32_1 = arith.constant 0 : i32
    return %c0_i32, %c0_i32_0 : i32, i32
  }
  func.func @transform_2(%arg0: i32) -> (i32, i32, i32) {
    %c0_i32 = arith.constant 0 : i32
    %c0_i32_0 = arith.constant 0 : i32
    %c0_i32_1 = arith.constant 0 : i32
    %c0_i32_2 = arith.constant 0 : i32
    return %c0_i32, %c0_i32_0, %c0_i32_1 : i32, i32, i32
  }
  func.func @transform_3(%arg0: i32) -> (i32, i32, i32) {
    %c0_i32 = arith.constant 0 : i32
    %c0_i32_0 = arith.constant 0 : i32
    %c0_i32_1 = arith.constant 0 : i32
    %c0_i32_2 = arith.constant 0 : i32
    return %c0_i32, %c0_i32_0, %c0_i32_1 : i32, i32, i32
  }
  func.func @transform_4(%arg0: i32) -> (i32, i32, i32) {
    %c0_i32 = arith.constant 0 : i32
    %c0_i32_0 = arith.constant 0 : i32
    %c0_i32_1 = arith.constant 0 : i32
    %c0_i32_2 = arith.constant 0 : i32
    return %c0_i32, %c0_i32_0, %c0_i32_1 : i32, i32, i32
  }
  func.func @transform_5(%arg0: i32) -> (i32, i32, i32) {
    %c0_i32 = arith.constant 0 : i32
    %c0_i32_0 = arith.constant 0 : i32
    %c0_i32_1 = arith.constant 0 : i32
    %c0_i32_2 = arith.constant 0 : i32
    return %c0_i32, %c0_i32_0, %c0_i32_1 : i32, i32, i32
  }
  func.func @transform_6(%arg0: i32) -> (i32, i32) {
    %c0_i32 = arith.constant 0 : i32
    %c0_i32_0 = arith.constant 0 : i32
    %c0_i32_1 = arith.constant 0 : i32
    return %c0_i32, %c0_i32_0 : i32, i32
  }
  func.func @transform_7(%arg0: i32) -> (i32, i32) {
    %c0_i32 = arith.constant 0 : i32
    %c0_i32_0 = arith.constant 0 : i32
    %c0_i32_1 = arith.constant 0 : i32
    return %c0_i32, %c0_i32_0 : i32, i32
  }
  func.func @transform_8(%arg0: i32) -> (i32, i32) {
    %c0_i32 = arith.constant 0 : i32
    %c0_i32_0 = arith.constant 0 : i32
    return %arg0, %c0_i32 : i32, i32
  }
}

</mosaic_0001>

<llo_original>
// kernel: tpu_custom_call.1
$region0: #{tpu_custom_call.1}
  #allocation0 [shape = 'u32[]', space=smem, size = 0x4, offset = 0x4, fixed_abs, tag = 'smem constant byte address 0x4 - core index']
  #allocation1 [shape = 'u32[144,128]{1,0:T(1,128)}', space=vmem, size = 0x12000, scoped, tag = 'internal scratch']
  #allocation2 [shape = 'f32[8,8,512]{2,1,0:T(8,128)}', space=vmem, size = 0x20000, scoped, tag = 'scratch operand']
  #allocation3 [shape = 'f32[8,8,128]{2,1,0:T(8,128)}', space=vmem, size = 0x8000, scoped, tag = 'scratch operand']
  #allocation4 [shape = 'f32[1,1]{1,0:T(1,128)S(1)}', space=vmem, size = 0x200, scoped, tag = 'scoped memory for tpu_custom_call.1']
  %s0 = inlined_call_operand.hbm [shape: f32[8,8,128], index: 0, kind: input, shape index: {}]
  %s1 = inlined_call_operand.hbm [shape: f32[128,512], index: 1, kind: input, shape index: {}]
  %s2 = inlined_call_operand.hbm [shape: f32[1,128,512], index: 2, kind: input, shape index: {}]
  %s3 = inlined_call_operand.hbm [shape: f32[2,128,384], index: 3, kind: input, shape index: {}]
  %s4 = inlined_call_operand.hbm [shape: f32[2,128,128], index: 4, kind: input, shape index: {}]
  %s5 = inlined_call_operand.vmem [shape: f32[2,1,512], index: 5, kind: input, shape index: {}]
  %s6 = inlined_call_operand.vmem [shape: f32[1,128], index: 6, kind: input, shape index: {}]
  %s7 = inlined_call_operand.<no memory space> [shape: f32[1,1], index: 7, kind: input, shape index: {}]
  %s8 = inlined_call_operand.vmem [shape: f32[8,1], index: 8, kind: output, shape index: {}]
  %s9 = sld [smem:[#allocation0]]
  $region62: #{tpu_custom_call.1} parent=0
    _
  %s11 = ssub.s32 1, %s9
  %s12 = scalar_select 0, %s11, %s9
  %v13 = vstv %s7
  %14 = vst [vmem:[#allocation4] sm:$0x1] %v13
  $region1: #{tpu_custom_call.1} parent=0
    #allocation5 [shape = 'u8[32768]{0}', space=vmem, size = 0x8000, scoped, tag = 'input window, operand 0, single buffered']
    #allocation6 [shape = 's32[1]{0}', space=sflag, size = 0x4, scoped, tag = 'scoped memory for tpu_custom_call.1']
    #allocation7 [shape = 'u8[262144]{0}', space=vmem, size = 0x40000, scoped, tag = 'input window, operand 1, single buffered']
    #allocation8 [shape = 's32[1]{0}', space=sflag, size = 0x4, scoped, tag = 'scoped memory for tpu_custom_call.1']
    #allocation9 [shape = 'u8[262144]{0}', space=vmem, size = 0x40000, scoped, tag = 'input window, operand 2, single buffered']
    #allocation10 [shape = 'u8[393216]{0}', space=vmem, size = 0x60000, scoped, tag = 'input window, operand 3, single buffered']
    #allocation11 [shape = 's32[1]{0}', space=sflag, size = 0x4, scoped, tag = 'scoped memory for tpu_custom_call.1']
    #allocation12 [shape = 'u8[131072]{0}', space=vmem, size = 0x20000, scoped, tag = 'input window, operand 4, single buffered']
    %15 = vsyncpa [#allocation6], 0
    %16 = vsyncpa [#allocation8], 0
    %17 = vsyncpa [#allocation11], 0
    // Predicated region
    $region2: #{tpu_custom_call.1} parent=1 // pred_check
      _
    $region3: #{tpu_custom_call.1} parent=1 // pred_check_branch
      %19 = sbr.rel (0) target = $region5
    $region4: #{tpu_custom_call.1} parent=1 // pred_region
      %s21 = ssub.s32 1024, 1024
      %22 = vsyncadd [#allocation6], %s21
      %s23 = sshll.u32 [#allocation5], 4
      %s24 = int_to_ptr.vmem [resolvable:$true] %s23
      %29 = dma.hbm_to_vmem [thread:$0]  %s0, 1024, %s24, [#allocation6], 128, 128, 8
    $region5: #{tpu_custom_call.1} parent=1 // pred_fallthru
      _
    // Predicated region
    $region6: #{tpu_custom_call.1} parent=1 // pred_check
      _
    $region7: #{tpu_custom_call.1} parent=1 // pred_check_branch
      %31 = sbr.rel (0) target = $region9
    $region8: #{tpu_custom_call.1} parent=1 // pred_region
      %s33 = ssub.s32 8192, 8192
      %34 = vsyncadd [#allocation8], %s33
      %s35 = sshll.u32 [#allocation7], 4
      %s36 = int_to_ptr.vmem [resolvable:$true] %s35
      %41 = dma.hbm_to_vmem [thread:$0]  %s1, 8192, %s36, [#allocation8], 512, 512, 32
    $region9: #{tpu_custom_call.1} parent=1 // pred_fallthru
      _
    // Predicated region
    $region10: #{tpu_custom_call.1} parent=1 // pred_check
      _
    $region11: #{tpu_custom_call.1} parent=1 // pred_check_branch
      %43 = sbr.rel (0) target = $region13
    $region12: #{tpu_custom_call.1} parent=1 // pred_region
      %s45 = ssub.s32 8192, 8192
      %46 = vsyncadd [#allocation8], %s45
      %s47 = sshll.u32 [#allocation9], 4
      %s48 = int_to_ptr.vmem [resolvable:$true] %s47
      %53 = dma.hbm_to_vmem [thread:$0]  %s2, 8192, %s48, [#allocation8], 512, 512, 32
    $region13: #{tpu_custom_call.1} parent=1 // pred_fallthru
      _
    // Predicated region
    $region14: #{tpu_custom_call.1} parent=1 // pred_check
      _
    $region15: #{tpu_custom_call.1} parent=1 // pred_check_branch
      %55 = sbr.rel (0) target = $region17
    $region16: #{tpu_custom_call.1} parent=1 // pred_region
      %s57 = ssub.s32 12288, 12288
      %58 = vsyncadd [#allocation11], %s57
      %s59 = sshll.u32 [#allocation10], 4
      %s60 = int_to_ptr.vmem [resolvable:$true] %s59
      %65 = dma.hbm_to_vmem [thread:$0]  %s3, 12288, %s60, [#allocation11], 384, 384, 24
    $region17: #{tpu_custom_call.1} parent=1 // pred_fallthru
      _
    // Predicated region
    $region18: #{tpu_custom_call.1} parent=1 // pred_check
      _
    $region19: #{tpu_custom_call.1} parent=1 // pred_check_branch
      %67 = sbr.rel (0) target = $region21
    $region20: #{tpu_custom_call.1} parent=1 // pred_region
      %s69 = ssub.s32 4096, 4096
      %70 = vsyncadd [#allocation11], %s69
      %s71 = sshll.u32 [#allocation12], 4
      %s72 = int_to_ptr.vmem [resolvable:$true] %s71
      %77 = dma.hbm_to_vmem [thread:$0]  %s4, 4096, %s72, [#allocation11], 128, 128, 8
    $region21: #{tpu_custom_call.1} parent=1 // pred_fallthru
      _
    // Predicated region
    $region22: #{tpu_custom_call.1} parent=1 // pred_check
      _
    $region23: #{tpu_custom_call.1} parent=1 // pred_check_branch
      %79 = sbr.rel (0) target = $region25
    $region24: #{tpu_custom_call.1} parent=1 // pred_region
      _
    $region25: #{tpu_custom_call.1} parent=1 // pred_fallthru
      _
    // Predicated region
    $region26: #{tpu_custom_call.1} parent=1 // pred_check
      _
    $region27: #{tpu_custom_call.1} parent=1 // pred_check_branch
      %81 = sbr.rel (0) target = $region29
    $region28: #{tpu_custom_call.1} parent=1 // pred_region
      _
    $region29: #{tpu_custom_call.1} parent=1 // pred_fallthru
      _
    // Predicated region
    $region30: #{tpu_custom_call.1} parent=1 // pred_check
      _
    $region31: #{tpu_custom_call.1} parent=1 // pred_check_branch
      %83 = sbr.rel (0) target = $region33
    $region32: #{tpu_custom_call.1} parent=1 // pred_region
      _
    $region33: #{tpu_custom_call.1} parent=1 // pred_fallthru
      _
    // Predicated region
    $region34: #{tpu_custom_call.1} parent=1 // pred_check
      _
    $region35: #{tpu_custom_call.1} parent=1 // pred_check_branch
      %85 = sbr.rel (0) target = $region37
    $region36: #{tpu_custom_call.1} parent=1 // pred_region
      %86 = dma.done [#allocation6], 1024
    $region37: #{tpu_custom_call.1} parent=1 // pred_fallthru
      _
    // Predicated region
    $region38: #{tpu_custom_call.1} parent=1 // pred_check
      _
    $region39: #{tpu_custom_call.1} parent=1 // pred_check_branch
      %88 = sbr.rel (0) target = $region41
    $region40: #{tpu_custom_call.1} parent=1 // pred_region
      %89 = dma.done [#allocation8], 8192
    $region41: #{tpu_custom_call.1} parent=1 // pred_fallthru
      _
    // Predicated region
    $region42: #{tpu_custom_call.1} parent=1 // pred_check
      _
    $region43: #{tpu_custom_call.1} parent=1 // pred_check_branch
      %91 = sbr.rel (0) target = $region45
    $region44: #{tpu_custom_call.1} parent=1 // pred_region
      %92 = dma.done [#allocation8], 8192
    $region45: #{tpu_custom_call.1} parent=1 // pred_fallthru
      _
    // Predicated region
    $region46: #{tpu_custom_call.1} parent=1 // pred_check
      _
    $region47: #{tpu_custom_call.1} parent=1 // pred_check_branch
      %94 = sbr.rel (0) target = $region49
    $region48: #{tpu_custom_call.1} parent=1 // pred_region
      %95 = dma.done [#allocation11], 12288
    $region49: #{tpu_custom_call.1} parent=1 // pred_fallthru
      _
    // Predicated region
    $region50: #{tpu_custom_call.1} parent=1 // pred_check
      _
    $region51: #{tpu_custom_call.1} parent=1 // pred_check_branch
      %97 = sbr.rel (0) target = $region53
    $region52: #{tpu_custom_call.1} parent=1 // pred_region
      %98 = dma.done [#allocation11], 4096
    $region53: #{tpu_custom_call.1} parent=1 // pred_fallthru
      _
    %v99 = vld [vmem:[#allocation7] sm:$0xff]
    %v100 = vld [vmem:[#allocation7 + $0x8] sm:$0xff]
    %v101 = vld [vmem:[#allocation7 + $0x10] sm:$0xff]
    %v102 = vld [vmem:[#allocation7 + $0x18] sm:$0xff]
    %v103 = vld [vmem:[#allocation7 + $0x20] sm:$0xff]
    %v104 = vld [vmem:[#allocation7 + $0x28] sm:$0xff]
    %v105 = vld [vmem:[#allocation7 + $0x30] sm:$0xff]
    %v106 = vld [vmem:[#allocation7 + $0x38] sm:$0xff]
    %v107 = vld [vmem:[#allocation7 + $0x40] sm:$0xff]
    %v108 = vld [vmem:[#allocation7 + $0x48] sm:$0xff]
    %v109 = vld [vmem:[#allocation7 + $0x50] sm:$0xff]
    %v110 = vld [vmem:[#allocation7 + $0x58] sm:$0xff]
    %v111 = vld [vmem:[#allocation7 + $0x60] sm:$0xff]
    %v112 = vld [vmem:[#allocation7 + $0x68] sm:$0xff]
    %v113 = vld [vmem:[#allocation7 + $0x70] sm:$0xff]
    %v114 = vld [vmem:[#allocation7 + $0x78] sm:$0xff]
    %v115 = vld [vmem:[#allocation7 + $0x80] sm:$0xff]
    %v116 = vld [vmem:[#allocation7 + $0x88] sm:$0xff]
    %v117 = vld [vmem:[#allocation7 + $0x90] sm:$0xff]
    %v118 = vld [vmem:[#allocation7 + $0x98] sm:$0xff]
    %v119 = vld [vmem:[#allocation7 + $0xa0] sm:$0xff]
    %v120 = vld [vmem:[#allocation7 + $0xa8] sm:$0xff]
    %v121 = vld [vmem:[#allocation7 + $0xb0] sm:$0xff]
    %v122 = vld [vmem:[#allocation7 + $0xb8] sm:$0xff]
    %v123 = vld [vmem:[#allocation7 + $0xc0] sm:$0xff]
    %v124 = vld [vmem:[#allocation7 + $0xc8] sm:$0xff]
    %v125 = vld [vmem:[#allocation7 + $0xd0] sm:$0xff]
    %v126 = vld [vmem:[#allocation7 + $0xd8] sm:$0xff]
    %v127 = vld [vmem:[#allocation7 + $0xe0] sm:$0xff]
    %v128 = vld [vmem:[#allocation7 + $0xe8] sm:$0xff]
    %v129 = vld [vmem:[#allocation7 + $0xf0] sm:$0xff]
    %v130 = vld [vmem:[#allocation7 + $0xf8] sm:$0xff]
    %v131 = vld [vmem:[#allocation7 + $0x100] sm:$0xff]
    %v132 = vld [vmem:[#allocation7 + $0x108] sm:$0xff]
    %v133 = vld [vmem:[#allocation7 + $0x110] sm:$0xff]
    %v134 = vld [vmem:[#allocation7 + $0x118] sm:$0xff]
    %v135 = vld [vmem:[#allocation7 + $0x120] sm:$0xff]
    %v136 = vld [vmem:[#allocation7 + $0x128] sm:$0xff]
    %v137 = vld [vmem:[#allocation7 + $0x130] sm:$0xff]
    %v138 = vld [vmem:[#allocation7 + $0x138] sm:$0xff]
    %v139 = vld [vmem:[#allocation7 + $0x140] sm:$0xff]
    %v140 = vld [vmem:[#allocation7 + $0x148] sm:$0xff]
    %v141 = vld [vmem:[#allocation7 + $0x150] sm:$0xff]
    %v142 = vld [vmem:[#allocation7 + $0x158] sm:$0xff]
    %v143 = vld [vmem:[#allocation7 + $0x160] sm:$0xff]
    %v144 = vld [vmem:[#allocation7 + $0x168] sm:$0xff]
    %v145 = vld [vmem:[#allocation7 + $0x170] sm:$0xff]
    %v146 = vld [vmem:[#allocation7 + $0x178] sm:$0xff]
    %v147 = vld [vmem:[#allocation7 + $0x180] sm:$0xff]
    %v148 = vld [vmem:[#allocation7 + $0x188] sm:$0xff]
    %v149 = vld [vmem:[#allocation7 + $0x190] sm:$0xff]
    %v150 = vld [vmem:[#allocation7 + $0x198] sm:$0xff]
    %v151 = vld [vmem:[#allocation7 + $0x1a0] sm:$0xff]
    %v152 = vld [vmem:[#allocation7 + $0x1a8] sm:$0xff]
    %v153 = vld [vmem:[#allocation7 + $0x1b0] sm:$0xff]
    %v154 = vld [vmem:[#allocation7 + $0x1b8] sm:$0xff]
    %v155 = vld [vmem:[#allocation7 + $0x1c0] sm:$0xff]
    %v156 = vld [vmem:[#allocation7 + $0x1c8] sm:$0xff]
    %v157 = vld [vmem:[#allocation7 + $0x1d0] sm:$0xff]
    %v158 = vld [vmem:[#allocation7 + $0x1d8] sm:$0xff]
    %v159 = vld [vmem:[#allocation7 + $0x1e0] sm:$0xff]
    %v160 = vld [vmem:[#allocation7 + $0x1e8] sm:$0xff]
    %v161 = vld [vmem:[#allocation7 + $0x1f0] sm:$0xff]
    %v162 = vld [vmem:[#allocation7 + $0x1f8] sm:$0xff]
    %v163 = vld [vmem:[#allocation10] sm:$0xff]
    %v164 = vld [vmem:[#allocation10 + $0x8] sm:$0xff]
    %v165 = vld [vmem:[#allocation10 + $0x10] sm:$0xff]
    %v166 = vld [vmem:[#allocation10 + $0x18] sm:$0xff]
    %v167 = vld [vmem:[#allocation10 + $0x20] sm:$0xff]
    %v168 = vld [vmem:[#allocation10 + $0x28] sm:$0xff]
    %v169 = vld [vmem:[#allocation10 + $0x30] sm:$0xff]
    %v170 = vld [vmem:[#allocation10 + $0x38] sm:$0xff]
    %v171 = vld [vmem:[#allocation10 + $0x40] sm:$0xff]
    %v172 = vld [vmem:[#allocation10 + $0x48] sm:$0xff]
    %v173 = vld [vmem:[#allocation10 + $0x50] sm:$0xff]
    %v174 = vld [vmem:[#allocation10 + $0x58] sm:$0xff]
    %v175 = vld [vmem:[#allocation10 + $0x60] sm:$0xff]
    %v176 = vld [vmem:[#allocation10 + $0x68] sm:$0xff]
    %v177 = vld [vmem:[#allocation10 + $0x70] sm:$0xff]
    %v178 = vld [vmem:[#allocation10 + $0x78] sm:$0xff]
    %v179 = vld [vmem:[#allocation10 + $0x80] sm:$0xff]
    %v180 = vld [vmem:[#allocation10 + $0x88] sm:$0xff]
    %v181 = vld [vmem:[#allocation10 + $0x90] sm:$0xff]
    %v182 = vld [vmem:[#allocation10 + $0x98] sm:$0xff]
    %v183 = vld [vmem:[#allocation10 + $0xa0] sm:$0xff]
    %v184 = vld [vmem:[#allocation10 + $0xa8] sm:$0xff]
    %v185 = vld [vmem:[#allocation10 + $0xb0] sm:$0xff]
    %v186 = vld [vmem:[#allocation10 + $0xb8] sm:$0xff]
    %v187 = vld [vmem:[#allocation10 + $0xc0] sm:$0xff]
    %v188 = vld [vmem:[#allocation10 + $0xc8] sm:$0xff]
    %v189 = vld [vmem:[#allocation10 + $0xd0] sm:$0xff]
    %v190 = vld [vmem:[#allocation10 + $0xd8] sm:$0xff]
    %v191 = vld [vmem:[#allocation10 + $0xe0] sm:$0xff]
    %v192 = vld [vmem:[#allocation10 + $0xe8] sm:$0xff]
    %v193 = vld [vmem:[#allocation10 + $0xf0] sm:$0xff]
    %v194 = vld [vmem:[#allocation10 + $0xf8] sm:$0xff]
    %v195 = vld [vmem:[#allocation10 + $0x100] sm:$0xff]
    %v196 = vld [vmem:[#allocation10 + $0x108] sm:$0xff]
    %v197 = vld [vmem:[#allocation10 + $0x110] sm:$0xff]
    %v198 = vld [vmem:[#allocation10 + $0x118] sm:$0xff]
    %v199 = vld [vmem:[#allocation10 + $0x120] sm:$0xff]
    %v200 = vld [vmem:[#allocation10 + $0x128] sm:$0xff]
    %v201 = vld [vmem:[#allocation10 + $0x130] sm:$0xff]
    %v202 = vld [vmem:[#allocation10 + $0x138] sm:$0xff]
    %v203 = vld [vmem:[#allocation10 + $0x140] sm:$0xff]
    %v204 = vld [vmem:[#allocation10 + $0x148] sm:$0xff]
    %v205 = vld [vmem:[#allocation10 + $0x150] sm:$0xff]
    %v206 = vld [vmem:[#allocation10 + $0x158] sm:$0xff]
    %v207 = vld [vmem:[#allocation10 + $0x160] sm:$0xff]
    %v208 = vld [vmem:[#allocation10 + $0x168] sm:$0xff]
    %v209 = vld [vmem:[#allocation10 + $0x170] sm:$0xff]
    %v210 = vld [vmem:[#allocation10 + $0x178] sm:$0xff]
    %v211 = vld [vmem:[#allocation12] sm:$0xff]
    %v212 = vld [vmem:[#allocation12 + $0x8] sm:$0xff]
    %v213 = vld [vmem:[#allocation12 + $0x10] sm:$0xff]
    %v214 = vld [vmem:[#allocation12 + $0x18] sm:$0xff]
    %v215 = vld [vmem:[#allocation12 + $0x20] sm:$0xff]
    %v216 = vld [vmem:[#allocation12 + $0x28] sm:$0xff]
    %v217 = vld [vmem:[#allocation12 + $0x30] sm:$0xff]
    %v218 = vld [vmem:[#allocation12 + $0x38] sm:$0xff]
    %v219 = vld [vmem:[#allocation12 + $0x40] sm:$0xff]
    %v220 = vld [vmem:[#allocation12 + $0x48] sm:$0xff]
    %v221 = vld [vmem:[#allocation12 + $0x50] sm:$0xff]
    %v222 = vld [vmem:[#allocation12 + $0x58] sm:$0xff]
    %v223 = vld [vmem:[#allocation12 + $0x60] sm:$0xff]
    %v224 = vld [vmem:[#allocation12 + $0x68] sm:$0xff]
    %v225 = vld [vmem:[#allocation12 + $0x70] sm:$0xff]
    %v226 = vld [vmem:[#allocation12 + $0x78] sm:$0xff]
    %v227 = vld [vmem:[%s5] sm:$0xf]
    %v228 = vld [vmem:[#allocation5] sm:$0xff]
    %v229 = vld [vmem:[#allocation5 + $0x8] sm:$0xff]
    %v230 = vld [vmem:[#allocation5 + $0x10] sm:$0xff]
    %v231 = vld [vmem:[#allocation5 + $0x18] sm:$0xff]
    %v232 = vld [vmem:[#allocation5 + $0x20] sm:$0xff]
    %v233 = vld [vmem:[#allocation5 + $0x28] sm:$0xff]
    %v234 = vld [vmem:[#allocation5 + $0x30] sm:$0xff]
    %v235 = vld [vmem:[#allocation5 + $0x38] sm:$0xff]
    %v237 = vlaneseq
    %v238 = vshrl.u32 %v237, 7
    %v239 = vsub.s32 0, %v238
    %v240 = vrot.slane %v227, %v239
    %v241 = vlaneseq
    %v242 = vshrl.u32 %v241, 7
    %v243 = vsub.s32 1, %v242
    %v244 = vrot.slane %v227, %v243
    %v245 = vlaneseq
    %v246 = vshrl.u32 %v245, 7
    %v247 = vsub.s32 2, %v246
    %v248 = vrot.slane %v227, %v247
    %v249 = vlaneseq
    %v250 = vshrl.u32 %v249, 7
    %v251 = vsub.s32 3, %v250
    %v252 = vrot.slane %v227, %v251
    %257 = vmatprep.subr.mxu0 %v160
    %258 = vmatpush1.msra.mxu0 %v159
    %259 = vmatprep.subr.mxu0 %v156
    %260 = vmatpush1.msra.mxu0 %v155
    %261 = vmatprep.subr.mxu0 %v152
    %262 = vmatpush1.msra.mxu0 %v151
    %263 = vmatprep.subr.mxu0 %v148
    %264 = vmatpush1.msra.mxu0 %v147
    %265 = vmatprep.subr.mxu0 %v144
    %266 = vmatpush1.msra.mxu0 %v143
    %267 = vmatprep.subr.mxu0 %v140
    %268 = vmatpush1.msra.mxu0 %v139
    %269 = vmatprep.subr.mxu0 %v136
    %270 = vmatpush1.msra.mxu0 %v135
    %271 = vmatprep.subr.mxu0 %v132
    %272 = vmatpush1.msra.mxu0 %v131
    %273 = vmatprep.subr.mxu0 %v128
    %274 = vmatpush1.msra.mxu0 %v127
    %275 = vmatprep.subr.mxu0 %v124
    %276 = vmatpush1.msra.mxu0 %v123
    %277 = vmatprep.subr.mxu0 %v120
    %278 = vmatpush1.msra.mxu0 %v119
    %279 = vmatprep.subr.mxu0 %v116
    %280 = vmatpush1.msra.mxu0 %v115
    %281 = vmatprep.subr.mxu0 %v112
    %282 = vmatpush1.msra.mxu0 %v111
    %283 = vmatprep.subr.mxu0 %v108
    %284 = vmatpush1.msra.mxu0 %v107
    %285 = vmatprep.subr.mxu0 %v104
    %286 = vmatpush1.msra.mxu0 %v103
    %287 = vmatprep.subr.mxu0 %v100
    %288 = vmatpush1.msra.mxu0 %v99
    %289 = vmatprep.subr.mxu0 0.0
    %290 = vmatpush2.msra.mxu0 0.0
    %291 = vmatprep.subr.mxu0 0.0
    %292 = vmatpush2.msra.mxu0 0.0
    %293 = vmatprep.subr.mxu0 0.0
    %294 = vmatpush2.msra.mxu0 0.0
    %295 = vmatprep.subr.mxu0 0.0
    %296 = vmatpush2.msra.mxu0 0.0
    %297 = vmatprep.subr.mxu0 0.0
    %298 = vmatpush2.msra.mxu0 0.0
    %299 = vmatprep.subr.mxu0 0.0
    %300 = vmatpush2.msra.mxu0 0.0
    %301 = vmatprep.subr.mxu0 0.0
    %302 = vmatpush2.msra.mxu0 0.0
    %303 = vmatprep.subr.mxu0 0.0
    %304 = vmatpush2.msra.mxu0 0.0
    %305 = vmatprep.subr.mxu0 0.0
    %306 = vmatpush2.msra.mxu0 0.0
    %307 = vmatprep.subr.mxu0 0.0
    %308 = vmatpush2.msra.mxu0 0.0
    %309 = vmatprep.subr.mxu0 0.0
    %310 = vmatpush2.msra.mxu0 0.0
    %311 = vmatprep.subr.mxu0 0.0
    %312 = vmatpush2.msra.mxu0 0.0
    %313 = vmatprep.subr.mxu0 0.0
    %314 = vmatpush2.msra.mxu0 0.0
    %315 = vmatprep.subr.mxu0 0.0
    %316 = vmatpush2.msra.mxu0 0.0
    %317 = vmatprep.subr.mxu0 0.0
    %318 = vmatpush2.msra.mxu0 0.0
    %319 = vmatprep.subr.mxu0 0.0
    %320 = vmatpush2.msra.mxu0 0.0
    %321 = vmatprep.mubr.f32.mxu0 0.0
    %322 = vmatmul.mubr.f32.gmra.mxu0 %v228
    %v323 = vpop.f32.mrf.mxu0
    %v324 = vadd.f32 %v240, %v323
    %v325 = vpop.f32.mrf.mxu0
    %v326 = vadd.f32 %v244, %v325
    %327 = vmatprep.mubr.f32.mxu0 0.0
    %328 = vmatmul.mubr.f32.gmra.mxu0 %v229
    %v329 = vpop.f32.mrf.mxu0
    %v330 = vadd.f32 %v240, %v329
    %v331 = vpop.f32.mrf.mxu0
    %v332 = vadd.f32 %v244, %v331
    %333 = vmatprep.mubr.f32.mxu0 0.0
    %334 = vmatmul.mubr.f32.gmra.mxu0 %v230
    %v335 = vpop.f32.mrf.mxu0
    %v336 = vadd.f32 %v240, %v335
    %v337 = vpop.f32.mrf.mxu0
    %v338 = vadd.f32 %v244, %v337
    %339 = vmatprep.mubr.f32.mxu0 0.0
    %340 = vmatmul.mubr.f32.gmra.mxu0 %v231
    %v341 = vpop.f32.mrf.mxu0
    %v342 = vadd.f32 %v240, %v341
    %v343 = vpop.f32.mrf.mxu0
    %v344 = vadd.f32 %v244, %v343
    %345 = vmatprep.mubr.f32.mxu0 0.0
    %346 = vmatmul.mubr.f32.gmra.mxu0 %v232
    %v347 = vpop.f32.mrf.mxu0
    %v348 = vadd.f32 %v240, %v347
    %v349 = vpop.f32.mrf.mxu0
    %v350 = vadd.f32 %v244, %v349
    %351 = vmatprep.mubr.f32.mxu0 0.0
    %352 = vmatmul.mubr.f32.gmra.mxu0 %v233
    %v353 = vpop.f32.mrf.mxu0
    %v354 = vadd.f32 %v240, %v353
    %v355 = vpop.f32.mrf.mxu0
    %v356 = vadd.f32 %v244, %v355
    %357 = vmatprep.mubr.f32.mxu0 0.0
    %358 = vmatmul.mubr.f32.gmra.mxu0 %v234
    %v359 = vpop.f32.mrf.mxu0
    %v360 = vadd.f32 %v240, %v359
    %v361 = vpop.f32.mrf.mxu0
    %v362 = vadd.f32 %v244, %v361
    %363 = vmatprep.mubr.f32.mxu0 0.0
    %364 = vmatmul.mubr.f32.gmra.mxu0 %v235
    %v365 = vpop.f32.mrf.mxu0
    %v366 = vadd.f32 %v240, %v365
    %v367 = vpop.f32.mrf.mxu0
    %v368 = vadd.f32 %v244, %v367
    %369 = vdwg.mxu0
    %370 = vmatprep.subr.mxu0 %v162
    %371 = vmatpush1.msra.mxu0 %v161
    %372 = vmatprep.subr.mxu0 %v158
    %373 = vmatpush1.msra.mxu0 %v157
    %374 = vmatprep.subr.mxu0 %v154
    %375 = vmatpush1.msra.mxu0 %v153
    %376 = vmatprep.subr.mxu0 %v150
    %377 = vmatpush1.msra.mxu0 %v149
    %378 = vmatprep.subr.mxu0 %v146
    %379 = vmatpush1.msra.mxu0 %v145
    %380 = vmatprep.subr.mxu0 %v142
    %381 = vmatpush1.msra.mxu0 %v141
    %382 = vmatprep.subr.mxu0 %v138
    %383 = vmatpush1.msra.mxu0 %v137
    %384 = vmatprep.subr.mxu0 %v134
    %385 = vmatpush1.msra.mxu0 %v133
    %386 = vmatprep.subr.mxu0 %v130
    %387 = vmatpush1.msra.mxu0 %v129
    %388 = vmatprep.subr.mxu0 %v126
    %389 = vmatpush1.msra.mxu0 %v125
    %390 = vmatprep.subr.mxu0 %v122
    %391 = vmatpush1.msra.mxu0 %v121
    %392 = vmatprep.subr.mxu0 %v118
    %393 = vmatpush1.msra.mxu0 %v117
    %394 = vmatprep.subr.mxu0 %v114
    %395 = vmatpush1.msra.mxu0 %v113
    %396 = vmatprep.subr.mxu0 %v110
    %397 = vmatpush1.msra.mxu0 %v109
    %398 = vmatprep.subr.mxu0 %v106
    %399 = vmatpush1.msra.mxu0 %v105
    %400 = vmatprep.subr.mxu0 %v102
    %401 = vmatpush1.msra.mxu0 %v101
    %402 = vmatprep.subr.mxu0 0.0
    %403 = vmatpush2.msra.mxu0 0.0
    %404 = vmatprep.subr.mxu0 0.0
    %405 = vmatpush2.msra.mxu0 0.0
    %406 = vmatprep.subr.mxu0 0.0
    %407 = vmatpush2.msra.mxu0 0.0
    %408 = vmatprep.subr.mxu0 0.0
    %409 = vmatpush2.msra.mxu0 0.0
    %410 = vmatprep.subr.mxu0 0.0
    %411 = vmatpush2.msra.mxu0 0.0
    %412 = vmatprep.subr.mxu0 0.0
    %413 = vmatpush2.msra.mxu0 0.0
    %414 = vmatprep.subr.mxu0 0.0
    %415 = vmatpush2.msra.mxu0 0.0
    %416 = vmatprep.subr.mxu0 0.0
    %417 = vmatpush2.msra.mxu0 0.0
    %418 = vmatprep.subr.mxu0 0.0
    %419 = vmatpush2.msra.mxu0 0.0
    %420 = vmatprep.subr.mxu0 0.0
    %421 = vmatpush2.msra.mxu0 0.0
    %422 = vmatprep.subr.mxu0 0.0
    %423 = vmatpush2.msra.mxu0 0.0
    %424 = vmatprep.subr.mxu0 0.0
    %425 = vmatpush2.msra.mxu0 0.0
    %426 = vmatprep.subr.mxu0 0.0
    %427 = vmatpush2.msra.mxu0 0.0
    %428 = vmatprep.subr.mxu0 0.0
    %429 = vmatpush2.msra.mxu0 0.0
    %430 = vmatprep.subr.mxu0 0.0
    %431 = vmatpush2.msra.mxu0 0.0
    %432 = vmatprep.subr.mxu0 0.0
    %433 = vmatpush2.msra.mxu0 0.0
    %434 = vmatprep.mubr.f32.mxu0 0.0
    %435 = vmatmul.mubr.f32.gmra.mxu0 %v228
    %v436 = vpop.f32.mrf.mxu0
    %v437 = vadd.f32 %v248, %v436
    %v438 = vpop.f32.mrf.mxu0
    %v439 = vadd.f32 %v252, %v438
    %440 = vmatprep.mubr.f32.mxu0 0.0
    %441 = vmatmul.mubr.f32.gmra.mxu0 %v229
    %v442 = vpop.f32.mrf.mxu0
    %v443 = vadd.f32 %v248, %v442
    %v444 = vpop.f32.mrf.mxu0
    %v445 = vadd.f32 %v252, %v444
    %446 = vmatprep.mubr.f32.mxu0 0.0
    %447 = vmatmul.mubr.f32.gmra.mxu0 %v230
    %v448 = vpop.f32.mrf.mxu0
    %v449 = vadd.f32 %v248, %v448
    %v450 = vpop.f32.mrf.mxu0
    %v451 = vadd.f32 %v252, %v450
    %452 = vmatprep.mubr.f32.mxu0 0.0
    %453 = vmatmul.mubr.f32.gmra.mxu0 %v231
    %v454 = vpop.f32.mrf.mxu0
    %v455 = vadd.f32 %v248, %v454
    %v456 = vpop.f32.mrf.mxu0
    %v457 = vadd.f32 %v252, %v456
    %458 = vmatprep.mubr.f32.mxu0 0.0
    %459 = vmatmul.mubr.f32.gmra.mxu0 %v232
    %v460 = vpop.f32.mrf.mxu0
    %v461 = vadd.f32 %v248, %v460
    %v462 = vpop.f32.mrf.mxu0
    %v463 = vadd.f32 %v252, %v462
    %464 = vmatprep.mubr.f32.mxu0 0.0
    %465 = vmatmul.mubr.f32.gmra.mxu0 %v233
    %v466 = vpop.f32.mrf.mxu0
    %v467 = vadd.f32 %v248, %v466
    %v468 = vpop.f32.mrf.mxu0
    %v469 = vadd.f32 %v252, %v468
    %470 = vmatprep.mubr.f32.mxu0 0.0
    %471 = vmatmul.mubr.f32.gmra.mxu0 %v234
    %v472 = vpop.f32.mrf.mxu0
    %v473 = vadd.f32 %v248, %v472
    %v474 = vpop.f32.mrf.mxu0
    %v475 = vadd.f32 %v252, %v474
    %476 = vmatprep.mubr.f32.mxu0 0.0
    %477 = vmatmul.mubr.f32.gmra.mxu0 %v235
    %v478 = vpop.f32.mrf.mxu0
    %v479 = vadd.f32 %v248, %v478
    %v480 = vpop.f32.mrf.mxu0
    %v481 = vadd.f32 %v252, %v480
    %482 = vdwg.mxu0
    %483 = vst [vmem:[#allocation2] sm:$0xff] %v324
    %484 = vst [vmem:[#allocation2 + $0x8] sm:$0xff] %v326
    %485 = vst [vmem:[#allocation2 + $0x10] sm:$0xff] %v437
    %486 = vst [vmem:[#allocation2 + $0x18] sm:$0xff] %v439
    %487 = vst [vmem:[#allocation2 + $0x20] sm:$0xff] %v330
    %488 = vst [vmem:[#allocation2 + $0x28] sm:$0xff] %v332
    %489 = vst [vmem:[#allocation2 + $0x30] sm:$0xff] %v443
    %490 = vst [vmem:[#allocation2 + $0x38] sm:$0xff] %v445
    %491 = vst [vmem:[#allocation2 + $0x40] sm:$0xff] %v336
    %492 = vst [vmem:[#allocation2 + $0x48] sm:$0xff] %v338
    %493 = vst [vmem:[#allocation2 + $0x50] sm:$0xff] %v449
    %494 = vst [vmem:[#allocation2 + $0x58] sm:$0xff] %v451
    %495 = vst [vmem:[#allocation2 + $0x60] sm:$0xff] %v342
    %496 = vst [vmem:[#allocation2 + $0x68] sm:$0xff] %v344
    %497 = vst [vmem:[#allocation2 + $0x70] sm:$0xff] %v455
    %498 = vst [vmem:[#allocation2 + $0x78] sm:$0xff] %v457
    %499 = vst [vmem:[#allocation2 + $0x80] sm:$0xff] %v348
    %500 = vst [vmem:[#allocation2 + $0x88] sm:$0xff] %v350
    %501 = vst [vmem:[#allocation2 + $0x90] sm:$0xff] %v461
    %502 = vst [vmem:[#allocation2 + $0x98] sm:$0xff] %v463
    %503 = vst [vmem:[#allocation2 + $0xa0] sm:$0xff] %v354
    %504 = vst [vmem:[#allocation2 + $0xa8] sm:$0xff] %v356
    %505 = vst [vmem:[#allocation2 + $0xb0] sm:$0xff] %v467
    %506 = vst [vmem:[#allocation2 + $0xb8] sm:$0xff] %v469
    %507 = vst [vmem:[#allocation2 + $0xc0] sm:$0xff] %v360
    %508 = vst [vmem:[#allocation2 + $0xc8] sm:$0xff] %v362
    %509 = vst [vmem:[#allocation2 + $0xd0] sm:$0xff] %v473
    %510 = vst [vmem:[#allocation2 + $0xd8] sm:$0xff] %v475
    %511 = vst [vmem:[#allocation2 + $0xe0] sm:$0xff] %v366
    %512 = vst [vmem:[#allocation2 + $0xe8] sm:$0xff] %v368
    %513 = vst [vmem:[#allocation2 + $0xf0] sm:$0xff] %v479
    %514 = vst [vmem:[#allocation2 + $0xf8] sm:$0xff] %v481
    %v515 = vld [vmem:[#allocation2] sm:$0xff]
    %v516 = vld [vmem:[#allocation2 + $0x8] sm:$0xff]
    %v517 = vld [vmem:[#allocation2 + $0x10] sm:$0xff]
    %v518 = vld [vmem:[#allocation2 + $0x18] sm:$0xff]
    %519 = vmatprep.subr.mxu0 %v209
    %520 = vmatpush1.msra.mxu0 %v208
    %521 = vmatprep.subr.mxu0 %v206
    %522 = vmatpush1.msra.mxu0 %v205
    %523 = vmatprep.subr.mxu0 %v203
    %524 = vmatpush1.msra.mxu0 %v202
    %525 = vmatprep.subr.mxu0 %v200
    %526 = vmatpush1.msra.mxu0 %v199
    %527 = vmatprep.subr.mxu0 %v197
    %528 = vmatpush1.msra.mxu0 %v196
    %529 = vmatprep.subr.mxu0 %v194
    %530 = vmatpush1.msra.mxu0 %v193
    %531 = vmatprep.subr.mxu0 %v191
    %532 = vmatpush1.msra.mxu0 %v190
    %533 = vmatprep.subr.mxu0 %v188
    %534 = vmatpush1.msra.mxu0 %v187
    %535 = vmatprep.subr.mxu0 %v185
    %536 = vmatpush1.msra.mxu0 %v184
    %537 = vmatprep.subr.mxu0 %v182
    %538 = vmatpush1.msra.mxu0 %v181
    %539 = vmatprep.subr.mxu0 %v179
    %540 = vmatpush1.msra.mxu0 %v178
    %541 = vmatprep.subr.mxu0 %v176
    %542 = vmatpush1.msra.mxu0 %v175
    %543 = vmatprep.subr.mxu0 %v173
    %544 = vmatpush1.msra.mxu0 %v172
    %545 = vmatprep.subr.mxu0 %v170
    %546 = vmatpush1.msra.mxu0 %v169
    %547 = vmatprep.subr.mxu0 %v167
    %548 = vmatpush1.msra.mxu0 %v166
    %549 = vmatprep.subr.mxu0 %v164
    %550 = vmatpush1.msra.mxu0 %v163
    %551 = vmatprep.subr.mxu0 0.0
    %552 = vmatpush2.msra.mxu0 0.0
    %553 = vmatprep.subr.mxu0 0.0
    %554 = vmatpush2.msra.mxu0 0.0
    %555 = vmatprep.subr.mxu0 0.0
    %556 = vmatpush2.msra.mxu0 0.0
    %557 = vmatprep.subr.mxu0 0.0
    %558 = vmatpush2.msra.mxu0 0.0
    %559 = vmatprep.subr.mxu0 0.0
    %560 = vmatpush2.msra.mxu0 0.0
    %561 = vmatprep.subr.mxu0 0.0
    %562 = vmatpush2.msra.mxu0 0.0
    %563 = vmatprep.subr.mxu0 0.0
    %564 = vmatpush2.msra.mxu0 0.0
    %565 = vmatprep.subr.mxu0 0.0
    %566 = vmatpush2.msra.mxu0 0.0
    %567 = vmatprep.subr.mxu0 0.0
    %568 = vmatpush2.msra.mxu0 0.0
    %569 = vmatprep.subr.mxu0 0.0
    %570 = vmatpush2.msra.mxu0 0.0
    %571 = vmatprep.subr.mxu0 0.0
    %572 = vmatpush2.msra.mxu0 0.0
    %573 = vmatprep.subr.mxu0 0.0
    %574 = vmatpush2.msra.mxu0 0.0
    %575 = vmatprep.subr.mxu0 0.0
    %576 = vmatpush2.msra.mxu0 0.0
    %577 = vmatprep.subr.mxu0 0.0
    %578 = vmatpush2.msra.mxu0 0.0
    %579 = vmatprep.subr.mxu0 0.0
    %580 = vmatpush2.msra.mxu0 0.0
    %581 = vmatprep.subr.mxu0 0.0
    %582 = vmatpush2.msra.mxu0 0.0
    %583 = vmatprep.mubr.f32.mxu0 0.0
    %584 = vmatmul.mubr.f32.gmra.mxu0 0.0
    %v585 = vpop.f32.mrf.mxu0
    %v586 = vadd.f32 0.0, %v585
    %v587 = vpop.f32.mrf.mxu0
    %v588 = vadd.f32 0.0, %v587
    %589 = vdwg.mxu0
    %590 = vmatprep.subr.mxu0 0.0
    %591 = vmatpush1.msra.mxu0 %v210
    %592 = vmatprep.subr.mxu0 0.0
    %593 = vmatpush1.msra.mxu0 %v207
    %594 = vmatprep.subr.mxu0 0.0
    %595 = vmatpush1.msra.mxu0 %v204
    %596 = vmatprep.subr.mxu0 0.0
    %597 = vmatpush1.msra.mxu0 %v201
    %598 = vmatprep.subr.mxu0 0.0
    %599 = vmatpush1.msra.mxu0 %v198
    %600 = vmatprep.subr.mxu0 0.0
    %601 = vmatpush1.msra.mxu0 %v195
    %602 = vmatprep.subr.mxu0 0.0
    %603 = vmatpush1.msra.mxu0 %v192
    %604 = vmatprep.subr.mxu0 0.0
    %605 = vmatpush1.msra.mxu0 %v189
    %606 = vmatprep.subr.mxu0 0.0
    %607 = vmatpush1.msra.mxu0 %v186
    %608 = vmatprep.subr.mxu0 0.0
    %609 = vmatpush1.msra.mxu0 %v183
    %610 = vmatprep.subr.mxu0 0.0
    %611 = vmatpush1.msra.mxu0 %v180
    %612 = vmatprep.subr.mxu0 0.0
    %613 = vmatpush1.msra.mxu0 %v177
    %614 = vmatprep.subr.mxu0 0.0
    %615 = vmatpush1.msra.mxu0 %v174
    %616 = vmatprep.subr.mxu0 0.0
    %617 = vmatpush1.msra.mxu0 %v171
    %618 = vmatprep.subr.mxu0 0.0
    %619 = vmatpush1.msra.mxu0 %v168
    %620 = vmatprep.subr.mxu0 0.0
    %621 = vmatpush1.msra.mxu0 %v165
    %622 = vmatprep.subr.mxu0 0.0
    %623 = vmatpush2.msra.mxu0 0.0
    %624 = vmatprep.subr.mxu0 0.0
    %625 = vmatpush2.msra.mxu0 0.0
    %626 = vmatprep.subr.mxu0 0.0
    %627 = vmatpush2.msra.mxu0 0.0
    %628 = vmatprep.subr.mxu0 0.0
    %629 = vmatpush2.msra.mxu0 0.0
    %630 = vmatprep.subr.mxu0 0.0
    %631 = vmatpush2.msra.mxu0 0.0
    %632 = vmatprep.subr.mxu0 0.0
    %633 = vmatpush2.msra.mxu0 0.0
    %634 = vmatprep.subr.mxu0 0.0
    %635 = vmatpush2.msra.mxu0 0.0
    %636 = vmatprep.subr.mxu0 0.0
    %637 = vmatpush2.msra.mxu0 0.0
    %638 = vmatprep.subr.mxu0 0.0
    %639 = vmatpush2.msra.mxu0 0.0
    %640 = vmatprep.subr.mxu0 0.0
    %641 = vmatpush2.msra.mxu0 0.0
    %642 = vmatprep.subr.mxu0 0.0
    %643 = vmatpush2.msra.mxu0 0.0
    %644 = vmatprep.subr.mxu0 0.0
    %645 = vmatpush2.msra.mxu0 0.0
    %646 = vmatprep.subr.mxu0 0.0
    %647 = vmatpush2.msra.mxu0 0.0
    %648 = vmatprep.subr.mxu0 0.0
    %649 = vmatpush2.msra.mxu0 0.0
    %650 = vmatprep.subr.mxu0 0.0
    %651 = vmatpush2.msra.mxu0 0.0
    %652 = vmatprep.subr.mxu0 0.0
    %653 = vmatpush2.msra.mxu0 0.0
    %654 = vmatprep.mubr.f32.mxu0 0.0
    %655 = vmatmul.mubr.f32.gmra.mxu0 0.0
    %v656 = vpop.f32.mrf.mxu0
    %v657 = vadd.f32 0.0, %v656
    %v658 = vpop.f32.mrf.mxu0
    %659 = vdwg.mxu0
    %v660 = vadd.f32 %v515, %v586
    %v661 = vadd.f32 %v516, %v588
    %v662 = vadd.f32 %v517, %v657
    %663 = vmatprep.subr.mxu0 0.0
    %664 = vmatpush1.msra.mxu0 %v226
    %665 = vmatprep.subr.mxu0 0.0
    %666 = vmatpush1.msra.mxu0 %v225
    %667 = vmatprep.subr.mxu0 0.0
    %668 = vmatpush1.msra.mxu0 %v224
    %669 = vmatprep.subr.mxu0 0.0
    %670 = vmatpush1.msra.mxu0 %v223
    %671 = vmatprep.subr.mxu0 0.0
    %672 = vmatpush1.msra.mxu0 %v222
    %673 = vmatprep.subr.mxu0 0.0
    %674 = vmatpush1.msra.mxu0 %v221
    %675 = vmatprep.subr.mxu0 0.0
    %676 = vmatpush1.msra.mxu0 %v220
    %677 = vmatprep.subr.mxu0 0.0
    %678 = vmatpush1.msra.mxu0 %v219
    %679 = vmatprep.subr.mxu0 0.0
    %680 = vmatpush1.msra.mxu0 %v218
    %681 = vmatprep.subr.mxu0 0.0
    %682 = vmatpush1.msra.mxu0 %v217
    %683 = vmatprep.subr.mxu0 0.0
    %684 = vmatpush1.msra.mxu0 %v216
    %685 = vmatprep.subr.mxu0 0.0
    %686 = vmatpush1.msra.mxu0 %v215
    %687 = vmatprep.subr.mxu0 0.0
    %688 = vmatpush1.msra.mxu0 %v214
    %689 = vmatprep.subr.mxu0 0.0
    %690 = vmatpush1.msra.mxu0 %v213
    %691 = vmatprep.subr.mxu0 0.0
    %692 = vmatpush1.msra.mxu0 %v212
    %693 = vmatprep.subr.mxu0 0.0
    %694 = vmatpush1.msra.mxu0 %v211
    %695 = vmatprep.subr.mxu0 0.0
    %696 = vmatpush2.msra.mxu0 0.0
    %697 = vmatprep.subr.mxu0 0.0
    %698 = vmatpush2.msra.mxu0 0.0
    %699 = vmatprep.subr.mxu0 0.0
    %700 = vmatpush2.msra.mxu0 0.0
    %701 = vmatprep.subr.mxu0 0.0
    %702 = vmatpush2.msra.mxu0 0.0
    %703 = vmatprep.subr.mxu0 0.0
    %704 = vmatpush2.msra.mxu0 0.0
    %705 = vmatprep.subr.mxu0 0.0
    %706 = vmatpush2.msra.mxu0 0.0
    %707 = vmatprep.subr.mxu0 0.0
    %708 = vmatpush2.msra.mxu0 0.0
    %709 = vmatprep.subr.mxu0 0.0
    %710 = vmatpush2.msra.mxu0 0.0
    %711 = vmatprep.subr.mxu0 0.0
    %712 = vmatpush2.msra.mxu0 0.0
    %713 = vmatprep.subr.mxu0 0.0
    %714 = vmatpush2.msra.mxu0 0.0
    %715 = vmatprep.subr.mxu0 0.0
    %716 = vmatpush2.msra.mxu0 0.0
    %717 = vmatprep.subr.mxu0 0.0
    %718 = vmatpush2.msra.mxu0 0.0
    %719 = vmatprep.subr.mxu0 0.0
    %720 = vmatpush2.msra.mxu0 0.0
    %721 = vmatprep.subr.mxu0 0.0
    %722 = vmatpush2.msra.mxu0 0.0
    %723 = vmatprep.subr.mxu0 0.0
    %724 = vmatpush2.msra.mxu0 0.0
    %725 = vmatprep.subr.mxu0 0.0
    %726 = vmatpush2.msra.mxu0 0.0
    %727 = vmatprep.mubr.f32.mxu0 0.0
    %728 = vmatmul.mubr.f32.gmra.mxu0 0.0
    %v729 = vpop.f32.mrf.mxu0
    %v730 = vadd.f32 0.0, %v729
    %v731 = vpop.f32.mrf.mxu0
    %732 = vdwg.mxu0
    %v733 = vadd.f32 %v518, %v730
    %v734 = vmul.f32 %v660, 0.5
    %v735 = vmul.f32 %v661, 0.5
    %v736 = vmul.f32 %v662, 0.5
    %v737 = vtanh.pop %v734
    %v738 = vtanh.pop %v735
    %v739 = vtanh.pop %v736
    %v740 = vmul.f32 %v737, 0.5
    %v741 = vmul.f32 %v738, 0.5
    %v742 = vmul.f32 %v739, 0.5
    %v743 = vadd.f32 %v740, 0.5
    %v744 = vadd.f32 %v741, 0.5
    %v745 = vadd.f32 %v742, 0.5
    %v746 = vtanh.pop %v733
    %v747 = vmul.f32 %v744, 0.0
    %v748 = vmul.f32 %v743, %v746
    %v749 = vadd.f32 %v747, %v748
    %v750 = vtanh.pop %v749
    %v751 = vmul.f32 %v745, %v750
    %752 = vst [vmem:[#allocation3] sm:$0xff] %v751
    %s753 = scalar_lea.vmem [#allocation2], 32
    %v754 = vld [vmem:[%s753] sm:$0xff]
    %v755 = vld [vmem:[%s753 + $0x8] sm:$0xff]
    %v756 = vld [vmem:[%s753 + $0x10] sm:$0xff]
    %v757 = vld [vmem:[%s753 + $0x18] sm:$0xff]
    %758 = vmatprep.subr.mxu0 %v209
    %759 = vmatpush1.msra.mxu0 %v208
    %760 = vmatprep.subr.mxu0 %v206
    %761 = vmatpush1.msra.mxu0 %v205
    %762 = vmatprep.subr.mxu0 %v203
    %763 = vmatpush1.msra.mxu0 %v202
    %764 = vmatprep.subr.mxu0 %v200
    %765 = vmatpush1.msra.mxu0 %v199
    %766 = vmatprep.subr.mxu0 %v197
    %767 = vmatpush1.msra.mxu0 %v196
    %768 = vmatprep.subr.mxu0 %v194
    %769 = vmatpush1.msra.mxu0 %v193
    %770 = vmatprep.subr.mxu0 %v191
    %771 = vmatpush1.msra.mxu0 %v190
    %772 = vmatprep.subr.mxu0 %v188
    %773 = vmatpush1.msra.mxu0 %v187
    %774 = vmatprep.subr.mxu0 %v185
    %775 = vmatpush1.msra.mxu0 %v184
    %776 = vmatprep.subr.mxu0 %v182
    %777 = vmatpush1.msra.mxu0 %v181
    %778 = vmatprep.subr.mxu0 %v179
    %779 = vmatpush1.msra.mxu0 %v178
    %780 = vmatprep.subr.mxu0 %v176
    %781 = vmatpush1.msra.mxu0 %v175
    %782 = vmatprep.subr.mxu0 %v173
    %783 = vmatpush1.msra.mxu0 %v172
    %784 = vmatprep.subr.mxu0 %v170
    %785 = vmatpush1.msra.mxu0 %v169
    %786 = vmatprep.subr.mxu0 %v167
    %787 = vmatpush1.msra.mxu0 %v166
    %788 = vmatprep.subr.mxu0 %v164
    %789 = vmatpush1.msra.mxu0 %v163
    %790 = vmatprep.subr.mxu0 0.0
    %791 = vmatpush2.msra.mxu0 0.0
    %792 = vmatprep.subr.mxu0 0.0
    %793 = vmatpush2.msra.mxu0 0.0
    %794 = vmatprep.subr.mxu0 0.0
    %795 = vmatpush2.msra.mxu0 0.0
    %796 = vmatprep.subr.mxu0 0.0
    %797 = vmatpush2.msra.mxu0 0.0
    %798 = vmatprep.subr.mxu0 0.0
    %799 = vmatpush2.msra.mxu0 0.0
    %800 = vmatprep.subr.mxu0 0.0
    %801 = vmatpush2.msra.mxu0 0.0
    %802 = vmatprep.subr.mxu0 0.0
    %803 = vmatpush2.msra.mxu0 0.0
    %804 = vmatprep.subr.mxu0 0.0
    %805 = vmatpush2.msra.mxu0 0.0
    %806 = vmatprep.subr.mxu0 0.0
    %807 = vmatpush2.msra.mxu0 0.0
    %808 = vmatprep.subr.mxu0 0.0
    %809 = vmatpush2.msra.mxu0 0.0
    %810 = vmatprep.subr.mxu0 0.0
    %811 = vmatpush2.msra.mxu0 0.0
    %812 = vmatprep.subr.mxu0 0.0
    %813 = vmatpush2.msra.mxu0 0.0
    %814 = vmatprep.subr.mxu0 0.0
    %815 = vmatpush2.msra.mxu0 0.0
    %816 = vmatprep.subr.mxu0 0.0
    %817 = vmatpush2.msra.mxu0 0.0
    %818 = vmatprep.subr.mxu0 0.0
    %819 = vmatpush2.msra.mxu0 0.0
    %820 = vmatprep.subr.mxu0 0.0
    %821 = vmatpush2.msra.mxu0 0.0
    %822 = vmatprep.mubr.f32.mxu0 0.0
    %823 = vmatmul.mubr.f32.gmra.mxu0 %v751
    %v824 = vpop.f32.mrf.mxu0
    %v825 = vadd.f32 0.0, %v824
    %v826 = vpop.f32.mrf.mxu0
    %v827 = vadd.f32 0.0, %v826
    %828 = vdwg.mxu0
    %829 = vmatprep.subr.mxu0 0.0
    %830 = vmatpush1.msra.mxu0 %v210
    %831 = vmatprep.subr.mxu0 0.0
    %832 = vmatpush1.msra.mxu0 %v207
    %833 = vmatprep.subr.mxu0 0.0
    %834 = vmatpush1.msra.mxu0 %v204
    %835 = vmatprep.subr.mxu0 0.0
    %836 = vmatpush1.msra.mxu0 %v201
    %837 = vmatprep.subr.mxu0 0.0
    %838 = vmatpush1.msra.mxu0 %v198
    %839 = vmatprep.subr.mxu0 0.0
    %840 = vmatpush1.msra.mxu0 %v195
    %841 = vmatprep.subr.mxu0 0.0
    %842 = vmatpush1.msra.mxu0 %v192
    %843 = vmatprep.subr.mxu0 0.0
    %844 = vmatpush1.msra.mxu0 %v189
    %845 = vmatprep.subr.mxu0 0.0
    %846 = vmatpush1.msra.mxu0 %v186
    %847 = vmatprep.subr.mxu0 0.0
    %848 = vmatpush1.msra.mxu0 %v183
    %849 = vmatprep.subr.mxu0 0.0
    %850 = vmatpush1.msra.mxu0 %v180
    %851 = vmatprep.subr.mxu0 0.0
    %852 = vmatpush1.msra.mxu0 %v177
    %853 = vmatprep.subr.mxu0 0.0
    %854 = vmatpush1.msra.mxu0 %v174
    %855 = vmatprep.subr.mxu0 0.0
    %856 = vmatpush1.msra.mxu0 %v171
    %857 = vmatprep.subr.mxu0 0.0
    %858 = vmatpush1.msra.mxu0 %v168
    %859 = vmatprep.subr.mxu0 0.0
    %860 = vmatpush1.msra.mxu0 %v165
    %861 = vmatprep.subr.mxu0 0.0
    %862 = vmatpush2.msra.mxu0 0.0
    %863 = vmatprep.subr.mxu0 0.0
    %864 = vmatpush2.msra.mxu0 0.0
    %865 = vmatprep.subr.mxu0 0.0
    %866 = vmatpush2.msra.mxu0 0.0
    %867 = vmatprep.subr.mxu0 0.0
    %868 = vmatpush2.msra.mxu0 0.0
    %869 = vmatprep.subr.mxu0 0.0
    %870 = vmatpush2.msra.mxu0 0.0
    %871 = vmatprep.subr.mxu0 0.0
    %872 = vmatpush2.msra.mxu0 0.0
    %873 = vmatprep.subr.mxu0 0.0
    %874 = vmatpush2.msra.mxu0 0.0
    %875 = vmatprep.subr.mxu0 0.0
    %876 = vmatpush2.msra.mxu0 0.0
    %877 = vmatprep.subr.mxu0 0.0
    %878 = vmatpush2.msra.mxu0 0.0
    %879 = vmatprep.subr.mxu0 0.0
    %880 = vmatpush2.msra.mxu0 0.0
    %881 = vmatprep.subr.mxu0 0.0
    %882 = vmatpush2.msra.mxu0 0.0
    %883 = vmatprep.subr.mxu0 0.0
    %884 = vmatpush2.msra.mxu0 0.0
    %885 = vmatprep.subr.mxu0 0.0
    %886 = vmatpush2.msra.mxu0 0.0
    %887 = vmatprep.subr.mxu0 0.0
    %888 = vmatpush2.msra.mxu0 0.0
    %889 = vmatprep.subr.mxu0 0.0
    %890 = vmatpush2.msra.mxu0 0.0
    %891 = vmatprep.subr.mxu0 0.0
    %892 = vmatpush2.msra.mxu0 0.0
    %893 = vmatprep.mubr.f32.mxu0 0.0
    %894 = vmatmul.mubr.f32.gmra.mxu0 %v751
    %v895 = vpop.f32.mrf.mxu0
    %v896 = vadd.f32 0.0, %v895
    %v897 = vpop.f32.mrf.mxu0
    %898 = vdwg.mxu0
    %v899 = vadd.f32 %v754, %v825
    %v900 = vadd.f32 %v755, %v827
    %v901 = vadd.f32 %v756, %v896
    %902 = vmatprep.subr.mxu0 0.0
    %903 = vmatpush1.msra.mxu0 %v226
    %904 = vmatprep.subr.mxu0 0.0
    %905 = vmatpush1.msra.mxu0 %v225
    %906 = vmatprep.subr.mxu0 0.0
    %907 = vmatpush1.msra.mxu0 %v224
    %908 = vmatprep.subr.mxu0 0.0
    %909 = vmatpush1.msra.mxu0 %v223
    %910 = vmatprep.subr.mxu0 0.0
    %911 = vmatpush1.msra.mxu0 %v222
    %912 = vmatprep.subr.mxu0 0.0
    %913 = vmatpush1.msra.mxu0 %v221
    %914 = vmatprep.subr.mxu0 0.0
    %915 = vmatpush1.msra.mxu0 %v220
    %916 = vmatprep.subr.mxu0 0.0
    %917 = vmatpush1.msra.mxu0 %v219
    %918 = vmatprep.subr.mxu0 0.0
    %919 = vmatpush1.msra.mxu0 %v218
    %920 = vmatprep.subr.mxu0 0.0
    %921 = vmatpush1.msra.mxu0 %v217
    %922 = vmatprep.subr.mxu0 0.0
    %923 = vmatpush1.msra.mxu0 %v216
    %924 = vmatprep.subr.mxu0 0.0
    %925 = vmatpush1.msra.mxu0 %v215
    %926 = vmatprep.subr.mxu0 0.0
    %927 = vmatpush1.msra.mxu0 %v214
    %928 = vmatprep.subr.mxu0 0.0
    %929 = vmatpush1.msra.mxu0 %v213
    %930 = vmatprep.subr.mxu0 0.0
    %931 = vmatpush1.msra.mxu0 %v212
    %932 = vmatprep.subr.mxu0 0.0
    %933 = vmatpush1.msra.mxu0 %v211
    %934 = vmatprep.subr.mxu0 0.0
    %935 = vmatpush2.msra.mxu0 0.0
    %936 = vmatprep.subr.mxu0 0.0
    %937 = vmatpush2.msra.mxu0 0.0
    %938 = vmatprep.subr.mxu0 0.0
    %939 = vmatpush2.msra.mxu0 0.0
    %940 = vmatprep.subr.mxu0 0.0
    %941 = vmatpush2.msra.mxu0 0.0
    %942 = vmatprep.subr.mxu0 0.0
    %943 = vmatpush2.msra.mxu0 0.0
    %944 = vmatprep.subr.mxu0 0.0
    %945 = vmatpush2.msra.mxu0 0.0
    %946 = vmatprep.subr.mxu0 0.0
    %947 = vmatpush2.msra.mxu0 0.0
    %948 = vmatprep.subr.mxu0 0.0
    %949 = vmatpush2.msra.mxu0 0.0
    %950 = vmatprep.subr.mxu0 0.0
    %951 = vmatpush2.msra.mxu0 0.0
    %952 = vmatprep.subr.mxu0 0.0
    %953 = vmatpush2.msra.mxu0 0.0
    %954 = vmatprep.subr.mxu0 0.0
    %955 = vmatpush2.msra.mxu0 0.0
    %956 = vmatprep.subr.mxu0 0.0
    %957 = vmatpush2.msra.mxu0 0.0
    %958 = vmatprep.subr.mxu0 0.0
    %959 = vmatpush2.msra.mxu0 0.0
    %960 = vmatprep.subr.mxu0 0.0
    %961 = vmatpush2.msra.mxu0 0.0
    %962 = vmatprep.subr.mxu0 0.0
    %963 = vmatpush2.msra.mxu0 0.0
    %964 = vmatprep.subr.mxu0 0.0
    %965 = vmatpush2.msra.mxu0 0.0
    %966 = vmatprep.mubr.f32.mxu0 0.0
    %967 = vmatmul.mubr.f32.gmra.mxu0 %v751
    %v968 = vpop.f32.mrf.mxu0
    %v969 = vadd.f32 0.0, %v968
    %v970 = vpop.f32.mrf.mxu0
    %971 = vdwg.mxu0
    %v972 = vadd.f32 %v757, %v969
    %v973 = vmul.f32 %v899, 0.5
    %v974 = vmul.f32 %v900, 0.5
    %v975 = vmul.f32 %v901, 0.5
    %v976 = vtanh.pop %v973
    %v977 = vtanh.pop %v974
    %v978 = vtanh.pop %v975
    %v979 = vmul.f32 %v976, 0.5
    %v980 = vmul.f32 %v977, 0.5
    %v981 = vmul.f32 %v978, 0.5
    %v982 = vadd.f32 %v979, 0.5
    %v983 = vadd.f32 %v980, 0.5
    %v984 = vadd.f32 %v981, 0.5
    %v985 = vtanh.pop %v972
    %v986 = vmul.f32 %v983, %v749
    %v987 = vmul.f32 %v982, %v985
    %v988 = vadd.f32 %v986, %v987
    %v989 = vtanh.pop %v988
    %v990 = vmul.f32 %v984, %v989
    %s991 = scalar_lea.vmem [#allocation3], 8
    %992 = vst [vmem:[%s991] sm:$0xff] %v990
    %s993 = scalar_lea.vmem [#allocation2], 64
    %v994 = vld [vmem:[%s993] sm:$0xff]
    %v995 = vld [vmem:[%s993 + $0x8] sm:$0xff]
    %v996 = vld [vmem:[%s993 + $0x10] sm:$0xff]
    %v997 = vld [vmem:[%s993 + $0x18] sm:$0xff]
    %998 = vmatprep.subr.mxu0 %v209
    %999 = vmatpush1.msra.mxu0 %v208
    %1000 = vmatprep.subr.mxu0 %v206
    %1001 = vmatpush1.msra.mxu0 %v205
    %1002 = vmatprep.subr.mxu0 %v203
    %1003 = vmatpush1.msra.mxu0 %v202
    %1004 = vmatprep.subr.mxu0 %v200
    %1005 = vmatpush1.msra.mxu0 %v199
    %1006 = vmatprep.subr.mxu0 %v197
    %1007 = vmatpush1.msra.mxu0 %v196
    %1008 = vmatprep.subr.mxu0 %v194
    %1009 = vmatpush1.msra.mxu0 %v193
    %1010 = vmatprep.subr.mxu0 %v191
    %1011 = vmatpush1.msra.mxu0 %v190
    %1012 = vmatprep.subr.mxu0 %v188
    %1013 = vmatpush1.msra.mxu0 %v187
    %1014 = vmatprep.subr.mxu0 %v185
    %1015 = vmatpush1.msra.mxu0 %v184
    %1016 = vmatprep.subr.mxu0 %v182
    %1017 = vmatpush1.msra.mxu0 %v181
    %1018 = vmatprep.subr.mxu0 %v179
    %1019 = vmatpush1.msra.mxu0 %v178
    %1020 = vmatprep.subr.mxu0 %v176
    %1021 = vmatpush1.msra.mxu0 %v175
    %1022 = vmatprep.subr.mxu0 %v173
    %1023 = vmatpush1.msra.mxu0 %v172
    %1024 = vmatprep.subr.mxu0 %v170
    %1025 = vmatpush1.msra.mxu0 %v169
    %1026 = vmatprep.subr.mxu0 %v167
    %1027 = vmatpush1.msra.mxu0 %v166
    %1028 = vmatprep.subr.mxu0 %v164
    %1029 = vmatpush1.msra.mxu0 %v163
    %1030 = vmatprep.subr.mxu0 0.0
    %1031 = vmatpush2.msra.mxu0 0.0
    %1032 = vmatprep.subr.mxu0 0.0
    %1033 = vmatpush2.msra.mxu0 0.0
    %1034 = vmatprep.subr.mxu0 0.0
    %1035 = vmatpush2.msra.mxu0 0.0
    %1036 = vmatprep.subr.mxu0 0.0
    %1037 = vmatpush2.msra.mxu0 0.0
    %1038 = vmatprep.subr.mxu0 0.0
    %1039 = vmatpush2.msra.mxu0 0.0
    %1040 = vmatprep.subr.mxu0 0.0
    %1041 = vmatpush2.msra.mxu0 0.0
    %1042 = vmatprep.subr.mxu0 0.0
    %1043 = vmatpush2.msra.mxu0 0.0
    %1044 = vmatprep.subr.mxu0 0.0
    %1045 = vmatpush2.msra.mxu0 0.0
    %1046 = vmatprep.subr.mxu0 0.0
    %1047 = vmatpush2.msra.mxu0 0.0
    %1048 = vmatprep.subr.mxu0 0.0
    %1049 = vmatpush2.msra.mxu0 0.0
    %1050 = vmatprep.subr.mxu0 0.0
    %1051 = vmatpush2.msra.mxu0 0.0
    %1052 = vmatprep.subr.mxu0 0.0
    %1053 = vmatpush2.msra.mxu0 0.0
    %1054 = vmatprep.subr.mxu0 0.0
    %1055 = vmatpush2.msra.mxu0 0.0
    %1056 = vmatprep.subr.mxu0 0.0
    %1057 = vmatpush2.msra.mxu0 0.0
    %1058 = vmatprep.subr.mxu0 0.0
    %1059 = vmatpush2.msra.mxu0 0.0
    %1060 = vmatprep.subr.mxu0 0.0
    %1061 = vmatpush2.msra.mxu0 0.0
    %1062 = vmatprep.mubr.f32.mxu0 0.0
    %1063 = vmatmul.mubr.f32.gmra.mxu0 %v990
    %v1064 = vpop.f32.mrf.mxu0
    %v1065 = vadd.f32 0.0, %v1064
    %v1066 = vpop.f32.mrf.mxu0
    %v1067 = vadd.f32 0.0, %v1066
    %1068 = vdwg.mxu0
    %1069 = vmatprep.subr.mxu0 0.0
    %1070 = vmatpush1.msra.mxu0 %v210
    %1071 = vmatprep.subr.mxu0 0.0
    %1072 = vmatpush1.msra.mxu0 %v207
    %1073 = vmatprep.subr.mxu0 0.0
    %1074 = vmatpush1.msra.mxu0 %v204
    %1075 = vmatprep.subr.mxu0 0.0
    %1076 = vmatpush1.msra.mxu0 %v201
    %1077 = vmatprep.subr.mxu0 0.0
    %1078 = vmatpush1.msra.mxu0 %v198
    %1079 = vmatprep.subr.mxu0 0.0
    %1080 = vmatpush1.msra.mxu0 %v195
    %1081 = vmatprep.subr.mxu0 0.0
    %1082 = vmatpush1.msra.mxu0 %v192
    %1083 = vmatprep.subr.mxu0 0.0
    %1084 = vmatpush1.msra.mxu0 %v189
    %1085 = vmatprep.subr.mxu0 0.0
    %1086 = vmatpush1.msra.mxu0 %v186
    %1087 = vmatprep.subr.mxu0 0.0
    %1088 = vmatpush1.msra.mxu0 %v183
    %1089 = vmatprep.subr.mxu0 0.0
    %1090 = vmatpush1.msra.mxu0 %v180
    %1091 = vmatprep.subr.mxu0 0.0
    %1092 = vmatpush1.msra.mxu0 %v177
    %1093 = vmatprep.subr.mxu0 0.0
    %1094 = vmatpush1.msra.mxu0 %v174
    %1095 = vmatprep.subr.mxu0 0.0
    %1096 = vmatpush1.msra.mxu0 %v171
    %1097 = vmatprep.subr.mxu0 0.0
    %1098 = vmatpush1.msra.mxu0 %v168
    %1099 = vmatprep.subr.mxu0 0.0
    %1100 = vmatpush1.msra.mxu0 %v165
    %1101 = vmatprep.subr.mxu0 0.0
    %1102 = vmatpush2.msra.mxu0 0.0
    %1103 = vmatprep.subr.mxu0 0.0
    %1104 = vmatpush2.msra.mxu0 0.0
    %1105 = vmatprep.subr.mxu0 0.0
    %1106 = vmatpush2.msra.mxu0 0.0
    %1107 = vmatprep.subr.mxu0 0.0
    %1108 = vmatpush2.msra.mxu0 0.0
    %1109 = vmatprep.subr.mxu0 0.0
    %1110 = vmatpush2.msra.mxu0 0.0
    %1111 = vmatprep.subr.mxu0 0.0
    %1112 = vmatpush2.msra.mxu0 0.0
    %1113 = vmatprep.subr.mxu0 0.0
    %1114 = vmatpush2.msra.mxu0 0.0
    %1115 = vmatprep.subr.mxu0 0.0
    %1116 = vmatpush2.msra.mxu0 0.0
    %1117 = vmatprep.subr.mxu0 0.0
    %1118 = vmatpush2.msra.mxu0 0.0
    %1119 = vmatprep.subr.mxu0 0.0
    %1120 = vmatpush2.msra.mxu0 0.0
    %1121 = vmatprep.subr.mxu0 0.0
    %1122 = vmatpush2.msra.mxu0 0.0
    %1123 = vmatprep.subr.mxu0 0.0
    %1124 = vmatpush2.msra.mxu0 0.0
    %1125 = vmatprep.subr.mxu0 0.0
    %1126 = vmatpush2.msra.mxu0 0.0
    %1127 = vmatprep.subr.mxu0 0.0
    %1128 = vmatpush2.msra.mxu0 0.0
    %1129 = vmatprep.subr.mxu0 0.0
    %1130 = vmatpush2.msra.mxu0 0.0
    %1131 = vmatprep.subr.mxu0 0.0
    %1132 = vmatpush2.msra.mxu0 0.0
    %1133 = vmatprep.mubr.f32.mxu0 0.0
    %1134 = vmatmul.mubr.f32.gmra.mxu0 %v990
    %v1135 = vpop.f32.mrf.mxu0
    %v1136 = vadd.f32 0.0, %v1135
    %v1137 = vpop.f32.mrf.mxu0
    %1138 = vdwg.mxu0
    %v1139 = vadd.f32 %v994, %v1065
    %v1140 = vadd.f32 %v995, %v1067
    %v1141 = vadd.f32 %v996, %v1136
    %1142 = vmatprep.subr.mxu0 0.0
    %1143 = vmatpush1.msra.mxu0 %v226
    %1144 = vmatprep.subr.mxu0 0.0
    %1145 = vmatpush1.msra.mxu0 %v225
    %1146 = vmatprep.subr.mxu0 0.0
    %1147 = vmatpush1.msra.mxu0 %v224
    %1148 = vmatprep.subr.mxu0 0.0
    %1149 = vmatpush1.msra.mxu0 %v223
    %1150 = vmatprep.subr.mxu0 0.0
    %1151 = vmatpush1.msra.mxu0 %v222
    %1152 = vmatprep.subr.mxu0 0.0
    %1153 = vmatpush1.msra.mxu0 %v221
    %1154 = vmatprep.subr.mxu0 0.0
    %1155 = vmatpush1.msra.mxu0 %v220
    %1156 = vmatprep.subr.mxu0 0.0
    %1157 = vmatpush1.msra.mxu0 %v219
    %1158 = vmatprep.subr.mxu0 0.0
    %1159 = vmatpush1.msra.mxu0 %v218
    %1160 = vmatprep.subr.mxu0 0.0
    %1161 = vmatpush1.msra.mxu0 %v217
    %1162 = vmatprep.subr.mxu0 0.0
    %1163 = vmatpush1.msra.mxu0 %v216
    %1164 = vmatprep.subr.mxu0 0.0
    %1165 = vmatpush1.msra.mxu0 %v215
    %1166 = vmatprep.subr.mxu0 0.0
    %1167 = vmatpush1.msra.mxu0 %v214
    %1168 = vmatprep.subr.mxu0 0.0
    %1169 = vmatpush1.msra.mxu0 %v213
    %1170 = vmatprep.subr.mxu0 0.0
    %1171 = vmatpush1.msra.mxu0 %v212
    %1172 = vmatprep.subr.mxu0 0.0
    %1173 = vmatpush1.msra.mxu0 %v211
    %1174 = vmatprep.subr.mxu0 0.0
    %1175 = vmatpush2.msra.mxu0 0.0
    %1176 = vmatprep.subr.mxu0 0.0
    %1177 = vmatpush2.msra.mxu0 0.0
    %1178 = vmatprep.subr.mxu0 0.0
    %1179 = vmatpush2.msra.mxu0 0.0
    %1180 = vmatprep.subr.mxu0 0.0
    %1181 = vmatpush2.msra.mxu0 0.0
    %1182 = vmatprep.subr.mxu0 0.0
    %1183 = vmatpush2.msra.mxu0 0.0
    %1184 = vmatprep.subr.mxu0 0.0
    %1185 = vmatpush2.msra.mxu0 0.0
    %1186 = vmatprep.subr.mxu0 0.0
    %1187 = vmatpush2.msra.mxu0 0.0
    %1188 = vmatprep.subr.mxu0 0.0
    %1189 = vmatpush2.msra.mxu0 0.0
    %1190 = vmatprep.subr.mxu0 0.0
    %1191 = vmatpush2.msra.mxu0 0.0
    %1192 = vmatprep.subr.mxu0 0.0
    %1193 = vmatpush2.msra.mxu0 0.0
    %1194 = vmatprep.subr.mxu0 0.0
    %1195 = vmatpush2.msra.mxu0 0.0
    %1196 = vmatprep.subr.mxu0 0.0
    %1197 = vmatpush2.msra.mxu0 0.0
    %1198 = vmatprep.subr.mxu0 0.0
    %1199 = vmatpush2.msra.mxu0 0.0
    %1200 = vmatprep.subr.mxu0 0.0
    %1201 = vmatpush2.msra.mxu0 0.0
    %1202 = vmatprep.subr.mxu0 0.0
    %1203 = vmatpush2.msra.mxu0 0.0
    %1204 = vmatprep.subr.mxu0 0.0
    %1205 = vmatpush2.msra.mxu0 0.0
    %1206 = vmatprep.mubr.f32.mxu0 0.0
    %1207 = vmatmul.mubr.f32.gmra.mxu0 %v990
    %v1208 = vpop.f32.mrf.mxu0
    %v1209 = vadd.f32 0.0, %v1208
    %v1210 = vpop.f32.mrf.mxu0
    %1211 = vdwg.mxu0
    %v1212 = vadd.f32 %v997, %v1209
    %v1213 = vmul.f32 %v1139, 0.5
    %v1214 = vmul.f32 %v1140, 0.5
    %v1215 = vmul.f32 %v1141, 0.5
    %v1216 = vtanh.pop %v1213
    %v1217 = vtanh.pop %v1214
    %v1218 = vtanh.pop %v1215
    %v1219 = vmul.f32 %v1216, 0.5
    %v1220 = vmul.f32 %v1217, 0.5
    %v1221 = vmul.f32 %v1218, 0.5
    %v1222 = vadd.f32 %v1219, 0.5
    %v1223 = vadd.f32 %v1220, 0.5
    %v1224 = vadd.f32 %v1221, 0.5
    %v1225 = vtanh.pop %v1212
    %v1226 = vmul.f32 %v1223, %v988
    %v1227 = vmul.f32 %v1222, %v1225
    %v1228 = vadd.f32 %v1226, %v1227
    %v1229 = vtanh.pop %v1228
    %v1230 = vmul.f32 %v1224, %v1229
    %s1231 = scalar_lea.vmem [#allocation3], 16
    %1232 = vst [vmem:[%s1231] sm:$0xff] %v1230
    %s1233 = scalar_lea.vmem [#allocation2], 96
    %v1234 = vld [vmem:[%s1233] sm:$0xff]
    %v1235 = vld [vmem:[%s1233 + $0x8] sm:$0xff]
    %v1236 = vld [vmem:[%s1233 + $0x10] sm:$0xff]
    %v1237 = vld [vmem:[%s1233 + $0x18] sm:$0xff]
    %1238 = vmatprep.subr.mxu0 %v209
    %1239 = vmatpush1.msra.mxu0 %v208
    %1240 = vmatprep.subr.mxu0 %v206
    %1241 = vmatpush1.msra.mxu0 %v205
    %1242 = vmatprep.subr.mxu0 %v203
    %1243 = vmatpush1.msra.mxu0 %v202
    %1244 = vmatprep.subr.mxu0 %v200
    %1245 = vmatpush1.msra.mxu0 %v199
    %1246 = vmatprep.subr.mxu0 %v197
    %1247 = vmatpush1.msra.mxu0 %v196
    %1248 = vmatprep.subr.mxu0 %v194
    %1249 = vmatpush1.msra.mxu0 %v193
    %1250 = vmatprep.subr.mxu0 %v191
    %1251 = vmatpush1.msra.mxu0 %v190
    %1252 = vmatprep.subr.mxu0 %v188
    %1253 = vmatpush1.msra.mxu0 %v187
    %1254 = vmatprep.subr.mxu0 %v185
    %1255 = vmatpush1.msra.mxu0 %v184
    %1256 = vmatprep.subr.mxu0 %v182
    %1257 = vmatpush1.msra.mxu0 %v181
    %1258 = vmatprep.subr.mxu0 %v179
    %1259 = vmatpush1.msra.mxu0 %v178
    %1260 = vmatprep.subr.mxu0 %v176
    %1261 = vmatpush1.msra.mxu0 %v175
    %1262 = vmatprep.subr.mxu0 %v173
    %1263 = vmatpush1.msra.mxu0 %v172
    %1264 = vmatprep.subr.mxu0 %v170
    %1265 = vmatpush1.msra.mxu0 %v169
    %1266 = vmatprep.subr.mxu0 %v167
    %1267 = vmatpush1.msra.mxu0 %v166
    %1268 = vmatprep.subr.mxu0 %v164
    %1269 = vmatpush1.msra.mxu0 %v163
    %1270 = vmatprep.subr.mxu0 0.0
    %1271 = vmatpush2.msra.mxu0 0.0
    %1272 = vmatprep.subr.mxu0 0.0
    %1273 = vmatpush2.msra.mxu0 0.0
    %1274 = vmatprep.subr.mxu0 0.0
    %1275 = vmatpush2.msra.mxu0 0.0
    %1276 = vmatprep.subr.mxu0 0.0
    %1277 = vmatpush2.msra.mxu0 0.0
    %1278 = vmatprep.subr.mxu0 0.0
    %1279 = vmatpush2.msra.mxu0 0.0
    %1280 = vmatprep.subr.mxu0 0.0
    %1281 = vmatpush2.msra.mxu0 0.0
    %1282 = vmatprep.subr.mxu0 0.0
    %1283 = vmatpush2.msra.mxu0 0.0
    %1284 = vmatprep.subr.mxu0 0.0
    %1285 = vmatpush2.msra.mxu0 0.0
    %1286 = vmatprep.subr.mxu0 0.0
    %1287 = vmatpush2.msra.mxu0 0.0
    %1288 = vmatprep.subr.mxu0 0.0
    %1289 = vmatpush2.msra.mxu0 0.0
    %1290 = vmatprep.subr.mxu0 0.0
    %1291 = vmatpush2.msra.mxu0 0.0
    %1292 = vmatprep.subr.mxu0 0.0
    %1293 = vmatpush2.msra.mxu0 0.0
    %1294 = vmatprep.subr.mxu0 0.0
    %1295 = vmatpush2.msra.mxu0 0.0
    %1296 = vmatprep.subr.mxu0 0.0
    %1297 = vmatpush2.msra.mxu0 0.0
    %1298 = vmatprep.subr.mxu0 0.0
    %1299 = vmatpush2.msra.mxu0 0.0
    %1300 = vmatprep.subr.mxu0 0.0
    %1301 = vmatpush2.msra.mxu0 0.0
    %1302 = vmatprep.mubr.f32.mxu0 0.0
    %1303 = vmatmul.mubr.f32.gmra.mxu0 %v1230
    %v1304 = vpop.f32.mrf.mxu0
    %v1305 = vadd.f32 0.0, %v1304
    %v1306 = vpop.f32.mrf.mxu0
    %v1307 = vadd.f32 0.0, %v1306
    %1308 = vdwg.mxu0
    %1309 = vmatprep.subr.mxu0 0.0
    %1310 = vmatpush1.msra.mxu0 %v210
    %1311 = vmatprep.subr.mxu0 0.0
    %1312 = vmatpush1.msra.mxu0 %v207
    %1313 = vmatprep.subr.mxu0 0.0
    %1314 = vmatpush1.msra.mxu0 %v204
    %1315 = vmatprep.subr.mxu0 0.0
    %1316 = vmatpush1.msra.mxu0 %v201
    %1317 = vmatprep.subr.mxu0 0.0
    %1318 = vmatpush1.msra.mxu0 %v198
    %1319 = vmatprep.subr.mxu0 0.0
    %1320 = vmatpush1.msra.mxu0 %v195
    %1321 = vmatprep.subr.mxu0 0.0
    %1322 = vmatpush1.msra.mxu0 %v192
    %1323 = vmatprep.subr.mxu0 0.0
    %1324 = vmatpush1.msra.mxu0 %v189
    %1325 = vmatprep.subr.mxu0 0.0
    %1326 = vmatpush1.msra.mxu0 %v186
    %1327 = vmatprep.subr.mxu0 0.0
    %1328 = vmatpush1.msra.mxu0 %v183
    %1329 = vmatprep.subr.mxu0 0.0
    %1330 = vmatpush1.msra.mxu0 %v180
    %1331 = vmatprep.subr.mxu0 0.0
    %1332 = vmatpush1.msra.mxu0 %v177
    %1333 = vmatprep.subr.mxu0 0.0
    %1334 = vmatpush1.msra.mxu0 %v174
    %1335 = vmatprep.subr.mxu0 0.0
    %1336 = vmatpush1.msra.mxu0 %v171
    %1337 = vmatprep.subr.mxu0 0.0
    %1338 = vmatpush1.msra.mxu0 %v168
    %1339 = vmatprep.subr.mxu0 0.0
    %1340 = vmatpush1.msra.mxu0 %v165
    %1341 = vmatprep.subr.mxu0 0.0
    %1342 = vmatpush2.msra.mxu0 0.0
    %1343 = vmatprep.subr.mxu0 0.0
    %1344 = vmatpush2.msra.mxu0 0.0
    %1345 = vmatprep.subr.mxu0 0.0
    %1346 = vmatpush2.msra.mxu0 0.0
    %1347 = vmatprep.subr.mxu0 0.0
    %1348 = vmatpush2.msra.mxu0 0.0
    %1349 = vmatprep.subr.mxu0 0.0
    %1350 = vmatpush2.msra.mxu0 0.0
    %1351 = vmatprep.subr.mxu0 0.0
    %1352 = vmatpush2.msra.mxu0 0.0
    %1353 = vmatprep.subr.mxu0 0.0
    %1354 = vmatpush2.msra.mxu0 0.0
    %1355 = vmatprep.subr.mxu0 0.0
    %1356 = vmatpush2.msra.mxu0 0.0
    %1357 = vmatprep.subr.mxu0 0.0
    %1358 = vmatpush2.msra.mxu0 0.0
    %1359 = vmatprep.subr.mxu0 0.0
    %1360 = vmatpush2.msra.mxu0 0.0
    %1361 = vmatprep.subr.mxu0 0.0
    %1362 = vmatpush2.msra.mxu0 0.0
    %1363 = vmatprep.subr.mxu0 0.0
    %1364 = vmatpush2.msra.mxu0 0.0
    %1365 = vmatprep.subr.mxu0 0.0
    %1366 = vmatpush2.msra.mxu0 0.0
    %1367 = vmatprep.subr.mxu0 0.0
    %1368 = vmatpush2.msra.mxu0 0.0
    %1369 = vmatprep.subr.mxu0 0.0
    %1370 = vmatpush2.msra.mxu0 0.0
    %1371 = vmatprep.subr.mxu0 0.0
    %1372 = vmatpush2.msra.mxu0 0.0
    %1373 = vmatprep.mubr.f32.mxu0 0.0
    %1374 = vmatmul.mubr.f32.gmra.mxu0 %v1230
    %v1375 = vpop.f32.mrf.mxu0
    %v1376 = vadd.f32 0.0, %v1375
    %v1377 = vpop.f32.mrf.mxu0
    %1378 = vdwg.mxu0
    %v1379 = vadd.f32 %v1234, %v1305
    %v1380 = vadd.f32 %v1235, %v1307
    %v1381 = vadd.f32 %v1236, %v1376
    %1382 = vmatprep.subr.mxu0 0.0
    %1383 = vmatpush1.msra.mxu0 %v226
    %1384 = vmatprep.subr.mxu0 0.0
    %1385 = vmatpush1.msra.mxu0 %v225
    %1386 = vmatprep.subr.mxu0 0.0
    %1387 = vmatpush1.msra.mxu0 %v224
    %1388 = vmatprep.subr.mxu0 0.0
    %1389 = vmatpush1.msra.mxu0 %v223
    %1390 = vmatprep.subr.mxu0 0.0
    %1391 = vmatpush1.msra.mxu0 %v222
    %1392 = vmatprep.subr.mxu0 0.0
    %1393 = vmatpush1.msra.mxu0 %v221
    %1394 = vmatprep.subr.mxu0 0.0
    %1395 = vmatpush1.msra.mxu0 %v220
    %1396 = vmatprep.subr.mxu0 0.0
    %1397 = vmatpush1.msra.mxu0 %v219
    %1398 = vmatprep.subr.mxu0 0.0
    %1399 = vmatpush1.msra.mxu0 %v218
    %1400 = vmatprep.subr.mxu0 0.0
    %1401 = vmatpush1.msra.mxu0 %v217
    %1402 = vmatprep.subr.mxu0 0.0
    %1403 = vmatpush1.msra.mxu0 %v216
    %1404 = vmatprep.subr.mxu0 0.0
    %1405 = vmatpush1.msra.mxu0 %v215
    %1406 = vmatprep.subr.mxu0 0.0
    %1407 = vmatpush1.msra.mxu0 %v214
    %1408 = vmatprep.subr.mxu0 0.0
    %1409 = vmatpush1.msra.mxu0 %v213
    %1410 = vmatprep.subr.mxu0 0.0
    %1411 = vmatpush1.msra.mxu0 %v212
    %1412 = vmatprep.subr.mxu0 0.0
    %1413 = vmatpush1.msra.mxu0 %v211
    %1414 = vmatprep.subr.mxu0 0.0
    %1415 = vmatpush2.msra.mxu0 0.0
    %1416 = vmatprep.subr.mxu0 0.0
    %1417 = vmatpush2.msra.mxu0 0.0
    %1418 = vmatprep.subr.mxu0 0.0
    %1419 = vmatpush2.msra.mxu0 0.0
    %1420 = vmatprep.subr.mxu0 0.0
    %1421 = vmatpush2.msra.mxu0 0.0
    %1422 = vmatprep.subr.mxu0 0.0
    %1423 = vmatpush2.msra.mxu0 0.0
    %1424 = vmatprep.subr.mxu0 0.0
    %1425 = vmatpush2.msra.mxu0 0.0
    %1426 = vmatprep.subr.mxu0 0.0
    %1427 = vmatpush2.msra.mxu0 0.0
    %1428 = vmatprep.subr.mxu0 0.0
    %1429 = vmatpush2.msra.mxu0 0.0
    %1430 = vmatprep.subr.mxu0 0.0
    %1431 = vmatpush2.msra.mxu0 0.0
    %1432 = vmatprep.subr.mxu0 0.0
    %1433 = vmatpush2.msra.mxu0 0.0
    %1434 = vmatprep.subr.mxu0 0.0
    %1435 = vmatpush2.msra.mxu0 0.0
    %1436 = vmatprep.subr.mxu0 0.0
    %1437 = vmatpush2.msra.mxu0 0.0
    %1438 = vmatprep.subr.mxu0 0.0
    %1439 = vmatpush2.msra.mxu0 0.0
    %1440 = vmatprep.subr.mxu0 0.0
    %1441 = vmatpush2.msra.mxu0 0.0
    %1442 = vmatprep.subr.mxu0 0.0
    %1443 = vmatpush2.msra.mxu0 0.0
    %1444 = vmatprep.subr.mxu0 0.0
    %1445 = vmatpush2.msra.mxu0 0.0
    %1446 = vmatprep.mubr.f32.mxu0 0.0
    %1447 = vmatmul.mubr.f32.gmra.mxu0 %v1230
    %v1448 = vpop.f32.mrf.mxu0
    %v1449 = vadd.f32 0.0, %v1448
    %v1450 = vpop.f32.mrf.mxu0
    %1451 = vdwg.mxu0
    %v1452 = vadd.f32 %v1237, %v1449
    %v1453 = vmul.f32 %v1379, 0.5
    %v1454 = vmul.f32 %v1380, 0.5
    %v1455 = vmul.f32 %v1381, 0.5
    %v1456 = vtanh.pop %v1453
    %v1457 = vtanh.pop %v1454
    %v1458 = vtanh.pop %v1455
    %v1459 = vmul.f32 %v1456, 0.5
    %v1460 = vmul.f32 %v1457, 0.5
    %v1461 = vmul.f32 %v1458, 0.5
    %v1462 = vadd.f32 %v1459, 0.5
    %v1463 = vadd.f32 %v1460, 0.5
    %v1464 = vadd.f32 %v1461, 0.5
    %v1465 = vtanh.pop %v1452
    %v1466 = vmul.f32 %v1463, %v1228
    %v1467 = vmul.f32 %v1462, %v1465
    %v1468 = vadd.f32 %v1466, %v1467
    %v1469 = vtanh.pop %v1468
    %v1470 = vmul.f32 %v1464, %v1469
    %s1471 = scalar_lea.vmem [#allocation3], 24
    %1472 = vst [vmem:[%s1471] sm:$0xff] %v1470
    %s1473 = scalar_lea.vmem [#allocation2], 128
    %v1474 = vld [vmem:[%s1473] sm:$0xff]
    %v1475 = vld [vmem:[%s1473 + $0x8] sm:$0xff]
    %v1476 = vld [vmem:[%s1473 + $0x10] sm:$0xff]
    %v1477 = vld [vmem:[%s1473 + $0x18] sm:$0xff]
    %1478 = vmatprep.subr.mxu0 %v209
    %1479 = vmatpush1.msra.mxu0 %v208
    %1480 = vmatprep.subr.mxu0 %v206
    %1481 = vmatpush1.msra.mxu0 %v205
    %1482 = vmatprep.subr.mxu0 %v203
    %1483 = vmatpush1.msra.mxu0 %v202
    %1484 = vmatprep.subr.mxu0 %v200
    %1485 = vmatpush1.msra.mxu0 %v199
    %1486 = vmatprep.subr.mxu0 %v197
    %1487 = vmatpush1.msra.mxu0 %v196
    %1488 = vmatprep.subr.mxu0 %v194
    %1489 = vmatpush1.msra.mxu0 %v193
    %1490 = vmatprep.subr.mxu0 %v191
    %1491 = vmatpush1.msra.mxu0 %v190
    %1492 = vmatprep.subr.mxu0 %v188
    %1493 = vmatpush1.msra.mxu0 %v187
    %1494 = vmatprep.subr.mxu0 %v185
    %1495 = vmatpush1.msra.mxu0 %v184
    %1496 = vmatprep.subr.mxu0 %v182
    %1497 = vmatpush1.msra.mxu0 %v181
    %1498 = vmatprep.subr.mxu0 %v179
    %1499 = vmatpush1.msra.mxu0 %v178
    %1500 = vmatprep.subr.mxu0 %v176
    %1501 = vmatpush1.msra.mxu0 %v175
    %1502 = vmatprep.subr.mxu0 %v173
    %1503 = vmatpush1.msra.mxu0 %v172
    %1504 = vmatprep.subr.mxu0 %v170
    %1505 = vmatpush1.msra.mxu0 %v169
    %1506 = vmatprep.subr.mxu0 %v167
    %1507 = vmatpush1.msra.mxu0 %v166
    %1508 = vmatprep.subr.mxu0 %v164
    %1509 = vmatpush1.msra.mxu0 %v163
    %1510 = vmatprep.subr.mxu0 0.0
    %1511 = vmatpush2.msra.mxu0 0.0
    %1512 = vmatprep.subr.mxu0 0.0
    %1513 = vmatpush2.msra.mxu0 0.0
    %1514 = vmatprep.subr.mxu0 0.0
    %1515 = vmatpush2.msra.mxu0 0.0
    %1516 = vmatprep.subr.mxu0 0.0
    %1517 = vmatpush2.msra.mxu0 0.0
    %1518 = vmatprep.subr.mxu0 0.0
    %1519 = vmatpush2.msra.mxu0 0.0
    %1520 = vmatprep.subr.mxu0 0.0
    %1521 = vmatpush2.msra.mxu0 0.0
    %1522 = vmatprep.subr.mxu0 0.0
    %1523 = vmatpush2.msra.mxu0 0.0
    %1524 = vmatprep.subr.mxu0 0.0
    %1525 = vmatpush2.msra.mxu0 0.0
    %1526 = vmatprep.subr.mxu0 0.0
    %1527 = vmatpush2.msra.mxu0 0.0
    %1528 = vmatprep.subr.mxu0 0.0
    %1529 = vmatpush2.msra.mxu0 0.0
    %1530 = vmatprep.subr.mxu0 0.0
    %1531 = vmatpush2.msra.mxu0 0.0
    %1532 = vmatprep.subr.mxu0 0.0
    %1533 = vmatpush2.msra.mxu0 0.0
    %1534 = vmatprep.subr.mxu0 0.0
    %1535 = vmatpush2.msra.mxu0 0.0
    %1536 = vmatprep.subr.mxu0 0.0
    %1537 = vmatpush2.msra.mxu0 0.0
    %1538 = vmatprep.subr.mxu0 0.0
    %1539 = vmatpush2.msra.mxu0 0.0
    %1540 = vmatprep.subr.mxu0 0.0
    %1541 = vmatpush2.msra.mxu0 0.0
    %1542 = vmatprep.mubr.f32.mxu0 0.0
    %1543 = vmatmul.mubr.f32.gmra.mxu0 %v1470
    %v1544 = vpop.f32.mrf.mxu0
    %v1545 = vadd.f32 0.0, %v1544
    %v1546 = vpop.f32.mrf.mxu0
    %v1547 = vadd.f32 0.0, %v1546
    %1548 = vdwg.mxu0
    %1549 = vmatprep.subr.mxu0 0.0
    %1550 = vmatpush1.msra.mxu0 %v210
    %1551 = vmatprep.subr.mxu0 0.0
    %1552 = vmatpush1.msra.mxu0 %v207
    %1553 = vmatprep.subr.mxu0 0.0
    %1554 = vmatpush1.msra.mxu0 %v204
    %1555 = vmatprep.subr.mxu0 0.0
    %1556 = vmatpush1.msra.mxu0 %v201
    %1557 = vmatprep.subr.mxu0 0.0
    %1558 = vmatpush1.msra.mxu0 %v198
    %1559 = vmatprep.subr.mxu0 0.0
    %1560 = vmatpush1.msra.mxu0 %v195
    %1561 = vmatprep.subr.mxu0 0.0
    %1562 = vmatpush1.msra.mxu0 %v192
    %1563 = vmatprep.subr.mxu0 0.0
    %1564 = vmatpush1.msra.mxu0 %v189
    %1565 = vmatprep.subr.mxu0 0.0
    %1566 = vmatpush1.msra.mxu0 %v186
    %1567 = vmatprep.subr.mxu0 0.0
    %1568 = vmatpush1.msra.mxu0 %v183
    %1569 = vmatprep.subr.mxu0 0.0
    %1570 = vmatpush1.msra.mxu0 %v180
    %1571 = vmatprep.subr.mxu0 0.0
    %1572 = vmatpush1.msra.mxu0 %v177
    %1573 = vmatprep.subr.mxu0 0.0
    %1574 = vmatpush1.msra.mxu0 %v174
    %1575 = vmatprep.subr.mxu0 0.0
    %1576 = vmatpush1.msra.mxu0 %v171
    %1577 = vmatprep.subr.mxu0 0.0
    %1578 = vmatpush1.msra.mxu0 %v168
    %1579 = vmatprep.subr.mxu0 0.0
    %1580 = vmatpush1.msra.mxu0 %v165
    %1581 = vmatprep.subr.mxu0 0.0
    %1582 = vmatpush2.msra.mxu0 0.0
    %1583 = vmatprep.subr.mxu0 0.0
    %1584 = vmatpush2.msra.mxu0 0.0
    %1585 = vmatprep.subr.mxu0 0.0
    %1586 = vmatpush2.msra.mxu0 0.0
    %1587 = vmatprep.subr.mxu0 0.0
    %1588 = vmatpush2.msra.mxu0 0.0
    %1589 = vmatprep.subr.mxu0 0.0
    %1590 = vmatpush2.msra.mxu0 0.0
    %1591 = vmatprep.subr.mxu0 0.0
    %1592 = vmatpush2.msra.mxu0 0.0
    %1593 = vmatprep.subr.mxu0 0.0
    %1594 = vmatpush2.msra.mxu0 0.0
    %1595 = vmatprep.subr.mxu0 0.0
    %1596 = vmatpush2.msra.mxu0 0.0
    %1597 = vmatprep.subr.mxu0 0.0
    %1598 = vmatpush2.msra.mxu0 0.0
    %1599 = vmatprep.subr.mxu0 0.0
    %1600 = vmatpush2.msra.mxu0 0.0
    %1601 = vmatprep.subr.mxu0 0.0
    %1602 = vmatpush2.msra.mxu0 0.0
    %1603 = vmatprep.subr.mxu0 0.0
    %1604 = vmatpush2.msra.mxu0 0.0
    %1605 = vmatprep.subr.mxu0 0.0
    %1606 = vmatpush2.msra.mxu0 0.0
    %1607 = vmatprep.subr.mxu0 0.0
    %1608 = vmatpush2.msra.mxu0 0.0
    %1609 = vmatprep.subr.mxu0 0.0
    %1610 = vmatpush2.msra.mxu0 0.0
    %1611 = vmatprep.subr.mxu0 0.0
    %1612 = vmatpush2.msra.mxu0 0.0
    %1613 = vmatprep.mubr.f32.mxu0 0.0
    %1614 = vmatmul.mubr.f32.gmra.mxu0 %v1470
    %v1615 = vpop.f32.mrf.mxu0
    %v1616 = vadd.f32 0.0, %v1615
    %v1617 = vpop.f32.mrf.mxu0
    %1618 = vdwg.mxu0
    %v1619 = vadd.f32 %v1474, %v1545
    %v1620 = vadd.f32 %v1475, %v1547
    %v1621 = vadd.f32 %v1476, %v1616
    %1622 = vmatprep.subr.mxu0 0.0
    %1623 = vmatpush1.msra.mxu0 %v226
    %1624 = vmatprep.subr.mxu0 0.0
    %1625 = vmatpush1.msra.mxu0 %v225
    %1626 = vmatprep.subr.mxu0 0.0
    %1627 = vmatpush1.msra.mxu0 %v224
    %1628 = vmatprep.subr.mxu0 0.0
    %1629 = vmatpush1.msra.mxu0 %v223
    %1630 = vmatprep.subr.mxu0 0.0
    %1631 = vmatpush1.msra.mxu0 %v222
    %1632 = vmatprep.subr.mxu0 0.0
    %1633 = vmatpush1.msra.mxu0 %v221
    %1634 = vmatprep.subr.mxu0 0.0
    %1635 = vmatpush1.msra.mxu0 %v220
    %1636 = vmatprep.subr.mxu0 0.0
    %1637 = vmatpush1.msra.mxu0 %v219
    %1638 = vmatprep.subr.mxu0 0.0
    %1639 = vmatpush1.msra.mxu0 %v218
    %1640 = vmatprep.subr.mxu0 0.0
    %1641 = vmatpush1.msra.mxu0 %v217
    %1642 = vmatprep.subr.mxu0 0.0
    %1643 = vmatpush1.msra.mxu0 %v216
    %1644 = vmatprep.subr.mxu0 0.0
    %1645 = vmatpush1.msra.mxu0 %v215
    %1646 = vmatprep.subr.mxu0 0.0
    %1647 = vmatpush1.msra.mxu0 %v214
    %1648 = vmatprep.subr.mxu0 0.0
    %1649 = vmatpush1.msra.mxu0 %v213
    %1650 = vmatprep.subr.mxu0 0.0
    %1651 = vmatpush1.msra.mxu0 %v212
    %1652 = vmatprep.subr.mxu0 0.0
    %1653 = vmatpush1.msra.mxu0 %v211
    %1654 = vmatprep.subr.mxu0 0.0
    %1655 = vmatpush2.msra.mxu0 0.0
    %1656 = vmatprep.subr.mxu0 0.0
    %1657 = vmatpush2.msra.mxu0 0.0
    %1658 = vmatprep.subr.mxu0 0.0
    %1659 = vmatpush2.msra.mxu0 0.0
    %1660 = vmatprep.subr.mxu0 0.0
    %1661 = vmatpush2.msra.mxu0 0.0
    %1662 = vmatprep.subr.mxu0 0.0
    %1663 = vmatpush2.msra.mxu0 0.0
    %1664 = vmatprep.subr.mxu0 0.0
    %1665 = vmatpush2.msra.mxu0 0.0
    %1666 = vmatprep.subr.mxu0 0.0
    %1667 = vmatpush2.msra.mxu0 0.0
    %1668 = vmatprep.subr.mxu0 0.0
    %1669 = vmatpush2.msra.mxu0 0.0
    %1670 = vmatprep.subr.mxu0 0.0
    %1671 = vmatpush2.msra.mxu0 0.0
    %1672 = vmatprep.subr.mxu0 0.0
    %1673 = vmatpush2.msra.mxu0 0.0
    %1674 = vmatprep.subr.mxu0 0.0
    %1675 = vmatpush2.msra.mxu0 0.0
    %1676 = vmatprep.subr.mxu0 0.0
    %1677 = vmatpush2.msra.mxu0 0.0
    %1678 = vmatprep.subr.mxu0 0.0
    %1679 = vmatpush2.msra.mxu0 0.0
    %1680 = vmatprep.subr.mxu0 0.0
    %1681 = vmatpush2.msra.mxu0 0.0
    %1682 = vmatprep.subr.mxu0 0.0
    %1683 = vmatpush2.msra.mxu0 0.0
    %1684 = vmatprep.subr.mxu0 0.0
    %1685 = vmatpush2.msra.mxu0 0.0
    %1686 = vmatprep.mubr.f32.mxu0 0.0
    %1687 = vmatmul.mubr.f32.gmra.mxu0 %v1470
    %v1688 = vpop.f32.mrf.mxu0
    %v1689 = vadd.f32 0.0, %v1688
    %v1690 = vpop.f32.mrf.mxu0
    %1691 = vdwg.mxu0
    %v1692 = vadd.f32 %v1477, %v1689
    %v1693 = vmul.f32 %v1619, 0.5
    %v1694 = vmul.f32 %v1620, 0.5
    %v1695 = vmul.f32 %v1621, 0.5
    %v1696 = vtanh.pop %v1693
    %v1697 = vtanh.pop %v1694
    %v1698 = vtanh.pop %v1695
    %v1699 = vmul.f32 %v1696, 0.5
    %v1700 = vmul.f32 %v1697, 0.5
    %v1701 = vmul.f32 %v1698, 0.5
    %v1702 = vadd.f32 %v1699, 0.5
    %v1703 = vadd.f32 %v1700, 0.5
    %v1704 = vadd.f32 %v1701, 0.5
    %v1705 = vtanh.pop %v1692
    %v1706 = vmul.f32 %v1703, %v1468
    %v1707 = vmul.f32 %v1702, %v1705
    %v1708 = vadd.f32 %v1706, %v1707
    %v1709 = vtanh.pop %v1708
    %v1710 = vmul.f32 %v1704, %v1709
    %s1711 = scalar_lea.vmem [#allocation3], 32
    %1712 = vst [vmem:[%s1711] sm:$0xff] %v1710
    %s1713 = scalar_lea.vmem [#allocation2], 160
    %v1714 = vld [vmem:[%s1713] sm:$0xff]
    %v1715 = vld [vmem:[%s1713 + $0x8] sm:$0xff]
    %v1716 = vld [vmem:[%s1713 + $0x10] sm:$0xff]
    %v1717 = vld [vmem:[%s1713 + $0x18] sm:$0xff]
    %1718 = vmatprep.subr.mxu0 %v209
    %1719 = vmatpush1.msra.mxu0 %v208
    %1720 = vmatprep.subr.mxu0 %v206
    %1721 = vmatpush1.msra.mxu0 %v205
    %1722 = vmatprep.subr.mxu0 %v203
    %1723 = vmatpush1.msra.mxu0 %v202
    %1724 = vmatprep.subr.mxu0 %v200
    %1725 = vmatpush1.msra.mxu0 %v199
    %1726 = vmatprep.subr.mxu0 %v197
    %1727 = vmatpush1.msra.mxu0 %v196
    %1728 = vmatprep.subr.mxu0 %v194
    %1729 = vmatpush1.msra.mxu0 %v193
    %1730 = vmatprep.subr.mxu0 %v191
    %1731 = vmatpush1.msra.mxu0 %v190
    %1732 = vmatprep.subr.mxu0 %v188
    %1733 = vmatpush1.msra.mxu0 %v187
    %1734 = vmatprep.subr.mxu0 %v185
    %1735 = vmatpush1.msra.mxu0 %v184
    %1736 = vmatprep.subr.mxu0 %v182
    %1737 = vmatpush1.msra.mxu0 %v181
    %1738 = vmatprep.subr.mxu0 %v179
    %1739 = vmatpush1.msra.mxu0 %v178
    %1740 = vmatprep.subr.mxu0 %v176
    %1741 = vmatpush1.msra.mxu0 %v175
    %1742 = vmatprep.subr.mxu0 %v173
    %1743 = vmatpush1.msra.mxu0 %v172
    %1744 = vmatprep.subr.mxu0 %v170
    %1745 = vmatpush1.msra.mxu0 %v169
    %1746 = vmatprep.subr.mxu0 %v167
    %1747 = vmatpush1.msra.mxu0 %v166
    %1748 = vmatprep.subr.mxu0 %v164
    %1749 = vmatpush1.msra.mxu0 %v163
    %1750 = vmatprep.subr.mxu0 0.0
    %1751 = vmatpush2.msra.mxu0 0.0
    %1752 = vmatprep.subr.mxu0 0.0
    %1753 = vmatpush2.msra.mxu0 0.0
    %1754 = vmatprep.subr.mxu0 0.0
    %1755 = vmatpush2.msra.mxu0 0.0
    %1756 = vmatprep.subr.mxu0 0.0
    %1757 = vmatpush2.msra.mxu0 0.0
    %1758 = vmatprep.subr.mxu0 0.0
    %1759 = vmatpush2.msra.mxu0 0.0
    %1760 = vmatprep.subr.mxu0 0.0
    %1761 = vmatpush2.msra.mxu0 0.0
    %1762 = vmatprep.subr.mxu0 0.0
    %1763 = vmatpush2.msra.mxu0 0.0
    %1764 = vmatprep.subr.mxu0 0.0
    %1765 = vmatpush2.msra.mxu0 0.0
    %1766 = vmatprep.subr.mxu0 0.0
    %1767 = vmatpush2.msra.mxu0 0.0
    %1768 = vmatprep.subr.mxu0 0.0
    %1769 = vmatpush2.msra.mxu0 0.0
    %1770 = vmatprep.subr.mxu0 0.0
    %1771 = vmatpush2.msra.mxu0 0.0
    %1772 = vmatprep.subr.mxu0 0.0
    %1773 = vmatpush2.msra.mxu0 0.0
    %1774 = vmatprep.subr.mxu0 0.0
    %1775 = vmatpush2.msra.mxu0 0.0
    %1776 = vmatprep.subr.mxu0 0.0
    %1777 = vmatpush2.msra.mxu0 0.0
    %1778 = vmatprep.subr.mxu0 0.0
    %1779 = vmatpush2.msra.mxu0 0.0
    %1780 = vmatprep.subr.mxu0 0.0
    %1781 = vmatpush2.msra.mxu0 0.0
    %1782 = vmatprep.mubr.f32.mxu0 0.0
    %1783 = vmatmul.mubr.f32.gmra.mxu0 %v1710
    %v1784 = vpop.f32.mrf.mxu0
    %v1785 = vadd.f32 0.0, %v1784
    %v1786 = vpop.f32.mrf.mxu0
    %v1787 = vadd.f32 0.0, %v1786
    %1788 = vdwg.mxu0
    %1789 = vmatprep.subr.mxu0 0.0
    %1790 = vmatpush1.msra.mxu0 %v210
    %1791 = vmatprep.subr.mxu0 0.0
    %1792 = vmatpush1.msra.mxu0 %v207
    %1793 = vmatprep.subr.mxu0 0.0
    %1794 = vmatpush1.msra.mxu0 %v204
    %1795 = vmatprep.subr.mxu0 0.0
    %1796 = vmatpush1.msra.mxu0 %v201
    %1797 = vmatprep.subr.mxu0 0.0
    %1798 = vmatpush1.msra.mxu0 %v198
    %1799 = vmatprep.subr.mxu0 0.0
    %1800 = vmatpush1.msra.mxu0 %v195
    %1801 = vmatprep.subr.mxu0 0.0
    %1802 = vmatpush1.msra.mxu0 %v192
    %1803 = vmatprep.subr.mxu0 0.0
    %1804 = vmatpush1.msra.mxu0 %v189
    %1805 = vmatprep.subr.mxu0 0.0
    %1806 = vmatpush1.msra.mxu0 %v186
    %1807 = vmatprep.subr.mxu0 0.0
    %1808 = vmatpush1.msra.mxu0 %v183
    %1809 = vmatprep.subr.mxu0 0.0
    %1810 = vmatpush1.msra.mxu0 %v180
    %1811 = vmatprep.subr.mxu0 0.0
    %1812 = vmatpush1.msra.mxu0 %v177
    %1813 = vmatprep.subr.mxu0 0.0
    %1814 = vmatpush1.msra.mxu0 %v174
    %1815 = vmatprep.subr.mxu0 0.0
    %1816 = vmatpush1.msra.mxu0 %v171
    %1817 = vmatprep.subr.mxu0 0.0
    %1818 = vmatpush1.msra.mxu0 %v168
    %1819 = vmatprep.subr.mxu0 0.0
    %1820 = vmatpush1.msra.mxu0 %v165
    %1821 = vmatprep.subr.mxu0 0.0
    %1822 = vmatpush2.msra.mxu0 0.0
    %1823 = vmatprep.subr.mxu0 0.0
    %1824 = vmatpush2.msra.mxu0 0.0
    %1825 = vmatprep.subr.mxu0 0.0
    %1826 = vmatpush2.msra.mxu0 0.0
    %1827 = vmatprep.subr.mxu0 0.0
    %1828 = vmatpush2.msra.mxu0 0.0
    %1829 = vmatprep.subr.mxu0 0.0
    %1830 = vmatpush2.msra.mxu0 0.0
    %1831 = vmatprep.subr.mxu0 0.0
    %1832 = vmatpush2.msra.mxu0 0.0
    %1833 = vmatprep.subr.mxu0 0.0
    %1834 = vmatpush2.msra.mxu0 0.0
    %1835 = vmatprep.subr.mxu0 0.0
    %1836 = vmatpush2.msra.mxu0 0.0
    %1837 = vmatprep.subr.mxu0 0.0
    %1838 = vmatpush2.msra.mxu0 0.0
    %1839 = vmatprep.subr.mxu0 0.0
    %1840 = vmatpush2.msra.mxu0 0.0
    %1841 = vmatprep.subr.mxu0 0.0
    %1842 = vmatpush2.msra.mxu0 0.0
    %1843 = vmatprep.subr.mxu0 0.0
    %1844 = vmatpush2.msra.mxu0 0.0
    %1845 = vmatprep.subr.mxu0 0.0
    %1846 = vmatpush2.msra.mxu0 0.0
    %1847 = vmatprep.subr.mxu0 0.0
    %1848 = vmatpush2.msra.mxu0 0.0
    %1849 = vmatprep.subr.mxu0 0.0
    %1850 = vmatpush2.msra.mxu0 0.0
    %1851 = vmatprep.subr.mxu0 0.0
    %1852 = vmatpush2.msra.mxu0 0.0
    %1853 = vmatprep.mubr.f32.mxu0 0.0
    %1854 = vmatmul.mubr.f32.gmra.mxu0 %v1710
    %v1855 = vpop.f32.mrf.mxu0
    %v1856 = vadd.f32 0.0, %v1855
    %v1857 = vpop.f32.mrf.mxu0
    %1858 = vdwg.mxu0
    %v1859 = vadd.f32 %v1714, %v1785
    %v1860 = vadd.f32 %v1715, %v1787
    %v1861 = vadd.f32 %v1716, %v1856
    %1862 = vmatprep.subr.mxu0 0.0
    %1863 = vmatpush1.msra.mxu0 %v226
    %1864 = vmatprep.subr.mxu0 0.0
    %1865 = vmatpush1.msra.mxu0 %v225
    %1866 = vmatprep.subr.mxu0 0.0
    %1867 = vmatpush1.msra.mxu0 %v224
    %1868 = vmatprep.subr.mxu0 0.0
    %1869 = vmatpush1.msra.mxu0 %v223
    %1870 = vmatprep.subr.mxu0 0.0
    %1871 = vmatpush1.msra.mxu0 %v222
    %1872 = vmatprep.subr.mxu0 0.0
    %1873 = vmatpush1.msra.mxu0 %v221
    %1874 = vmatprep.subr.mxu0 0.0
    %1875 = vmatpush1.msra.mxu0 %v220
    %1876 = vmatprep.subr.mxu0 0.0
    %1877 = vmatpush1.msra.mxu0 %v219
    %1878 = vmatprep.subr.mxu0 0.0
    %1879 = vmatpush1.msra.mxu0 %v218
    %1880 = vmatprep.subr.mxu0 0.0
    %1881 = vmatpush1.msra.mxu0 %v217
    %1882 = vmatprep.subr.mxu0 0.0
    %1883 = vmatpush1.msra.mxu0 %v216
    %1884 = vmatprep.subr.mxu0 0.0
    %1885 = vmatpush1.msra.mxu0 %v215
    %1886 = vmatprep.subr.mxu0 0.0
    %1887 = vmatpush1.msra.mxu0 %v214
    %1888 = vmatprep.subr.mxu0 0.0
    %1889 = vmatpush1.msra.mxu0 %v213
    %1890 = vmatprep.subr.mxu0 0.0
    %1891 = vmatpush1.msra.mxu0 %v212
    %1892 = vmatprep.subr.mxu0 0.0
    %1893 = vmatpush1.msra.mxu0 %v211
    %1894 = vmatprep.subr.mxu0 0.0
    %1895 = vmatpush2.msra.mxu0 0.0
    %1896 = vmatprep.subr.mxu0 0.0
    %1897 = vmatpush2.msra.mxu0 0.0
    %1898 = vmatprep.subr.mxu0 0.0
    %1899 = vmatpush2.msra.mxu0 0.0
    %1900 = vmatprep.subr.mxu0 0.0
    %1901 = vmatpush2.msra.mxu0 0.0
    %1902 = vmatprep.subr.mxu0 0.0
    %1903 = vmatpush2.msra.mxu0 0.0
    %1904 = vmatprep.subr.mxu0 0.0
    %1905 = vmatpush2.msra.mxu0 0.0
    %1906 = vmatprep.subr.mxu0 0.0
    %1907 = vmatpush2.msra.mxu0 0.0
    %1908 = vmatprep.subr.mxu0 0.0
    %1909 = vmatpush2.msra.mxu0 0.0
    %1910 = vmatprep.subr.mxu0 0.0
    %1911 = vmatpush2.msra.mxu0 0.0
    %1912 = vmatprep.subr.mxu0 0.0
    %1913 = vmatpush2.msra.mxu0 0.0
    %1914 = vmatprep.subr.mxu0 0.0
    %1915 = vmatpush2.msra.mxu0 0.0
    %1916 = vmatprep.subr.mxu0 0.0
    %1917 = vmatpush2.msra.mxu0 0.0
    %1918 = vmatprep.subr.mxu0 0.0
    %1919 = vmatpush2.msra.mxu0 0.0
    %1920 = vmatprep.subr.mxu0 0.0
    %1921 = vmatpush2.msra.mxu0 0.0
    %1922 = vmatprep.subr.mxu0 0.0
    %1923 = vmatpush2.msra.mxu0 0.0
    %1924 = vmatprep.subr.mxu0 0.0
    %1925 = vmatpush2.msra.mxu0 0.0
    %1926 = vmatprep.mubr.f32.mxu0 0.0
    %1927 = vmatmul.mubr.f32.gmra.mxu0 %v1710
    %v1928 = vpop.f32.mrf.mxu0
    %v1929 = vadd.f32 0.0, %v1928
    %v1930 = vpop.f32.mrf.mxu0
    %1931 = vdwg.mxu0
    %v1932 = vadd.f32 %v1717, %v1929
    %v1933 = vmul.f32 %v1859, 0.5
    %v1934 = vmul.f32 %v1860, 0.5
    %v1935 = vmul.f32 %v1861, 0.5
    %v1936 = vtanh.pop %v1933
    %v1937 = vtanh.pop %v1934
    %v1938 = vtanh.pop %v1935
    %v1939 = vmul.f32 %v1936, 0.5
    %v1940 = vmul.f32 %v1937, 0.5
    %v1941 = vmul.f32 %v1938, 0.5
    %v1942 = vadd.f32 %v1939, 0.5
    %v1943 = vadd.f32 %v1940, 0.5
    %v1944 = vadd.f32 %v1941, 0.5
    %v1945 = vtanh.pop %v1932
    %v1946 = vmul.f32 %v1943, %v1708
    %v1947 = vmul.f32 %v1942, %v1945
    %v1948 = vadd.f32 %v1946, %v1947
    %v1949 = vtanh.pop %v1948
    %v1950 = vmul.f32 %v1944, %v1949
    %s1951 = scalar_lea.vmem [#allocation3], 40
    %1952 = vst [vmem:[%s1951] sm:$0xff] %v1950
    %s1953 = scalar_lea.vmem [#allocation2], 192
    %v1954 = vld [vmem:[%s1953] sm:$0xff]
    %v1955 = vld [vmem:[%s1953 + $0x8] sm:$0xff]
    %v1956 = vld [vmem:[%s1953 + $0x10] sm:$0xff]
    %v1957 = vld [vmem:[%s1953 + $0x18] sm:$0xff]
    %1958 = vmatprep.subr.mxu0 %v209
    %1959 = vmatpush1.msra.mxu0 %v208
    %1960 = vmatprep.subr.mxu0 %v206
    %1961 = vmatpush1.msra.mxu0 %v205
    %1962 = vmatprep.subr.mxu0 %v203
    %1963 = vmatpush1.msra.mxu0 %v202
    %1964 = vmatprep.subr.mxu0 %v200
    %1965 = vmatpush1.msra.mxu0 %v199
    %1966 = vmatprep.subr.mxu0 %v197
    %1967 = vmatpush1.msra.mxu0 %v196
    %1968 = vmatprep.subr.mxu0 %v194
    %1969 = vmatpush1.msra.mxu0 %v193
    %1970 = vmatprep.subr.mxu0 %v191
    %1971 = vmatpush1.msra.mxu0 %v190
    %1972 = vmatprep.subr.mxu0 %v188
    %1973 = vmatpush1.msra.mxu0 %v187
    %1974 = vmatprep.subr.mxu0 %v185
    %1975 = vmatpush1.msra.mxu0 %v184
    %1976 = vmatprep.subr.mxu0 %v182
    %1977 = vmatpush1.msra.mxu0 %v181
    %1978 = vmatprep.subr.mxu0 %v179
    %1979 = vmatpush1.msra.mxu0 %v178
    %1980 = vmatprep.subr.mxu0 %v176
    %1981 = vmatpush1.msra.mxu0 %v175
    %1982 = vmatprep.subr.mxu0 %v173
    %1983 = vmatpush1.msra.mxu0 %v172
    %1984 = vmatprep.subr.mxu0 %v170
    %1985 = vmatpush1.msra.mxu0 %v169
    %1986 = vmatprep.subr.mxu0 %v167
    %1987 = vmatpush1.msra.mxu0 %v166
    %1988 = vmatprep.subr.mxu0 %v164
    %1989 = vmatpush1.msra.mxu0 %v163
    %1990 = vmatprep.subr.mxu0 0.0
    %1991 = vmatpush2.msra.mxu0 0.0
    %1992 = vmatprep.subr.mxu0 0.0
    %1993 = vmatpush2.msra.mxu0 0.0
    %1994 = vmatprep.subr.mxu0 0.0
    %1995 = vmatpush2.msra.mxu0 0.0
    %1996 = vmatprep.subr.mxu0 0.0
    %1997 = vmatpush2.msra.mxu0 0.0
    %1998 = vmatprep.subr.mxu0 0.0
    %1999 = vmatpush2.msra.mxu0 0.0
    %2000 = vmatprep.subr.mxu0 0.0
    %2001 = vmatpush2.msra.mxu0 0.0
    %2002 = vmatprep.subr.mxu0 0.0
    %2003 = vmatpush2.msra.mxu0 0.0
    %2004 = vmatprep.subr.mxu0 0.0
    %2005 = vmatpush2.msra.mxu0 0.0
    %2006 = vmatprep.subr.mxu0 0.0
    %2007 = vmatpush2.msra.mxu0 0.0
    %2008 = vmatprep.subr.mxu0 0.0
    %2009 = vmatpush2.msra.mxu0 0.0
    %2010 = vmatprep.subr.mxu0 0.0
    %2011 = vmatpush2.msra.mxu0 0.0
    %2012 = vmatprep.subr.mxu0 0.0
    %2013 = vmatpush2.msra.mxu0 0.0
    %2014 = vmatprep.subr.mxu0 0.0
    %2015 = vmatpush2.msra.mxu0 0.0
    %2016 = vmatprep.subr.mxu0 0.0
    %2017 = vmatpush2.msra.mxu0 0.0
    %2018 = vmatprep.subr.mxu0 0.0
    %2019 = vmatpush2.msra.mxu0 0.0
    %2020 = vmatprep.subr.mxu0 0.0
    %2021 = vmatpush2.msra.mxu0 0.0
    %2022 = vmatprep.mubr.f32.mxu0 0.0
    %2023 = vmatmul.mubr.f32.gmra.mxu0 %v1950
    %v2024 = vpop.f32.mrf.mxu0
    %v2025 = vadd.f32 0.0, %v2024
    %v2026 = vpop.f32.mrf.mxu0
    %v2027 = vadd.f32 0.0, %v2026
    %2028 = vdwg.mxu0
    %2029 = vmatprep.subr.mxu0 0.0
    %2030 = vmatpush1.msra.mxu0 %v210
    %2031 = vmatprep.subr.mxu0 0.0
    %2032 = vmatpush1.msra.mxu0 %v207
    %2033 = vmatprep.subr.mxu0 0.0
    %2034 = vmatpush1.msra.mxu0 %v204
    %2035 = vmatprep.subr.mxu0 0.0
    %2036 = vmatpush1.msra.mxu0 %v201
    %2037 = vmatprep.subr.mxu0 0.0
    %2038 = vmatpush1.msra.mxu0 %v198
    %2039 = vmatprep.subr.mxu0 0.0
    %2040 = vmatpush1.msra.mxu0 %v195
    %2041 = vmatprep.subr.mxu0 0.0
    %2042 = vmatpush1.msra.mxu0 %v192
    %2043 = vmatprep.subr.mxu0 0.0
    %2044 = vmatpush1.msra.mxu0 %v189
    %2045 = vmatprep.subr.mxu0 0.0
    %2046 = vmatpush1.msra.mxu0 %v186
    %2047 = vmatprep.subr.mxu0 0.0
    %2048 = vmatpush1.msra.mxu0 %v183
    %2049 = vmatprep.subr.mxu0 0.0
    %2050 = vmatpush1.msra.mxu0 %v180
    %2051 = vmatprep.subr.mxu0 0.0
    %2052 = vmatpush1.msra.mxu0 %v177
    %2053 = vmatprep.subr.mxu0 0.0
    %2054 = vmatpush1.msra.mxu0 %v174
    %2055 = vmatprep.subr.mxu0 0.0
    %2056 = vmatpush1.msra.mxu0 %v171
    %2057 = vmatprep.subr.mxu0 0.0
    %2058 = vmatpush1.msra.mxu0 %v168
    %2059 = vmatprep.subr.mxu0 0.0
    %2060 = vmatpush1.msra.mxu0 %v165
    %2061 = vmatprep.subr.mxu0 0.0
    %2062 = vmatpush2.msra.mxu0 0.0
    %2063 = vmatprep.subr.mxu0 0.0
    %2064 = vmatpush2.msra.mxu0 0.0
    %2065 = vmatprep.subr.mxu0 0.0
    %2066 = vmatpush2.msra.mxu0 0.0
    %2067 = vmatprep.subr.mxu0 0.0
    %2068 = vmatpush2.msra.mxu0 0.0
    %2069 = vmatprep.subr.mxu0 0.0
    %2070 = vmatpush2.msra.mxu0 0.0
    %2071 = vmatprep.subr.mxu0 0.0
    %2072 = vmatpush2.msra.mxu0 0.0
    %2073 = vmatprep.subr.mxu0 0.0
    %2074 = vmatpush2.msra.mxu0 0.0
    %2075 = vmatprep.subr.mxu0 0.0
    %2076 = vmatpush2.msra.mxu0 0.0
    %2077 = vmatprep.subr.mxu0 0.0
    %2078 = vmatpush2.msra.mxu0 0.0
    %2079 = vmatprep.subr.mxu0 0.0
    %2080 = vmatpush2.msra.mxu0 0.0
    %2081 = vmatprep.subr.mxu0 0.0
    %2082 = vmatpush2.msra.mxu0 0.0
    %2083 = vmatprep.subr.mxu0 0.0
    %2084 = vmatpush2.msra.mxu0 0.0
    %2085 = vmatprep.subr.mxu0 0.0
    %2086 = vmatpush2.msra.mxu0 0.0
    %2087 = vmatprep.subr.mxu0 0.0
    %2088 = vmatpush2.msra.mxu0 0.0
    %2089 = vmatprep.subr.mxu0 0.0
    %2090 = vmatpush2.msra.mxu0 0.0
    %2091 = vmatprep.subr.mxu0 0.0
    %2092 = vmatpush2.msra.mxu0 0.0
    %2093 = vmatprep.mubr.f32.mxu0 0.0
    %2094 = vmatmul.mubr.f32.gmra.mxu0 %v1950
    %v2095 = vpop.f32.mrf.mxu0
    %v2096 = vadd.f32 0.0, %v2095
    %v2097 = vpop.f32.mrf.mxu0
    %2098 = vdwg.mxu0
    %v2099 = vadd.f32 %v1954, %v2025
    %v2100 = vadd.f32 %v1955, %v2027
    %v2101 = vadd.f32 %v1956, %v2096
    %2102 = vmatprep.subr.mxu0 0.0
    %2103 = vmatpush1.msra.mxu0 %v226
    %2104 = vmatprep.subr.mxu0 0.0
    %2105 = vmatpush1.msra.mxu0 %v225
    %2106 = vmatprep.subr.mxu0 0.0
    %2107 = vmatpush1.msra.mxu0 %v224
    %2108 = vmatprep.subr.mxu0 0.0
    %2109 = vmatpush1.msra.mxu0 %v223
    %2110 = vmatprep.subr.mxu0 0.0
    %2111 = vmatpush1.msra.mxu0 %v222
    %2112 = vmatprep.subr.mxu0 0.0
    %2113 = vmatpush1.msra.mxu0 %v221
    %2114 = vmatprep.subr.mxu0 0.0
    %2115 = vmatpush1.msra.mxu0 %v220
    %2116 = vmatprep.subr.mxu0 0.0
    %2117 = vmatpush1.msra.mxu0 %v219
    %2118 = vmatprep.subr.mxu0 0.0
    %2119 = vmatpush1.msra.mxu0 %v218
    %2120 = vmatprep.subr.mxu0 0.0
    %2121 = vmatpush1.msra.mxu0 %v217
    %2122 = vmatprep.subr.mxu0 0.0
    %2123 = vmatpush1.msra.mxu0 %v216
    %2124 = vmatprep.subr.mxu0 0.0
    %2125 = vmatpush1.msra.mxu0 %v215
    %2126 = vmatprep.subr.mxu0 0.0
    %2127 = vmatpush1.msra.mxu0 %v214
    %2128 = vmatprep.subr.mxu0 0.0
    %2129 = vmatpush1.msra.mxu0 %v213
    %2130 = vmatprep.subr.mxu0 0.0
    %2131 = vmatpush1.msra.mxu0 %v212
    %2132 = vmatprep.subr.mxu0 0.0
    %2133 = vmatpush1.msra.mxu0 %v211
    %2134 = vmatprep.subr.mxu0 0.0
    %2135 = vmatpush2.msra.mxu0 0.0
    %2136 = vmatprep.subr.mxu0 0.0
    %2137 = vmatpush2.msra.mxu0 0.0
    %2138 = vmatprep.subr.mxu0 0.0
    %2139 = vmatpush2.msra.mxu0 0.0
    %2140 = vmatprep.subr.mxu0 0.0
    %2141 = vmatpush2.msra.mxu0 0.0
    %2142 = vmatprep.subr.mxu0 0.0
    %2143 = vmatpush2.msra.mxu0 0.0
    %2144 = vmatprep.subr.mxu0 0.0
    %2145 = vmatpush2.msra.mxu0 0.0
    %2146 = vmatprep.subr.mxu0 0.0
    %2147 = vmatpush2.msra.mxu0 0.0
    %2148 = vmatprep.subr.mxu0 0.0
    %2149 = vmatpush2.msra.mxu0 0.0
    %2150 = vmatprep.subr.mxu0 0.0
    %2151 = vmatpush2.msra.mxu0 0.0
    %2152 = vmatprep.subr.mxu0 0.0
    %2153 = vmatpush2.msra.mxu0 0.0
    %2154 = vmatprep.subr.mxu0 0.0
    %2155 = vmatpush2.msra.mxu0 0.0
    %2156 = vmatprep.subr.mxu0 0.0
    %2157 = vmatpush2.msra.mxu0 0.0
    %2158 = vmatprep.subr.mxu0 0.0
    %2159 = vmatpush2.msra.mxu0 0.0
    %2160 = vmatprep.subr.mxu0 0.0
    %2161 = vmatpush2.msra.mxu0 0.0
    %2162 = vmatprep.subr.mxu0 0.0
    %2163 = vmatpush2.msra.mxu0 0.0
    %2164 = vmatprep.subr.mxu0 0.0
    %2165 = vmatpush2.msra.mxu0 0.0
    %2166 = vmatprep.mubr.f32.mxu0 0.0
    %2167 = vmatmul.mubr.f32.gmra.mxu0 %v1950
    %v2168 = vpop.f32.mrf.mxu0
    %v2169 = vadd.f32 0.0, %v2168
    %v2170 = vpop.f32.mrf.mxu0
    %2171 = vdwg.mxu0
    %v2172 = vadd.f32 %v1957, %v2169
    %v2173 = vmul.f32 %v2099, 0.5
    %v2174 = vmul.f32 %v2100, 0.5
    %v2175 = vmul.f32 %v2101, 0.5
    %v2176 = vtanh.pop %v2173
    %v2177 = vtanh.pop %v2174
    %v2178 = vtanh.pop %v2175
    %v2179 = vmul.f32 %v2176, 0.5
    %v2180 = vmul.f32 %v2177, 0.5
    %v2181 = vmul.f32 %v2178, 0.5
    %v2182 = vadd.f32 %v2179, 0.5
    %v2183 = vadd.f32 %v2180, 0.5
    %v2184 = vadd.f32 %v2181, 0.5
    %v2185 = vtanh.pop %v2172
    %v2186 = vmul.f32 %v2183, %v1948
    %v2187 = vmul.f32 %v2182, %v2185
    %v2188 = vadd.f32 %v2186, %v2187
    %v2189 = vtanh.pop %v2188
    %v2190 = vmul.f32 %v2184, %v2189
    %s2191 = scalar_lea.vmem [#allocation3], 48
    %2192 = vst [vmem:[%s2191] sm:$0xff] %v2190
    %s2193 = scalar_lea.vmem [#allocation2], 224
    %v2194 = vld [vmem:[%s2193] sm:$0xff]
    %v2195 = vld [vmem:[%s2193 + $0x8] sm:$0xff]
    %v2196 = vld [vmem:[%s2193 + $0x10] sm:$0xff]
    %v2197 = vld [vmem:[%s2193 + $0x18] sm:$0xff]
    %2198 = vmatprep.subr.mxu0 %v209
    %2199 = vmatpush1.msra.mxu0 %v208
    %2200 = vmatprep.subr.mxu0 %v206
    %2201 = vmatpush1.msra.mxu0 %v205
    %2202 = vmatprep.subr.mxu0 %v203
    %2203 = vmatpush1.msra.mxu0 %v202
    %2204 = vmatprep.subr.mxu0 %v200
    %2205 = vmatpush1.msra.mxu0 %v199
    %2206 = vmatprep.subr.mxu0 %v197
    %2207 = vmatpush1.msra.mxu0 %v196
    %2208 = vmatprep.subr.mxu0 %v194
    %2209 = vmatpush1.msra.mxu0 %v193
    %2210 = vmatprep.subr.mxu0 %v191
    %2211 = vmatpush1.msra.mxu0 %v190
    %2212 = vmatprep.subr.mxu0 %v188
    %2213 = vmatpush1.msra.mxu0 %v187
    %2214 = vmatprep.subr.mxu0 %v185
    %2215 = vmatpush1.msra.mxu0 %v184
    %2216 = vmatprep.subr.mxu0 %v182
    %2217 = vmatpush1.msra.mxu0 %v181
    %2218 = vmatprep.subr.mxu0 %v179
    %2219 = vmatpush1.msra.mxu0 %v178
    %2220 = vmatprep.subr.mxu0 %v176
    %2221 = vmatpush1.msra.mxu0 %v175
    %2222 = vmatprep.subr.mxu0 %v173
    %2223 = vmatpush1.msra.mxu0 %v172
    %2224 = vmatprep.subr.mxu0 %v170
    %2225 = vmatpush1.msra.mxu0 %v169
    %2226 = vmatprep.subr.mxu0 %v167
    %2227 = vmatpush1.msra.mxu0 %v166
    %2228 = vmatprep.subr.mxu0 %v164
    %2229 = vmatpush1.msra.mxu0 %v163
    %2230 = vmatprep.subr.mxu0 0.0
    %2231 = vmatpush2.msra.mxu0 0.0
    %2232 = vmatprep.subr.mxu0 0.0
    %2233 = vmatpush2.msra.mxu0 0.0
    %2234 = vmatprep.subr.mxu0 0.0
    %2235 = vmatpush2.msra.mxu0 0.0
    %2236 = vmatprep.subr.mxu0 0.0
    %2237 = vmatpush2.msra.mxu0 0.0
    %2238 = vmatprep.subr.mxu0 0.0
    %2239 = vmatpush2.msra.mxu0 0.0
    %2240 = vmatprep.subr.mxu0 0.0
    %2241 = vmatpush2.msra.mxu0 0.0
    %2242 = vmatprep.subr.mxu0 0.0
    %2243 = vmatpush2.msra.mxu0 0.0
    %2244 = vmatprep.subr.mxu0 0.0
    %2245 = vmatpush2.msra.mxu0 0.0
    %2246 = vmatprep.subr.mxu0 0.0
    %2247 = vmatpush2.msra.mxu0 0.0
    %2248 = vmatprep.subr.mxu0 0.0
    %2249 = vmatpush2.msra.mxu0 0.0
    %2250 = vmatprep.subr.mxu0 0.0
    %2251 = vmatpush2.msra.mxu0 0.0
    %2252 = vmatprep.subr.mxu0 0.0
    %2253 = vmatpush2.msra.mxu0 0.0
    %2254 = vmatprep.subr.mxu0 0.0
    %2255 = vmatpush2.msra.mxu0 0.0
    %2256 = vmatprep.subr.mxu0 0.0
    %2257 = vmatpush2.msra.mxu0 0.0
    %2258 = vmatprep.subr.mxu0 0.0
    %2259 = vmatpush2.msra.mxu0 0.0
    %2260 = vmatprep.subr.mxu0 0.0
    %2261 = vmatpush2.msra.mxu0 0.0
    %2262 = vmatprep.mubr.f32.mxu0 0.0
    %2263 = vmatmul.mubr.f32.gmra.mxu0 %v2190
    %v2264 = vpop.f32.mrf.mxu0
    %v2265 = vadd.f32 0.0, %v2264
    %v2266 = vpop.f32.mrf.mxu0
    %v2267 = vadd.f32 0.0, %v2266
    %2268 = vdwg.mxu0
    %2269 = vmatprep.subr.mxu0 0.0
    %2270 = vmatpush1.msra.mxu0 %v210
    %2271 = vmatprep.subr.mxu0 0.0
    %2272 = vmatpush1.msra.mxu0 %v207
    %2273 = vmatprep.subr.mxu0 0.0
    %2274 = vmatpush1.msra.mxu0 %v204
    %2275 = vmatprep.subr.mxu0 0.0
    %2276 = vmatpush1.msra.mxu0 %v201
    %2277 = vmatprep.subr.mxu0 0.0
    %2278 = vmatpush1.msra.mxu0 %v198
    %2279 = vmatprep.subr.mxu0 0.0
    %2280 = vmatpush1.msra.mxu0 %v195
    %2281 = vmatprep.subr.mxu0 0.0
    %2282 = vmatpush1.msra.mxu0 %v192
    %2283 = vmatprep.subr.mxu0 0.0
    %2284 = vmatpush1.msra.mxu0 %v189
    %2285 = vmatprep.subr.mxu0 0.0
    %2286 = vmatpush1.msra.mxu0 %v186
    %2287 = vmatprep.subr.mxu0 0.0
    %2288 = vmatpush1.msra.mxu0 %v183
    %2289 = vmatprep.subr.mxu0 0.0
    %2290 = vmatpush1.msra.mxu0 %v180
    %2291 = vmatprep.subr.mxu0 0.0
    %2292 = vmatpush1.msra.mxu0 %v177
    %2293 = vmatprep.subr.mxu0 0.0
    %2294 = vmatpush1.msra.mxu0 %v174
    %2295 = vmatprep.subr.mxu0 0.0
    %2296 = vmatpush1.msra.mxu0 %v171
    %2297 = vmatprep.subr.mxu0 0.0
    %2298 = vmatpush1.msra.mxu0 %v168
    %2299 = vmatprep.subr.mxu0 0.0
    %2300 = vmatpush1.msra.mxu0 %v165
    %2301 = vmatprep.subr.mxu0 0.0
    %2302 = vmatpush2.msra.mxu0 0.0
    %2303 = vmatprep.subr.mxu0 0.0
    %2304 = vmatpush2.msra.mxu0 0.0
    %2305 = vmatprep.subr.mxu0 0.0
    %2306 = vmatpush2.msra.mxu0 0.0
    %2307 = vmatprep.subr.mxu0 0.0
    %2308 = vmatpush2.msra.mxu0 0.0
    %2309 = vmatprep.subr.mxu0 0.0
    %2310 = vmatpush2.msra.mxu0 0.0
    %2311 = vmatprep.subr.mxu0 0.0
    %2312 = vmatpush2.msra.mxu0 0.0
    %2313 = vmatprep.subr.mxu0 0.0
    %2314 = vmatpush2.msra.mxu0 0.0
    %2315 = vmatprep.subr.mxu0 0.0
    %2316 = vmatpush2.msra.mxu0 0.0
    %2317 = vmatprep.subr.mxu0 0.0
    %2318 = vmatpush2.msra.mxu0 0.0
    %2319 = vmatprep.subr.mxu0 0.0
    %2320 = vmatpush2.msra.mxu0 0.0
    %2321 = vmatprep.subr.mxu0 0.0
    %2322 = vmatpush2.msra.mxu0 0.0
    %2323 = vmatprep.subr.mxu0 0.0
    %2324 = vmatpush2.msra.mxu0 0.0
    %2325 = vmatprep.subr.mxu0 0.0
    %2326 = vmatpush2.msra.mxu0 0.0
    %2327 = vmatprep.subr.mxu0 0.0
    %2328 = vmatpush2.msra.mxu0 0.0
    %2329 = vmatprep.subr.mxu0 0.0
    %2330 = vmatpush2.msra.mxu0 0.0
    %2331 = vmatprep.subr.mxu0 0.0
    %2332 = vmatpush2.msra.mxu0 0.0
    %2333 = vmatprep.mubr.f32.mxu0 0.0
    %2334 = vmatmul.mubr.f32.gmra.mxu0 %v2190
    %v2335 = vpop.f32.mrf.mxu0
    %v2336 = vadd.f32 0.0, %v2335
    %v2337 = vpop.f32.mrf.mxu0
    %2338 = vdwg.mxu0
    %v2339 = vadd.f32 %v2194, %v2265
    %v2340 = vadd.f32 %v2195, %v2267
    %v2341 = vadd.f32 %v2196, %v2336
    %2342 = vmatprep.subr.mxu0 0.0
    %2343 = vmatpush1.msra.mxu0 %v226
    %2344 = vmatprep.subr.mxu0 0.0
    %2345 = vmatpush1.msra.mxu0 %v225
    %2346 = vmatprep.subr.mxu0 0.0
    %2347 = vmatpush1.msra.mxu0 %v224
    %2348 = vmatprep.subr.mxu0 0.0
    %2349 = vmatpush1.msra.mxu0 %v223
    %2350 = vmatprep.subr.mxu0 0.0
    %2351 = vmatpush1.msra.mxu0 %v222
    %2352 = vmatprep.subr.mxu0 0.0
    %2353 = vmatpush1.msra.mxu0 %v221
    %2354 = vmatprep.subr.mxu0 0.0
    %2355 = vmatpush1.msra.mxu0 %v220
    %2356 = vmatprep.subr.mxu0 0.0
    %2357 = vmatpush1.msra.mxu0 %v219
    %2358 = vmatprep.subr.mxu0 0.0
    %2359 = vmatpush1.msra.mxu0 %v218
    %2360 = vmatprep.subr.mxu0 0.0
    %2361 = vmatpush1.msra.mxu0 %v217
    %2362 = vmatprep.subr.mxu0 0.0
    %2363 = vmatpush1.msra.mxu0 %v216
    %2364 = vmatprep.subr.mxu0 0.0
    %2365 = vmatpush1.msra.mxu0 %v215
    %2366 = vmatprep.subr.mxu0 0.0
    %2367 = vmatpush1.msra.mxu0 %v214
    %2368 = vmatprep.subr.mxu0 0.0
    %2369 = vmatpush1.msra.mxu0 %v213
    %2370 = vmatprep.subr.mxu0 0.0
    %2371 = vmatpush1.msra.mxu0 %v212
    %2372 = vmatprep.subr.mxu0 0.0
    %2373 = vmatpush1.msra.mxu0 %v211
    %2374 = vmatprep.subr.mxu0 0.0
    %2375 = vmatpush2.msra.mxu0 0.0
    %2376 = vmatprep.subr.mxu0 0.0
    %2377 = vmatpush2.msra.mxu0 0.0
    %2378 = vmatprep.subr.mxu0 0.0
    %2379 = vmatpush2.msra.mxu0 0.0
    %2380 = vmatprep.subr.mxu0 0.0
    %2381 = vmatpush2.msra.mxu0 0.0
    %2382 = vmatprep.subr.mxu0 0.0
    %2383 = vmatpush2.msra.mxu0 0.0
    %2384 = vmatprep.subr.mxu0 0.0
    %2385 = vmatpush2.msra.mxu0 0.0
    %2386 = vmatprep.subr.mxu0 0.0
    %2387 = vmatpush2.msra.mxu0 0.0
    %2388 = vmatprep.subr.mxu0 0.0
    %2389 = vmatpush2.msra.mxu0 0.0
    %2390 = vmatprep.subr.mxu0 0.0
    %2391 = vmatpush2.msra.mxu0 0.0
    %2392 = vmatprep.subr.mxu0 0.0
    %2393 = vmatpush2.msra.mxu0 0.0
    %2394 = vmatprep.subr.mxu0 0.0
    %2395 = vmatpush2.msra.mxu0 0.0
    %2396 = vmatprep.subr.mxu0 0.0
    %2397 = vmatpush2.msra.mxu0 0.0
    %2398 = vmatprep.subr.mxu0 0.0
    %2399 = vmatpush2.msra.mxu0 0.0
    %2400 = vmatprep.subr.mxu0 0.0
    %2401 = vmatpush2.msra.mxu0 0.0
    %2402 = vmatprep.subr.mxu0 0.0
    %2403 = vmatpush2.msra.mxu0 0.0
    %2404 = vmatprep.subr.mxu0 0.0
    %2405 = vmatpush2.msra.mxu0 0.0
    %2406 = vmatprep.mubr.f32.mxu0 0.0
    %2407 = vmatmul.mubr.f32.gmra.mxu0 %v2190
    %v2408 = vpop.f32.mrf.mxu0
    %v2409 = vadd.f32 0.0, %v2408
    %v2410 = vpop.f32.mrf.mxu0
    %2411 = vdwg.mxu0
    %v2412 = vadd.f32 %v2197, %v2409
    %v2413 = vmul.f32 %v2339, 0.5
    %v2414 = vmul.f32 %v2340, 0.5
    %v2415 = vmul.f32 %v2341, 0.5
    %v2416 = vtanh.pop %v2413
    %v2417 = vtanh.pop %v2414
    %v2418 = vtanh.pop %v2415
    %v2419 = vmul.f32 %v2416, 0.5
    %v2420 = vmul.f32 %v2417, 0.5
    %v2421 = vmul.f32 %v2418, 0.5
    %v2422 = vadd.f32 %v2419, 0.5
    %v2423 = vadd.f32 %v2420, 0.5
    %v2424 = vadd.f32 %v2421, 0.5
    %v2425 = vtanh.pop %v2412
    %v2426 = vmul.f32 %v2423, %v2188
    %v2427 = vmul.f32 %v2422, %v2425
    %v2428 = vadd.f32 %v2426, %v2427
    %v2429 = vtanh.pop %v2428
    %v2430 = vmul.f32 %v2424, %v2429
    %s2431 = scalar_lea.vmem [#allocation3], 56
    %2432 = vst [vmem:[%s2431] sm:$0xff] %v2430
    %v2433 = vld [vmem:[#allocation9] sm:$0xff]
    %v2434 = vld [vmem:[#allocation9 + $0x8] sm:$0xff]
    %v2435 = vld [vmem:[#allocation9 + $0x10] sm:$0xff]
    %v2436 = vld [vmem:[#allocation9 + $0x18] sm:$0xff]
    %v2437 = vld [vmem:[#allocation9 + $0x20] sm:$0xff]
    %v2438 = vld [vmem:[#allocation9 + $0x28] sm:$0xff]
    %v2439 = vld [vmem:[#allocation9 + $0x30] sm:$0xff]
    %v2440 = vld [vmem:[#allocation9 + $0x38] sm:$0xff]
    %v2441 = vld [vmem:[#allocation9 + $0x40] sm:$0xff]
    %v2442 = vld [vmem:[#allocation9 + $0x48] sm:$0xff]
    %v2443 = vld [vmem:[#allocation9 + $0x50] sm:$0xff]
    %v2444 = vld [vmem:[#allocation9 + $0x58] sm:$0xff]
    %v2445 = vld [vmem:[#allocation9 + $0x60] sm:$0xff]
    %v2446 = vld [vmem:[#allocation9 + $0x68] sm:$0xff]
    %v2447 = vld [vmem:[#allocation9 + $0x70] sm:$0xff]
    %v2448 = vld [vmem:[#allocation9 + $0x78] sm:$0xff]
    %v2449 = vld [vmem:[#allocation9 + $0x80] sm:$0xff]
    %v2450 = vld [vmem:[#allocation9 + $0x88] sm:$0xff]
    %v2451 = vld [vmem:[#allocation9 + $0x90] sm:$0xff]
    %v2452 = vld [vmem:[#allocation9 + $0x98] sm:$0xff]
    %v2453 = vld [vmem:[#allocation9 + $0xa0] sm:$0xff]
    %v2454 = vld [vmem:[#allocation9 + $0xa8] sm:$0xff]
    %v2455 = vld [vmem:[#allocation9 + $0xb0] sm:$0xff]
    %v2456 = vld [vmem:[#allocation9 + $0xb8] sm:$0xff]
    %v2457 = vld [vmem:[#allocation9 + $0xc0] sm:$0xff]
    %v2458 = vld [vmem:[#allocation9 + $0xc8] sm:$0xff]
    %v2459 = vld [vmem:[#allocation9 + $0xd0] sm:$0xff]
    %v2460 = vld [vmem:[#allocation9 + $0xd8] sm:$0xff]
    %v2461 = vld [vmem:[#allocation9 + $0xe0] sm:$0xff]
    %v2462 = vld [vmem:[#allocation9 + $0xe8] sm:$0xff]
    %v2463 = vld [vmem:[#allocation9 + $0xf0] sm:$0xff]
    %v2464 = vld [vmem:[#allocation9 + $0xf8] sm:$0xff]
    %v2465 = vld [vmem:[#allocation9 + $0x100] sm:$0xff]
    %v2466 = vld [vmem:[#allocation9 + $0x108] sm:$0xff]
    %v2467 = vld [vmem:[#allocation9 + $0x110] sm:$0xff]
    %v2468 = vld [vmem:[#allocation9 + $0x118] sm:$0xff]
    %v2469 = vld [vmem:[#allocation9 + $0x120] sm:$0xff]
    %v2470 = vld [vmem:[#allocation9 + $0x128] sm:$0xff]
    %v2471 = vld [vmem:[#allocation9 + $0x130] sm:$0xff]
    %v2472 = vld [vmem:[#allocation9 + $0x138] sm:$0xff]
    %v2473 = vld [vmem:[#allocation9 + $0x140] sm:$0xff]
    %v2474 = vld [vmem:[#allocation9 + $0x148] sm:$0xff]
    %v2475 = vld [vmem:[#allocation9 + $0x150] sm:$0xff]
    %v2476 = vld [vmem:[#allocation9 + $0x158] sm:$0xff]
    %v2477 = vld [vmem:[#allocation9 + $0x160] sm:$0xff]
    %v2478 = vld [vmem:[#allocation9 + $0x168] sm:$0xff]
    %v2479 = vld [vmem:[#allocation9 + $0x170] sm:$0xff]
    %v2480 = vld [vmem:[#allocation9 + $0x178] sm:$0xff]
    %v2481 = vld [vmem:[#allocation9 + $0x180] sm:$0xff]
    %v2482 = vld [vmem:[#allocation9 + $0x188] sm:$0xff]
    %v2483 = vld [vmem:[#allocation9 + $0x190] sm:$0xff]
    %v2484 = vld [vmem:[#allocation9 + $0x198] sm:$0xff]
    %v2485 = vld [vmem:[#allocation9 + $0x1a0] sm:$0xff]
    %v2486 = vld [vmem:[#allocation9 + $0x1a8] sm:$0xff]
    %v2487 = vld [vmem:[#allocation9 + $0x1b0] sm:$0xff]
    %v2488 = vld [vmem:[#allocation9 + $0x1b8] sm:$0xff]
    %v2489 = vld [vmem:[#allocation9 + $0x1c0] sm:$0xff]
    %v2490 = vld [vmem:[#allocation9 + $0x1c8] sm:$0xff]
    %v2491 = vld [vmem:[#allocation9 + $0x1d0] sm:$0xff]
    %v2492 = vld [vmem:[#allocation9 + $0x1d8] sm:$0xff]
    %v2493 = vld [vmem:[#allocation9 + $0x1e0] sm:$0xff]
    %v2494 = vld [vmem:[#allocation9 + $0x1e8] sm:$0xff]
    %v2495 = vld [vmem:[#allocation9 + $0x1f0] sm:$0xff]
    %v2496 = vld [vmem:[#allocation9 + $0x1f8] sm:$0xff]
    %s2497 = scalar_lea.vmem [#allocation10], 384
    %v2498 = vld [vmem:[%s2497] sm:$0xff]
    %v2499 = vld [vmem:[%s2497 + $0x8] sm:$0xff]
    %v2500 = vld [vmem:[%s2497 + $0x10] sm:$0xff]
    %v2501 = vld [vmem:[%s2497 + $0x18] sm:$0xff]
    %v2502 = vld [vmem:[%s2497 + $0x20] sm:$0xff]
    %v2503 = vld [vmem:[%s2497 + $0x28] sm:$0xff]
    %v2504 = vld [vmem:[%s2497 + $0x30] sm:$0xff]
    %v2505 = vld [vmem:[%s2497 + $0x38] sm:$0xff]
    %v2506 = vld [vmem:[%s2497 + $0x40] sm:$0xff]
    %v2507 = vld [vmem:[%s2497 + $0x48] sm:$0xff]
    %v2508 = vld [vmem:[%s2497 + $0x50] sm:$0xff]
    %v2509 = vld [vmem:[%s2497 + $0x58] sm:$0xff]
    %v2510 = vld [vmem:[%s2497 + $0x60] sm:$0xff]
    %v2511 = vld [vmem:[%s2497 + $0x68] sm:$0xff]
    %v2512 = vld [vmem:[%s2497 + $0x70] sm:$0xff]
    %v2513 = vld [vmem:[%s2497 + $0x78] sm:$0xff]
    %v2514 = vld [vmem:[%s2497 + $0x80] sm:$0xff]
    %v2515 = vld [vmem:[%s2497 + $0x88] sm:$0xff]
    %v2516 = vld [vmem:[%s2497 + $0x90] sm:$0xff]
    %v2517 = vld [vmem:[%s2497 + $0x98] sm:$0xff]
    %v2518 = vld [vmem:[%s2497 + $0xa0] sm:$0xff]
    %v2519 = vld [vmem:[%s2497 + $0xa8] sm:$0xff]
    %v2520 = vld [vmem:[%s2497 + $0xb0] sm:$0xff]
    %v2521 = vld [vmem:[%s2497 + $0xb8] sm:$0xff]
    %v2522 = vld [vmem:[%s2497 + $0xc0] sm:$0xff]
    %v2523 = vld [vmem:[%s2497 + $0xc8] sm:$0xff]
    %v2524 = vld [vmem:[%s2497 + $0xd0] sm:$0xff]
    %v2525 = vld [vmem:[%s2497 + $0xd8] sm:$0xff]
    %v2526 = vld [vmem:[%s2497 + $0xe0] sm:$0xff]
    %v2527 = vld [vmem:[%s2497 + $0xe8] sm:$0xff]
    %v2528 = vld [vmem:[%s2497 + $0xf0] sm:$0xff]
    %v2529 = vld [vmem:[%s2497 + $0xf8] sm:$0xff]
    %v2530 = vld [vmem:[%s2497 + $0x100] sm:$0xff]
    %v2531 = vld [vmem:[%s2497 + $0x108] sm:$0xff]
    %v2532 = vld [vmem:[%s2497 + $0x110] sm:$0xff]
    %v2533 = vld [vmem:[%s2497 + $0x118] sm:$0xff]
    %v2534 = vld [vmem:[%s2497 + $0x120] sm:$0xff]
    %v2535 = vld [vmem:[%s2497 + $0x128] sm:$0xff]
    %v2536 = vld [vmem:[%s2497 + $0x130] sm:$0xff]
    %v2537 = vld [vmem:[%s2497 + $0x138] sm:$0xff]
    %v2538 = vld [vmem:[%s2497 + $0x140] sm:$0xff]
    %v2539 = vld [vmem:[%s2497 + $0x148] sm:$0xff]
    %v2540 = vld [vmem:[%s2497 + $0x150] sm:$0xff]
    %v2541 = vld [vmem:[%s2497 + $0x158] sm:$0xff]
    %v2542 = vld [vmem:[%s2497 + $0x160] sm:$0xff]
    %v2543 = vld [vmem:[%s2497 + $0x168] sm:$0xff]
    %v2544 = vld [vmem:[%s2497 + $0x170] sm:$0xff]
    %v2545 = vld [vmem:[%s2497 + $0x178] sm:$0xff]
    %s2546 = scalar_lea.vmem [#allocation12], 128
    %v2547 = vld [vmem:[%s2546] sm:$0xff]
    %v2548 = vld [vmem:[%s2546 + $0x8] sm:$0xff]
    %v2549 = vld [vmem:[%s2546 + $0x10] sm:$0xff]
    %v2550 = vld [vmem:[%s2546 + $0x18] sm:$0xff]
    %v2551 = vld [vmem:[%s2546 + $0x20] sm:$0xff]
    %v2552 = vld [vmem:[%s2546 + $0x28] sm:$0xff]
    %v2553 = vld [vmem:[%s2546 + $0x30] sm:$0xff]
    %v2554 = vld [vmem:[%s2546 + $0x38] sm:$0xff]
    %v2555 = vld [vmem:[%s2546 + $0x40] sm:$0xff]
    %v2556 = vld [vmem:[%s2546 + $0x48] sm:$0xff]
    %v2557 = vld [vmem:[%s2546 + $0x50] sm:$0xff]
    %v2558 = vld [vmem:[%s2546 + $0x58] sm:$0xff]
    %v2559 = vld [vmem:[%s2546 + $0x60] sm:$0xff]
    %v2560 = vld [vmem:[%s2546 + $0x68] sm:$0xff]
    %v2561 = vld [vmem:[%s2546 + $0x70] sm:$0xff]
    %v2562 = vld [vmem:[%s2546 + $0x78] sm:$0xff]
    %s2563 = scalar_lea.vmem %s5, 4
    %v2564 = vld [vmem:[%s2563] sm:$0xf]
    %v2565 = vld [vmem:[#allocation3] sm:$0xff]
    %v2566 = vld [vmem:[#allocation3 + $0x8] sm:$0xff]
    %v2567 = vld [vmem:[#allocation3 + $0x10] sm:$0xff]
    %v2568 = vld [vmem:[#allocation3 + $0x18] sm:$0xff]
    %v2569 = vld [vmem:[#allocation3 + $0x20] sm:$0xff]
    %v2570 = vld [vmem:[#allocation3 + $0x28] sm:$0xff]
    %v2571 = vld [vmem:[#allocation3 + $0x30] sm:$0xff]
    %v2572 = vld [vmem:[#allocation3 + $0x38] sm:$0xff]
    %v2574 = vlaneseq
    %v2575 = vshrl.u32 %v2574, 7
    %v2576 = vsub.s32 0, %v2575
    %v2577 = vrot.slane %v2564, %v2576
    %v2578 = vlaneseq
    %v2579 = vshrl.u32 %v2578, 7
    %v2580 = vsub.s32 1, %v2579
    %v2581 = vrot.slane %v2564, %v2580
    %v2582 = vlaneseq
    %v2583 = vshrl.u32 %v2582, 7
    %v2584 = vsub.s32 2, %v2583
    %v2585 = vrot.slane %v2564, %v2584
    %v2586 = vlaneseq
    %v2587 = vshrl.u32 %v2586, 7
    %v2588 = vsub.s32 3, %v2587
    %v2589 = vrot.slane %v2564, %v2588
    %2594 = vmatprep.subr.mxu0 %v2494
    %2595 = vmatpush1.msra.mxu0 %v2493
    %2596 = vmatprep.subr.mxu0 %v2490
    %2597 = vmatpush1.msra.mxu0 %v2489
    %2598 = vmatprep.subr.mxu0 %v2486
    %2599 = vmatpush1.msra.mxu0 %v2485
    %2600 = vmatprep.subr.mxu0 %v2482
    %2601 = vmatpush1.msra.mxu0 %v2481
    %2602 = vmatprep.subr.mxu0 %v2478
    %2603 = vmatpush1.msra.mxu0 %v2477
    %2604 = vmatprep.subr.mxu0 %v2474
    %2605 = vmatpush1.msra.mxu0 %v2473
    %2606 = vmatprep.subr.mxu0 %v2470
    %2607 = vmatpush1.msra.mxu0 %v2469
    %2608 = vmatprep.subr.mxu0 %v2466
    %2609 = vmatpush1.msra.mxu0 %v2465
    %2610 = vmatprep.subr.mxu0 %v2462
    %2611 = vmatpush1.msra.mxu0 %v2461
    %2612 = vmatprep.subr.mxu0 %v2458
    %2613 = vmatpush1.msra.mxu0 %v2457
    %2614 = vmatprep.subr.mxu0 %v2454
    %2615 = vmatpush1.msra.mxu0 %v2453
    %2616 = vmatprep.subr.mxu0 %v2450
    %2617 = vmatpush1.msra.mxu0 %v2449
    %2618 = vmatprep.subr.mxu0 %v2446
    %2619 = vmatpush1.msra.mxu0 %v2445
    %2620 = vmatprep.subr.mxu0 %v2442
    %2621 = vmatpush1.msra.mxu0 %v2441
    %2622 = vmatprep.subr.mxu0 %v2438
    %2623 = vmatpush1.msra.mxu0 %v2437
    %2624 = vmatprep.subr.mxu0 %v2434
    %2625 = vmatpush1.msra.mxu0 %v2433
    %2626 = vmatprep.subr.mxu0 0.0
    %2627 = vmatpush2.msra.mxu0 0.0
    %2628 = vmatprep.subr.mxu0 0.0
    %2629 = vmatpush2.msra.mxu0 0.0
    %2630 = vmatprep.subr.mxu0 0.0
    %2631 = vmatpush2.msra.mxu0 0.0
    %2632 = vmatprep.subr.mxu0 0.0
    %2633 = vmatpush2.msra.mxu0 0.0
    %2634 = vmatprep.subr.mxu0 0.0
    %2635 = vmatpush2.msra.mxu0 0.0
    %2636 = vmatprep.subr.mxu0 0.0
    %2637 = vmatpush2.msra.mxu0 0.0
    %2638 = vmatprep.subr.mxu0 0.0
    %2639 = vmatpush2.msra.mxu0 0.0
    %2640 = vmatprep.subr.mxu0 0.0
    %2641 = vmatpush2.msra.mxu0 0.0
    %2642 = vmatprep.subr.mxu0 0.0
    %2643 = vmatpush2.msra.mxu0 0.0
    %2644 = vmatprep.subr.mxu0 0.0
    %2645 = vmatpush2.msra.mxu0 0.0
    %2646 = vmatprep.subr.mxu0 0.0
    %2647 = vmatpush2.msra.mxu0 0.0
    %2648 = vmatprep.subr.mxu0 0.0
    %2649 = vmatpush2.msra.mxu0 0.0
    %2650 = vmatprep.subr.mxu0 0.0
    %2651 = vmatpush2.msra.mxu0 0.0
    %2652 = vmatprep.subr.mxu0 0.0
    %2653 = vmatpush2.msra.mxu0 0.0
    %2654 = vmatprep.subr.mxu0 0.0
    %2655 = vmatpush2.msra.mxu0 0.0
    %2656 = vmatprep.subr.mxu0 0.0
    %2657 = vmatpush2.msra.mxu0 0.0
    %2658 = vmatprep.mubr.f32.mxu0 0.0
    %2659 = vmatmul.mubr.f32.gmra.mxu0 %v2565
    %v2660 = vpop.f32.mrf.mxu0
    %v2661 = vadd.f32 %v2577, %v2660
    %v2662 = vpop.f32.mrf.mxu0
    %v2663 = vadd.f32 %v2581, %v2662
    %2664 = vmatprep.mubr.f32.mxu0 0.0
    %2665 = vmatmul.mubr.f32.gmra.mxu0 %v2566
    %v2666 = vpop.f32.mrf.mxu0
    %v2667 = vadd.f32 %v2577, %v2666
    %v2668 = vpop.f32.mrf.mxu0
    %v2669 = vadd.f32 %v2581, %v2668
    %2670 = vmatprep.mubr.f32.mxu0 0.0
    %2671 = vmatmul.mubr.f32.gmra.mxu0 %v2567
    %v2672 = vpop.f32.mrf.mxu0
    %v2673 = vadd.f32 %v2577, %v2672
    %v2674 = vpop.f32.mrf.mxu0
    %v2675 = vadd.f32 %v2581, %v2674
    %2676 = vmatprep.mubr.f32.mxu0 0.0
    %2677 = vmatmul.mubr.f32.gmra.mxu0 %v2568
    %v2678 = vpop.f32.mrf.mxu0
    %v2679 = vadd.f32 %v2577, %v2678
    %v2680 = vpop.f32.mrf.mxu0
    %v2681 = vadd.f32 %v2581, %v2680
    %2682 = vmatprep.mubr.f32.mxu0 0.0
    %2683 = vmatmul.mubr.f32.gmra.mxu0 %v2569
    %v2684 = vpop.f32.mrf.mxu0
    %v2685 = vadd.f32 %v2577, %v2684
    %v2686 = vpop.f32.mrf.mxu0
    %v2687 = vadd.f32 %v2581, %v2686
    %2688 = vmatprep.mubr.f32.mxu0 0.0
    %2689 = vmatmul.mubr.f32.gmra.mxu0 %v2570
    %v2690 = vpop.f32.mrf.mxu0
    %v2691 = vadd.f32 %v2577, %v2690
    %v2692 = vpop.f32.mrf.mxu0
    %v2693 = vadd.f32 %v2581, %v2692
    %2694 = vmatprep.mubr.f32.mxu0 0.0
    %2695 = vmatmul.mubr.f32.gmra.mxu0 %v2571
    %v2696 = vpop.f32.mrf.mxu0
    %v2697 = vadd.f32 %v2577, %v2696
    %v2698 = vpop.f32.mrf.mxu0
    %v2699 = vadd.f32 %v2581, %v2698
    %2700 = vmatprep.mubr.f32.mxu0 0.0
    %2701 = vmatmul.mubr.f32.gmra.mxu0 %v2572
    %v2702 = vpop.f32.mrf.mxu0
    %v2703 = vadd.f32 %v2577, %v2702
    %v2704 = vpop.f32.mrf.mxu0
    %v2705 = vadd.f32 %v2581, %v2704
    %2706 = vdwg.mxu0
    %2707 = vmatprep.subr.mxu0 %v2496
    %2708 = vmatpush1.msra.mxu0 %v2495
    %2709 = vmatprep.subr.mxu0 %v2492
    %2710 = vmatpush1.msra.mxu0 %v2491
    %2711 = vmatprep.subr.mxu0 %v2488
    %2712 = vmatpush1.msra.mxu0 %v2487
    %2713 = vmatprep.subr.mxu0 %v2484
    %2714 = vmatpush1.msra.mxu0 %v2483
    %2715 = vmatprep.subr.mxu0 %v2480
    %2716 = vmatpush1.msra.mxu0 %v2479
    %2717 = vmatprep.subr.mxu0 %v2476
    %2718 = vmatpush1.msra.mxu0 %v2475
    %2719 = vmatprep.subr.mxu0 %v2472
    %2720 = vmatpush1.msra.mxu0 %v2471
    %2721 = vmatprep.subr.mxu0 %v2468
    %2722 = vmatpush1.msra.mxu0 %v2467
    %2723 = vmatprep.subr.mxu0 %v2464
    %2724 = vmatpush1.msra.mxu0 %v2463
    %2725 = vmatprep.subr.mxu0 %v2460
    %2726 = vmatpush1.msra.mxu0 %v2459
    %2727 = vmatprep.subr.mxu0 %v2456
    %2728 = vmatpush1.msra.mxu0 %v2455
    %2729 = vmatprep.subr.mxu0 %v2452
    %2730 = vmatpush1.msra.mxu0 %v2451
    %2731 = vmatprep.subr.mxu0 %v2448
    %2732 = vmatpush1.msra.mxu0 %v2447
    %2733 = vmatprep.subr.mxu0 %v2444
    %2734 = vmatpush1.msra.mxu0 %v2443
    %2735 = vmatprep.subr.mxu0 %v2440
    %2736 = vmatpush1.msra.mxu0 %v2439
    %2737 = vmatprep.subr.mxu0 %v2436
    %2738 = vmatpush1.msra.mxu0 %v2435
    %2739 = vmatprep.subr.mxu0 0.0
    %2740 = vmatpush2.msra.mxu0 0.0
    %2741 = vmatprep.subr.mxu0 0.0
    %2742 = vmatpush2.msra.mxu0 0.0
    %2743 = vmatprep.subr.mxu0 0.0
    %2744 = vmatpush2.msra.mxu0 0.0
    %2745 = vmatprep.subr.mxu0 0.0
    %2746 = vmatpush2.msra.mxu0 0.0
    %2747 = vmatprep.subr.mxu0 0.0
    %2748 = vmatpush2.msra.mxu0 0.0
    %2749 = vmatprep.subr.mxu0 0.0
    %2750 = vmatpush2.msra.mxu0 0.0
    %2751 = vmatprep.subr.mxu0 0.0
    %2752 = vmatpush2.msra.mxu0 0.0
    %2753 = vmatprep.subr.mxu0 0.0
    %2754 = vmatpush2.msra.mxu0 0.0
    %2755 = vmatprep.subr.mxu0 0.0
    %2756 = vmatpush2.msra.mxu0 0.0
    %2757 = vmatprep.subr.mxu0 0.0
    %2758 = vmatpush2.msra.mxu0 0.0
    %2759 = vmatprep.subr.mxu0 0.0
    %2760 = vmatpush2.msra.mxu0 0.0
    %2761 = vmatprep.subr.mxu0 0.0
    %2762 = vmatpush2.msra.mxu0 0.0
    %2763 = vmatprep.subr.mxu0 0.0
    %2764 = vmatpush2.msra.mxu0 0.0
    %2765 = vmatprep.subr.mxu0 0.0
    %2766 = vmatpush2.msra.mxu0 0.0
    %2767 = vmatprep.subr.mxu0 0.0
    %2768 = vmatpush2.msra.mxu0 0.0
    %2769 = vmatprep.subr.mxu0 0.0
    %2770 = vmatpush2.msra.mxu0 0.0
    %2771 = vmatprep.mubr.f32.mxu0 0.0
    %2772 = vmatmul.mubr.f32.gmra.mxu0 %v2565
    %v2773 = vpop.f32.mrf.mxu0
    %v2774 = vadd.f32 %v2585, %v2773
    %v2775 = vpop.f32.mrf.mxu0
    %v2776 = vadd.f32 %v2589, %v2775
    %2777 = vmatprep.mubr.f32.mxu0 0.0
    %2778 = vmatmul.mubr.f32.gmra.mxu0 %v2566
    %v2779 = vpop.f32.mrf.mxu0
    %v2780 = vadd.f32 %v2585, %v2779
    %v2781 = vpop.f32.mrf.mxu0
    %v2782 = vadd.f32 %v2589, %v2781
    %2783 = vmatprep.mubr.f32.mxu0 0.0
    %2784 = vmatmul.mubr.f32.gmra.mxu0 %v2567
    %v2785 = vpop.f32.mrf.mxu0
    %v2786 = vadd.f32 %v2585, %v2785
    %v2787 = vpop.f32.mrf.mxu0
    %v2788 = vadd.f32 %v2589, %v2787
    %2789 = vmatprep.mubr.f32.mxu0 0.0
    %2790 = vmatmul.mubr.f32.gmra.mxu0 %v2568
    %v2791 = vpop.f32.mrf.mxu0
    %v2792 = vadd.f32 %v2585, %v2791
    %v2793 = vpop.f32.mrf.mxu0
    %v2794 = vadd.f32 %v2589, %v2793
    %2795 = vmatprep.mubr.f32.mxu0 0.0
    %2796 = vmatmul.mubr.f32.gmra.mxu0 %v2569
    %v2797 = vpop.f32.mrf.mxu0
    %v2798 = vadd.f32 %v2585, %v2797
    %v2799 = vpop.f32.mrf.mxu0
    %v2800 = vadd.f32 %v2589, %v2799
    %2801 = vmatprep.mubr.f32.mxu0 0.0
    %2802 = vmatmul.mubr.f32.gmra.mxu0 %v2570
    %v2803 = vpop.f32.mrf.mxu0
    %v2804 = vadd.f32 %v2585, %v2803
    %v2805 = vpop.f32.mrf.mxu0
    %v2806 = vadd.f32 %v2589, %v2805
    %2807 = vmatprep.mubr.f32.mxu0 0.0
    %2808 = vmatmul.mubr.f32.gmra.mxu0 %v2571
    %v2809 = vpop.f32.mrf.mxu0
    %v2810 = vadd.f32 %v2585, %v2809
    %v2811 = vpop.f32.mrf.mxu0
    %v2812 = vadd.f32 %v2589, %v2811
    %2813 = vmatprep.mubr.f32.mxu0 0.0
    %2814 = vmatmul.mubr.f32.gmra.mxu0 %v2572
    %v2815 = vpop.f32.mrf.mxu0
    %v2816 = vadd.f32 %v2585, %v2815
    %v2817 = vpop.f32.mrf.mxu0
    %v2818 = vadd.f32 %v2589, %v2817
    %2819 = vdwg.mxu0
    %2820 = vst [vmem:[#allocation2] sm:$0xff] %v2661
    %2821 = vst [vmem:[#allocation2 + $0x8] sm:$0xff] %v2663
    %2822 = vst [vmem:[#allocation2 + $0x10] sm:$0xff] %v2774
    %2823 = vst [vmem:[#allocation2 + $0x18] sm:$0xff] %v2776
    %2824 = vst [vmem:[#allocation2 + $0x20] sm:$0xff] %v2667
    %2825 = vst [vmem:[#allocation2 + $0x28] sm:$0xff] %v2669
    %2826 = vst [vmem:[#allocation2 + $0x30] sm:$0xff] %v2780
    %2827 = vst [vmem:[#allocation2 + $0x38] sm:$0xff] %v2782
    %2828 = vst [vmem:[#allocation2 + $0x40] sm:$0xff] %v2673
    %2829 = vst [vmem:[#allocation2 + $0x48] sm:$0xff] %v2675
    %2830 = vst [vmem:[#allocation2 + $0x50] sm:$0xff] %v2786
    %2831 = vst [vmem:[#allocation2 + $0x58] sm:$0xff] %v2788
    %2832 = vst [vmem:[#allocation2 + $0x60] sm:$0xff] %v2679
    %2833 = vst [vmem:[#allocation2 + $0x68] sm:$0xff] %v2681
    %2834 = vst [vmem:[#allocation2 + $0x70] sm:$0xff] %v2792
    %2835 = vst [vmem:[#allocation2 + $0x78] sm:$0xff] %v2794
    %2836 = vst [vmem:[#allocation2 + $0x80] sm:$0xff] %v2685
    %2837 = vst [vmem:[#allocation2 + $0x88] sm:$0xff] %v2687
    %2838 = vst [vmem:[#allocation2 + $0x90] sm:$0xff] %v2798
    %2839 = vst [vmem:[#allocation2 + $0x98] sm:$0xff] %v2800
    %2840 = vst [vmem:[#allocation2 + $0xa0] sm:$0xff] %v2691
    %2841 = vst [vmem:[#allocation2 + $0xa8] sm:$0xff] %v2693
    %2842 = vst [vmem:[#allocation2 + $0xb0] sm:$0xff] %v2804
    %2843 = vst [vmem:[#allocation2 + $0xb8] sm:$0xff] %v2806
    %2844 = vst [vmem:[#allocation2 + $0xc0] sm:$0xff] %v2697
    %2845 = vst [vmem:[#allocation2 + $0xc8] sm:$0xff] %v2699
    %2846 = vst [vmem:[#allocation2 + $0xd0] sm:$0xff] %v2810
    %2847 = vst [vmem:[#allocation2 + $0xd8] sm:$0xff] %v2812
    %2848 = vst [vmem:[#allocation2 + $0xe0] sm:$0xff] %v2703
    %2849 = vst [vmem:[#allocation2 + $0xe8] sm:$0xff] %v2705
    %2850 = vst [vmem:[#allocation2 + $0xf0] sm:$0xff] %v2816
    %2851 = vst [vmem:[#allocation2 + $0xf8] sm:$0xff] %v2818
    %v2852 = vld [vmem:[#allocation2] sm:$0xff]
    %v2853 = vld [vmem:[#allocation2 + $0x8] sm:$0xff]
    %v2854 = vld [vmem:[#allocation2 + $0x10] sm:$0xff]
    %v2855 = vld [vmem:[#allocation2 + $0x18] sm:$0xff]
    %2856 = vmatprep.subr.mxu0 %v2544
    %2857 = vmatpush1.msra.mxu0 %v2543
    %2858 = vmatprep.subr.mxu0 %v2541
    %2859 = vmatpush1.msra.mxu0 %v2540
    %2860 = vmatprep.subr.mxu0 %v2538
    %2861 = vmatpush1.msra.mxu0 %v2537
    %2862 = vmatprep.subr.mxu0 %v2535
    %2863 = vmatpush1.msra.mxu0 %v2534
    %2864 = vmatprep.subr.mxu0 %v2532
    %2865 = vmatpush1.msra.mxu0 %v2531
    %2866 = vmatprep.subr.mxu0 %v2529
    %2867 = vmatpush1.msra.mxu0 %v2528
    %2868 = vmatprep.subr.mxu0 %v2526
    %2869 = vmatpush1.msra.mxu0 %v2525
    %2870 = vmatprep.subr.mxu0 %v2523
    %2871 = vmatpush1.msra.mxu0 %v2522
    %2872 = vmatprep.subr.mxu0 %v2520
    %2873 = vmatpush1.msra.mxu0 %v2519
    %2874 = vmatprep.subr.mxu0 %v2517
    %2875 = vmatpush1.msra.mxu0 %v2516
    %2876 = vmatprep.subr.mxu0 %v2514
    %2877 = vmatpush1.msra.mxu0 %v2513
    %2878 = vmatprep.subr.mxu0 %v2511
    %2879 = vmatpush1.msra.mxu0 %v2510
    %2880 = vmatprep.subr.mxu0 %v2508
    %2881 = vmatpush1.msra.mxu0 %v2507
    %2882 = vmatprep.subr.mxu0 %v2505
    %2883 = vmatpush1.msra.mxu0 %v2504
    %2884 = vmatprep.subr.mxu0 %v2502
    %2885 = vmatpush1.msra.mxu0 %v2501
    %2886 = vmatprep.subr.mxu0 %v2499
    %2887 = vmatpush1.msra.mxu0 %v2498
    %2888 = vmatprep.subr.mxu0 0.0
    %2889 = vmatpush2.msra.mxu0 0.0
    %2890 = vmatprep.subr.mxu0 0.0
    %2891 = vmatpush2.msra.mxu0 0.0
    %2892 = vmatprep.subr.mxu0 0.0
    %2893 = vmatpush2.msra.mxu0 0.0
    %2894 = vmatprep.subr.mxu0 0.0
    %2895 = vmatpush2.msra.mxu0 0.0
    %2896 = vmatprep.subr.mxu0 0.0
    %2897 = vmatpush2.msra.mxu0 0.0
    %2898 = vmatprep.subr.mxu0 0.0
    %2899 = vmatpush2.msra.mxu0 0.0
    %2900 = vmatprep.subr.mxu0 0.0
    %2901 = vmatpush2.msra.mxu0 0.0
    %2902 = vmatprep.subr.mxu0 0.0
    %2903 = vmatpush2.msra.mxu0 0.0
    %2904 = vmatprep.subr.mxu0 0.0
    %2905 = vmatpush2.msra.mxu0 0.0
    %2906 = vmatprep.subr.mxu0 0.0
    %2907 = vmatpush2.msra.mxu0 0.0
    %2908 = vmatprep.subr.mxu0 0.0
    %2909 = vmatpush2.msra.mxu0 0.0
    %2910 = vmatprep.subr.mxu0 0.0
    %2911 = vmatpush2.msra.mxu0 0.0
    %2912 = vmatprep.subr.mxu0 0.0
    %2913 = vmatpush2.msra.mxu0 0.0
    %2914 = vmatprep.subr.mxu0 0.0
    %2915 = vmatpush2.msra.mxu0 0.0
    %2916 = vmatprep.subr.mxu0 0.0
    %2917 = vmatpush2.msra.mxu0 0.0
    %2918 = vmatprep.subr.mxu0 0.0
    %2919 = vmatpush2.msra.mxu0 0.0
    %2920 = vmatprep.mubr.f32.mxu0 0.0
    %2921 = vmatmul.mubr.f32.gmra.mxu0 0.0
    %v2922 = vpop.f32.mrf.mxu0
    %v2923 = vadd.f32 0.0, %v2922
    %v2924 = vpop.f32.mrf.mxu0
    %v2925 = vadd.f32 0.0, %v2924
    %2926 = vdwg.mxu0
    %2927 = vmatprep.subr.mxu0 0.0
    %2928 = vmatpush1.msra.mxu0 %v2545
    %2929 = vmatprep.subr.mxu0 0.0
    %2930 = vmatpush1.msra.mxu0 %v2542
    %2931 = vmatprep.subr.mxu0 0.0
    %2932 = vmatpush1.msra.mxu0 %v2539
    %2933 = vmatprep.subr.mxu0 0.0
    %2934 = vmatpush1.msra.mxu0 %v2536
    %2935 = vmatprep.subr.mxu0 0.0
    %2936 = vmatpush1.msra.mxu0 %v2533
    %2937 = vmatprep.subr.mxu0 0.0
    %2938 = vmatpush1.msra.mxu0 %v2530
    %2939 = vmatprep.subr.mxu0 0.0
    %2940 = vmatpush1.msra.mxu0 %v2527
    %2941 = vmatprep.subr.mxu0 0.0
    %2942 = vmatpush1.msra.mxu0 %v2524
    %2943 = vmatprep.subr.mxu0 0.0
    %2944 = vmatpush1.msra.mxu0 %v2521
    %2945 = vmatprep.subr.mxu0 0.0
    %2946 = vmatpush1.msra.mxu0 %v2518
    %2947 = vmatprep.subr.mxu0 0.0
    %2948 = vmatpush1.msra.mxu0 %v2515
    %2949 = vmatprep.subr.mxu0 0.0
    %2950 = vmatpush1.msra.mxu0 %v2512
    %2951 = vmatprep.subr.mxu0 0.0
    %2952 = vmatpush1.msra.mxu0 %v2509
    %2953 = vmatprep.subr.mxu0 0.0
    %2954 = vmatpush1.msra.mxu0 %v2506
    %2955 = vmatprep.subr.mxu0 0.0
    %2956 = vmatpush1.msra.mxu0 %v2503
    %2957 = vmatprep.subr.mxu0 0.0
    %2958 = vmatpush1.msra.mxu0 %v2500
    %2959 = vmatprep.subr.mxu0 0.0
    %2960 = vmatpush2.msra.mxu0 0.0
    %2961 = vmatprep.subr.mxu0 0.0
    %2962 = vmatpush2.msra.mxu0 0.0
    %2963 = vmatprep.subr.mxu0 0.0
    %2964 = vmatpush2.msra.mxu0 0.0
    %2965 = vmatprep.subr.mxu0 0.0
    %2966 = vmatpush2.msra.mxu0 0.0
    %2967 = vmatprep.subr.mxu0 0.0
    %2968 = vmatpush2.msra.mxu0 0.0
    %2969 = vmatprep.subr.mxu0 0.0
    %2970 = vmatpush2.msra.mxu0 0.0
    %2971 = vmatprep.subr.mxu0 0.0
    %2972 = vmatpush2.msra.mxu0 0.0
    %2973 = vmatprep.subr.mxu0 0.0
    %2974 = vmatpush2.msra.mxu0 0.0
    %2975 = vmatprep.subr.mxu0 0.0
    %2976 = vmatpush2.msra.mxu0 0.0
    %2977 = vmatprep.subr.mxu0 0.0
    %2978 = vmatpush2.msra.mxu0 0.0
    %2979 = vmatprep.subr.mxu0 0.0
    %2980 = vmatpush2.msra.mxu0 0.0
    %2981 = vmatprep.subr.mxu0 0.0
    %2982 = vmatpush2.msra.mxu0 0.0
    %2983 = vmatprep.subr.mxu0 0.0
    %2984 = vmatpush2.msra.mxu0 0.0
    %2985 = vmatprep.subr.mxu0 0.0
    %2986 = vmatpush2.msra.mxu0 0.0
    %2987 = vmatprep.subr.mxu0 0.0
    %2988 = vmatpush2.msra.mxu0 0.0
    %2989 = vmatprep.subr.mxu0 0.0
    %2990 = vmatpush2.msra.mxu0 0.0
    %2991 = vmatprep.mubr.f32.mxu0 0.0
    %2992 = vmatmul.mubr.f32.gmra.mxu0 0.0
    %v2993 = vpop.f32.mrf.mxu0
    %v2994 = vadd.f32 0.0, %v2993
    %v2995 = vpop.f32.mrf.mxu0
    %2996 = vdwg.mxu0
    %v2997 = vadd.f32 %v2852, %v2923
    %v2998 = vadd.f32 %v2853, %v2925
    %v2999 = vadd.f32 %v2854, %v2994
    %3000 = vmatprep.subr.mxu0 0.0
    %3001 = vmatpush1.msra.mxu0 %v2562
    %3002 = vmatprep.subr.mxu0 0.0
    %3003 = vmatpush1.msra.mxu0 %v2561
    %3004 = vmatprep.subr.mxu0 0.0
    %3005 = vmatpush1.msra.mxu0 %v2560
    %3006 = vmatprep.subr.mxu0 0.0
    %3007 = vmatpush1.msra.mxu0 %v2559
    %3008 = vmatprep.subr.mxu0 0.0
    %3009 = vmatpush1.msra.mxu0 %v2558
    %3010 = vmatprep.subr.mxu0 0.0
    %3011 = vmatpush1.msra.mxu0 %v2557
    %3012 = vmatprep.subr.mxu0 0.0
    %3013 = vmatpush1.msra.mxu0 %v2556
    %3014 = vmatprep.subr.mxu0 0.0
    %3015 = vmatpush1.msra.mxu0 %v2555
    %3016 = vmatprep.subr.mxu0 0.0
    %3017 = vmatpush1.msra.mxu0 %v2554
    %3018 = vmatprep.subr.mxu0 0.0
    %3019 = vmatpush1.msra.mxu0 %v2553
    %3020 = vmatprep.subr.mxu0 0.0
    %3021 = vmatpush1.msra.mxu0 %v2552
    %3022 = vmatprep.subr.mxu0 0.0
    %3023 = vmatpush1.msra.mxu0 %v2551
    %3024 = vmatprep.subr.mxu0 0.0
    %3025 = vmatpush1.msra.mxu0 %v2550
    %3026 = vmatprep.subr.mxu0 0.0
    %3027 = vmatpush1.msra.mxu0 %v2549
    %3028 = vmatprep.subr.mxu0 0.0
    %3029 = vmatpush1.msra.mxu0 %v2548
    %3030 = vmatprep.subr.mxu0 0.0
    %3031 = vmatpush1.msra.mxu0 %v2547
    %3032 = vmatprep.subr.mxu0 0.0
    %3033 = vmatpush2.msra.mxu0 0.0
    %3034 = vmatprep.subr.mxu0 0.0
    %3035 = vmatpush2.msra.mxu0 0.0
    %3036 = vmatprep.subr.mxu0 0.0
    %3037 = vmatpush2.msra.mxu0 0.0
    %3038 = vmatprep.subr.mxu0 0.0
    %3039 = vmatpush2.msra.mxu0 0.0
    %3040 = vmatprep.subr.mxu0 0.0
    %3041 = vmatpush2.msra.mxu0 0.0
    %3042 = vmatprep.subr.mxu0 0.0
    %3043 = vmatpush2.msra.mxu0 0.0
    %3044 = vmatprep.subr.mxu0 0.0
    %3045 = vmatpush2.msra.mxu0 0.0
    %3046 = vmatprep.subr.mxu0 0.0
    %3047 = vmatpush2.msra.mxu0 0.0
    %3048 = vmatprep.subr.mxu0 0.0
    %3049 = vmatpush2.msra.mxu0 0.0
    %3050 = vmatprep.subr.mxu0 0.0
    %3051 = vmatpush2.msra.mxu0 0.0
    %3052 = vmatprep.subr.mxu0 0.0
    %3053 = vmatpush2.msra.mxu0 0.0
    %3054 = vmatprep.subr.mxu0 0.0
    %3055 = vmatpush2.msra.mxu0 0.0
    %3056 = vmatprep.subr.mxu0 0.0
    %3057 = vmatpush2.msra.mxu0 0.0
    %3058 = vmatprep.subr.mxu0 0.0
    %3059 = vmatpush2.msra.mxu0 0.0
    %3060 = vmatprep.subr.mxu0 0.0
    %3061 = vmatpush2.msra.mxu0 0.0
    %3062 = vmatprep.subr.mxu0 0.0
    %3063 = vmatpush2.msra.mxu0 0.0
    %3064 = vmatprep.mubr.f32.mxu0 0.0
    %3065 = vmatmul.mubr.f32.gmra.mxu0 0.0
    %v3066 = vpop.f32.mrf.mxu0
    %v3067 = vadd.f32 0.0, %v3066
    %v3068 = vpop.f32.mrf.mxu0
    %3069 = vdwg.mxu0
    %v3070 = vadd.f32 %v2855, %v3067
    %v3071 = vmul.f32 %v2997, 0.5
    %v3072 = vmul.f32 %v2998, 0.5
    %v3073 = vmul.f32 %v2999, 0.5
    %v3074 = vtanh.pop %v3071
    %v3075 = vtanh.pop %v3072
    %v3076 = vtanh.pop %v3073
    %v3077 = vmul.f32 %v3074, 0.5
    %v3078 = vmul.f32 %v3075, 0.5
    %v3079 = vmul.f32 %v3076, 0.5
    %v3080 = vadd.f32 %v3077, 0.5
    %v3081 = vadd.f32 %v3078, 0.5
    %v3082 = vadd.f32 %v3079, 0.5
    %v3083 = vtanh.pop %v3070
    %v3084 = vmul.f32 %v3081, 0.0
    %v3085 = vmul.f32 %v3080, %v3083
    %v3086 = vadd.f32 %v3084, %v3085
    %v3087 = vtanh.pop %v3086
    %v3088 = vmul.f32 %v3082, %v3087
    %v3089 = vld [vmem:[%s753] sm:$0xff]
    %v3090 = vld [vmem:[%s753 + $0x8] sm:$0xff]
    %v3091 = vld [vmem:[%s753 + $0x10] sm:$0xff]
    %v3092 = vld [vmem:[%s753 + $0x18] sm:$0xff]
    %3093 = vmatprep.subr.mxu0 %v2544
    %3094 = vmatpush1.msra.mxu0 %v2543
    %3095 = vmatprep.subr.mxu0 %v2541
    %3096 = vmatpush1.msra.mxu0 %v2540
    %3097 = vmatprep.subr.mxu0 %v2538
    %3098 = vmatpush1.msra.mxu0 %v2537
    %3099 = vmatprep.subr.mxu0 %v2535
    %3100 = vmatpush1.msra.mxu0 %v2534
    %3101 = vmatprep.subr.mxu0 %v2532
    %3102 = vmatpush1.msra.mxu0 %v2531
    %3103 = vmatprep.subr.mxu0 %v2529
    %3104 = vmatpush1.msra.mxu0 %v2528
    %3105 = vmatprep.subr.mxu0 %v2526
    %3106 = vmatpush1.msra.mxu0 %v2525
    %3107 = vmatprep.subr.mxu0 %v2523
    %3108 = vmatpush1.msra.mxu0 %v2522
    %3109 = vmatprep.subr.mxu0 %v2520
    %3110 = vmatpush1.msra.mxu0 %v2519
    %3111 = vmatprep.subr.mxu0 %v2517
    %3112 = vmatpush1.msra.mxu0 %v2516
    %3113 = vmatprep.subr.mxu0 %v2514
    %3114 = vmatpush1.msra.mxu0 %v2513
    %3115 = vmatprep.subr.mxu0 %v2511
    %3116 = vmatpush1.msra.mxu0 %v2510
    %3117 = vmatprep.subr.mxu0 %v2508
    %3118 = vmatpush1.msra.mxu0 %v2507
    %3119 = vmatprep.subr.mxu0 %v2505
    %3120 = vmatpush1.msra.mxu0 %v2504
    %3121 = vmatprep.subr.mxu0 %v2502
    %3122 = vmatpush1.msra.mxu0 %v2501
    %3123 = vmatprep.subr.mxu0 %v2499
    %3124 = vmatpush1.msra.mxu0 %v2498
    %3125 = vmatprep.subr.mxu0 0.0
    %3126 = vmatpush2.msra.mxu0 0.0
    %3127 = vmatprep.subr.mxu0 0.0
    %3128 = vmatpush2.msra.mxu0 0.0
    %3129 = vmatprep.subr.mxu0 0.0
    %3130 = vmatpush2.msra.mxu0 0.0
    %3131 = vmatprep.subr.mxu0 0.0
    %3132 = vmatpush2.msra.mxu0 0.0
    %3133 = vmatprep.subr.mxu0 0.0
    %3134 = vmatpush2.msra.mxu0 0.0
    %3135 = vmatprep.subr.mxu0 0.0
    %3136 = vmatpush2.msra.mxu0 0.0
    %3137 = vmatprep.subr.mxu0 0.0
    %3138 = vmatpush2.msra.mxu0 0.0
    %3139 = vmatprep.subr.mxu0 0.0
    %3140 = vmatpush2.msra.mxu0 0.0
    %3141 = vmatprep.subr.mxu0 0.0
    %3142 = vmatpush2.msra.mxu0 0.0
    %3143 = vmatprep.subr.mxu0 0.0
    %3144 = vmatpush2.msra.mxu0 0.0
    %3145 = vmatprep.subr.mxu0 0.0
    %3146 = vmatpush2.msra.mxu0 0.0
    %3147 = vmatprep.subr.mxu0 0.0
    %3148 = vmatpush2.msra.mxu0 0.0
    %3149 = vmatprep.subr.mxu0 0.0
    %3150 = vmatpush2.msra.mxu0 0.0
    %3151 = vmatprep.subr.mxu0 0.0
    %3152 = vmatpush2.msra.mxu0 0.0
    %3153 = vmatprep.subr.mxu0 0.0
    %3154 = vmatpush2.msra.mxu0 0.0
    %3155 = vmatprep.subr.mxu0 0.0
    %3156 = vmatpush2.msra.mxu0 0.0
    %3157 = vmatprep.mubr.f32.mxu0 0.0
    %3158 = vmatmul.mubr.f32.gmra.mxu0 %v3088
    %v3159 = vpop.f32.mrf.mxu0
    %v3160 = vadd.f32 0.0, %v3159
    %v3161 = vpop.f32.mrf.mxu0
    %v3162 = vadd.f32 0.0, %v3161
    %3163 = vdwg.mxu0
    %3164 = vmatprep.subr.mxu0 0.0
    %3165 = vmatpush1.msra.mxu0 %v2545
    %3166 = vmatprep.subr.mxu0 0.0
    %3167 = vmatpush1.msra.mxu0 %v2542
    %3168 = vmatprep.subr.mxu0 0.0
    %3169 = vmatpush1.msra.mxu0 %v2539
    %3170 = vmatprep.subr.mxu0 0.0
    %3171 = vmatpush1.msra.mxu0 %v2536
    %3172 = vmatprep.subr.mxu0 0.0
    %3173 = vmatpush1.msra.mxu0 %v2533
    %3174 = vmatprep.subr.mxu0 0.0
    %3175 = vmatpush1.msra.mxu0 %v2530
    %3176 = vmatprep.subr.mxu0 0.0
    %3177 = vmatpush1.msra.mxu0 %v2527
    %3178 = vmatprep.subr.mxu0 0.0
    %3179 = vmatpush1.msra.mxu0 %v2524
    %3180 = vmatprep.subr.mxu0 0.0
    %3181 = vmatpush1.msra.mxu0 %v2521
    %3182 = vmatprep.subr.mxu0 0.0
    %3183 = vmatpush1.msra.mxu0 %v2518
    %3184 = vmatprep.subr.mxu0 0.0
    %3185 = vmatpush1.msra.mxu0 %v2515
    %3186 = vmatprep.subr.mxu0 0.0
    %3187 = vmatpush1.msra.mxu0 %v2512
    %3188 = vmatprep.subr.mxu0 0.0
    %3189 = vmatpush1.msra.mxu0 %v2509
    %3190 = vmatprep.subr.mxu0 0.0
    %3191 = vmatpush1.msra.mxu0 %v2506
    %3192 = vmatprep.subr.mxu0 0.0
    %3193 = vmatpush1.msra.mxu0 %v2503
    %3194 = vmatprep.subr.mxu0 0.0
    %3195 = vmatpush1.msra.mxu0 %v2500
    %3196 = vmatprep.subr.mxu0 0.0
    %3197 = vmatpush2.msra.mxu0 0.0
    %3198 = vmatprep.subr.mxu0 0.0
    %3199 = vmatpush2.msra.mxu0 0.0
    %3200 = vmatprep.subr.mxu0 0.0
    %3201 = vmatpush2.msra.mxu0 0.0
    %3202 = vmatprep.subr.mxu0 0.0
    %3203 = vmatpush2.msra.mxu0 0.0
    %3204 = vmatprep.subr.mxu0 0.0
    %3205 = vmatpush2.msra.mxu0 0.0
    %3206 = vmatprep.subr.mxu0 0.0
    %3207 = vmatpush2.msra.mxu0 0.0
    %3208 = vmatprep.subr.mxu0 0.0
    %3209 = vmatpush2.msra.mxu0 0.0
    %3210 = vmatprep.subr.mxu0 0.0
    %3211 = vmatpush2.msra.mxu0 0.0
    %3212 = vmatprep.subr.mxu0 0.0
    %3213 = vmatpush2.msra.mxu0 0.0
    %3214 = vmatprep.subr.mxu0 0.0
    %3215 = vmatpush2.msra.mxu0 0.0
    %3216 = vmatprep.subr.mxu0 0.0
    %3217 = vmatpush2.msra.mxu0 0.0
    %3218 = vmatprep.subr.mxu0 0.0
    %3219 = vmatpush2.msra.mxu0 0.0
    %3220 = vmatprep.subr.mxu0 0.0
    %3221 = vmatpush2.msra.mxu0 0.0
    %3222 = vmatprep.subr.mxu0 0.0
    %3223 = vmatpush2.msra.mxu0 0.0
    %3224 = vmatprep.subr.mxu0 0.0
    %3225 = vmatpush2.msra.mxu0 0.0
    %3226 = vmatprep.subr.mxu0 0.0
    %3227 = vmatpush2.msra.mxu0 0.0
    %3228 = vmatprep.mubr.f32.mxu0 0.0
    %3229 = vmatmul.mubr.f32.gmra.mxu0 %v3088
    %v3230 = vpop.f32.mrf.mxu0
    %v3231 = vadd.f32 0.0, %v3230
    %v3232 = vpop.f32.mrf.mxu0
    %3233 = vdwg.mxu0
    %v3234 = vadd.f32 %v3089, %v3160
    %v3235 = vadd.f32 %v3090, %v3162
    %v3236 = vadd.f32 %v3091, %v3231
    %3237 = vmatprep.subr.mxu0 0.0
    %3238 = vmatpush1.msra.mxu0 %v2562
    %3239 = vmatprep.subr.mxu0 0.0
    %3240 = vmatpush1.msra.mxu0 %v2561
    %3241 = vmatprep.subr.mxu0 0.0
    %3242 = vmatpush1.msra.mxu0 %v2560
    %3243 = vmatprep.subr.mxu0 0.0
    %3244 = vmatpush1.msra.mxu0 %v2559
    %3245 = vmatprep.subr.mxu0 0.0
    %3246 = vmatpush1.msra.mxu0 %v2558
    %3247 = vmatprep.subr.mxu0 0.0
    %3248 = vmatpush1.msra.mxu0 %v2557
    %3249 = vmatprep.subr.mxu0 0.0
    %3250 = vmatpush1.msra.mxu0 %v2556
    %3251 = vmatprep.subr.mxu0 0.0
    %3252 = vmatpush1.msra.mxu0 %v2555
    %3253 = vmatprep.subr.mxu0 0.0
    %3254 = vmatpush1.msra.mxu0 %v2554
    %3255 = vmatprep.subr.mxu0 0.0
    %3256 = vmatpush1.msra.mxu0 %v2553
    %3257 = vmatprep.subr.mxu0 0.0
    %3258 = vmatpush1.msra.mxu0 %v2552
    %3259 = vmatprep.subr.mxu0 0.0
    %3260 = vmatpush1.msra.mxu0 %v2551
    %3261 = vmatprep.subr.mxu0 0.0
    %3262 = vmatpush1.msra.mxu0 %v2550
    %3263 = vmatprep.subr.mxu0 0.0
    %3264 = vmatpush1.msra.mxu0 %v2549
    %3265 = vmatprep.subr.mxu0 0.0
    %3266 = vmatpush1.msra.mxu0 %v2548
    %3267 = vmatprep.subr.mxu0 0.0
    %3268 = vmatpush1.msra.mxu0 %v2547
    %3269 = vmatprep.subr.mxu0 0.0
    %3270 = vmatpush2.msra.mxu0 0.0
    %3271 = vmatprep.subr.mxu0 0.0
    %3272 = vmatpush2.msra.mxu0 0.0
    %3273 = vmatprep.subr.mxu0 0.0
    %3274 = vmatpush2.msra.mxu0 0.0
    %3275 = vmatprep.subr.mxu0 0.0
    %3276 = vmatpush2.msra.mxu0 0.0
    %3277 = vmatprep.subr.mxu0 0.0
    %3278 = vmatpush2.msra.mxu0 0.0
    %3279 = vmatprep.subr.mxu0 0.0
    %3280 = vmatpush2.msra.mxu0 0.0
    %3281 = vmatprep.subr.mxu0 0.0
    %3282 = vmatpush2.msra.mxu0 0.0
    %3283 = vmatprep.subr.mxu0 0.0
    %3284 = vmatpush2.msra.mxu0 0.0
    %3285 = vmatprep.subr.mxu0 0.0
    %3286 = vmatpush2.msra.mxu0 0.0
    %3287 = vmatprep.subr.mxu0 0.0
    %3288 = vmatpush2.msra.mxu0 0.0
    %3289 = vmatprep.subr.mxu0 0.0
    %3290 = vmatpush2.msra.mxu0 0.0
    %3291 = vmatprep.subr.mxu0 0.0
    %3292 = vmatpush2.msra.mxu0 0.0
    %3293 = vmatprep.subr.mxu0 0.0
    %3294 = vmatpush2.msra.mxu0 0.0
    %3295 = vmatprep.subr.mxu0 0.0
    %3296 = vmatpush2.msra.mxu0 0.0
    %3297 = vmatprep.subr.mxu0 0.0
    %3298 = vmatpush2.msra.mxu0 0.0
    %3299 = vmatprep.subr.mxu0 0.0
    %3300 = vmatpush2.msra.mxu0 0.0
    %3301 = vmatprep.mubr.f32.mxu0 0.0
    %3302 = vmatmul.mubr.f32.gmra.mxu0 %v3088
    %v3303 = vpop.f32.mrf.mxu0
    %v3304 = vadd.f32 0.0, %v3303
    %v3305 = vpop.f32.mrf.mxu0
    %3306 = vdwg.mxu0
    %v3307 = vadd.f32 %v3092, %v3304
    %v3308 = vmul.f32 %v3234, 0.5
    %v3309 = vmul.f32 %v3235, 0.5
    %v3310 = vmul.f32 %v3236, 0.5
    %v3311 = vtanh.pop %v3308
    %v3312 = vtanh.pop %v3309
    %v3313 = vtanh.pop %v3310
    %v3314 = vmul.f32 %v3311, 0.5
    %v3315 = vmul.f32 %v3312, 0.5
    %v3316 = vmul.f32 %v3313, 0.5
    %v3317 = vadd.f32 %v3314, 0.5
    %v3318 = vadd.f32 %v3315, 0.5
    %v3319 = vadd.f32 %v3316, 0.5
    %v3320 = vtanh.pop %v3307
    %v3321 = vmul.f32 %v3318, %v3086
    %v3322 = vmul.f32 %v3317, %v3320
    %v3323 = vadd.f32 %v3321, %v3322
    %v3324 = vtanh.pop %v3323
    %v3325 = vmul.f32 %v3319, %v3324
    %v3326 = vld [vmem:[%s993] sm:$0xff]
    %v3327 = vld [vmem:[%s993 + $0x8] sm:$0xff]
    %v3328 = vld [vmem:[%s993 + $0x10] sm:$0xff]
    %v3329 = vld [vmem:[%s993 + $0x18] sm:$0xff]
    %3330 = vmatprep.subr.mxu0 %v2544
    %3331 = vmatpush1.msra.mxu0 %v2543
    %3332 = vmatprep.subr.mxu0 %v2541
    %3333 = vmatpush1.msra.mxu0 %v2540
    %3334 = vmatprep.subr.mxu0 %v2538
    %3335 = vmatpush1.msra.mxu0 %v2537
    %3336 = vmatprep.subr.mxu0 %v2535
    %3337 = vmatpush1.msra.mxu0 %v2534
    %3338 = vmatprep.subr.mxu0 %v2532
    %3339 = vmatpush1.msra.mxu0 %v2531
    %3340 = vmatprep.subr.mxu0 %v2529
    %3341 = vmatpush1.msra.mxu0 %v2528
    %3342 = vmatprep.subr.mxu0 %v2526
    %3343 = vmatpush1.msra.mxu0 %v2525
    %3344 = vmatprep.subr.mxu0 %v2523
    %3345 = vmatpush1.msra.mxu0 %v2522
    %3346 = vmatprep.subr.mxu0 %v2520
    %3347 = vmatpush1.msra.mxu0 %v2519
    %3348 = vmatprep.subr.mxu0 %v2517
    %3349 = vmatpush1.msra.mxu0 %v2516
    %3350 = vmatprep.subr.mxu0 %v2514
    %3351 = vmatpush1.msra.mxu0 %v2513
    %3352 = vmatprep.subr.mxu0 %v2511
    %3353 = vmatpush1.msra.mxu0 %v2510
    %3354 = vmatprep.subr.mxu0 %v2508
    %3355 = vmatpush1.msra.mxu0 %v2507
    %3356 = vmatprep.subr.mxu0 %v2505
    %3357 = vmatpush1.msra.mxu0 %v2504
    %3358 = vmatprep.subr.mxu0 %v2502
    %3359 = vmatpush1.msra.mxu0 %v2501
    %3360 = vmatprep.subr.mxu0 %v2499
    %3361 = vmatpush1.msra.mxu0 %v2498
    %3362 = vmatprep.subr.mxu0 0.0
    %3363 = vmatpush2.msra.mxu0 0.0
    %3364 = vmatprep.subr.mxu0 0.0
    %3365 = vmatpush2.msra.mxu0 0.0
    %3366 = vmatprep.subr.mxu0 0.0
    %3367 = vmatpush2.msra.mxu0 0.0
    %3368 = vmatprep.subr.mxu0 0.0
    %3369 = vmatpush2.msra.mxu0 0.0
    %3370 = vmatprep.subr.mxu0 0.0
    %3371 = vmatpush2.msra.mxu0 0.0
    %3372 = vmatprep.subr.mxu0 0.0
    %3373 = vmatpush2.msra.mxu0 0.0
    %3374 = vmatprep.subr.mxu0 0.0
    %3375 = vmatpush2.msra.mxu0 0.0
    %3376 = vmatprep.subr.mxu0 0.0
    %3377 = vmatpush2.msra.mxu0 0.0
    %3378 = vmatprep.subr.mxu0 0.0
    %3379 = vmatpush2.msra.mxu0 0.0
    %3380 = vmatprep.subr.mxu0 0.0
    %3381 = vmatpush2.msra.mxu0 0.0
    %3382 = vmatprep.subr.mxu0 0.0
    %3383 = vmatpush2.msra.mxu0 0.0
    %3384 = vmatprep.subr.mxu0 0.0
    %3385 = vmatpush2.msra.mxu0 0.0
    %3386 = vmatprep.subr.mxu0 0.0
    %3387 = vmatpush2.msra.mxu0 0.0
    %3388 = vmatprep.subr.mxu0 0.0
    %3389 = vmatpush2.msra.mxu0 0.0
    %3390 = vmatprep.subr.mxu0 0.0
    %3391 = vmatpush2.msra.mxu0 0.0
    %3392 = vmatprep.subr.mxu0 0.0
    %3393 = vmatpush2.msra.mxu0 0.0
    %3394 = vmatprep.mubr.f32.mxu0 0.0
    %3395 = vmatmul.mubr.f32.gmra.mxu0 %v3325
    %v3396 = vpop.f32.mrf.mxu0
    %v3397 = vadd.f32 0.0, %v3396
    %v3398 = vpop.f32.mrf.mxu0
    %v3399 = vadd.f32 0.0, %v3398
    %3400 = vdwg.mxu0
    %3401 = vmatprep.subr.mxu0 0.0
    %3402 = vmatpush1.msra.mxu0 %v2545
    %3403 = vmatprep.subr.mxu0 0.0
    %3404 = vmatpush1.msra.mxu0 %v2542
    %3405 = vmatprep.subr.mxu0 0.0
    %3406 = vmatpush1.msra.mxu0 %v2539
    %3407 = vmatprep.subr.mxu0 0.0
    %3408 = vmatpush1.msra.mxu0 %v2536
    %3409 = vmatprep.subr.mxu0 0.0
    %3410 = vmatpush1.msra.mxu0 %v2533
    %3411 = vmatprep.subr.mxu0 0.0
    %3412 = vmatpush1.msra.mxu0 %v2530
    %3413 = vmatprep.subr.mxu0 0.0
    %3414 = vmatpush1.msra.mxu0 %v2527
    %3415 = vmatprep.subr.mxu0 0.0
    %3416 = vmatpush1.msra.mxu0 %v2524
    %3417 = vmatprep.subr.mxu0 0.0
    %3418 = vmatpush1.msra.mxu0 %v2521
    %3419 = vmatprep.subr.mxu0 0.0
    %3420 = vmatpush1.msra.mxu0 %v2518
    %3421 = vmatprep.subr.mxu0 0.0
    %3422 = vmatpush1.msra.mxu0 %v2515
    %3423 = vmatprep.subr.mxu0 0.0
    %3424 = vmatpush1.msra.mxu0 %v2512
    %3425 = vmatprep.subr.mxu0 0.0
    %3426 = vmatpush1.msra.mxu0 %v2509
    %3427 = vmatprep.subr.mxu0 0.0
    %3428 = vmatpush1.msra.mxu0 %v2506
    %3429 = vmatprep.subr.mxu0 0.0
    %3430 = vmatpush1.msra.mxu0 %v2503
    %3431 = vmatprep.subr.mxu0 0.0
    %3432 = vmatpush1.msra.mxu0 %v2500
    %3433 = vmatprep.subr.mxu0 0.0
    %3434 = vmatpush2.msra.mxu0 0.0
    %3435 = vmatprep.subr.mxu0 0.0
    %3436 = vmatpush2.msra.mxu0 0.0
    %3437 = vmatprep.subr.mxu0 0.0
    %3438 = vmatpush2.msra.mxu0 0.0
    %3439 = vmatprep.subr.mxu0 0.0
    %3440 = vmatpush2.msra.mxu0 0.0
    %3441 = vmatprep.subr.mxu0 0.0
    %3442 = vmatpush2.msra.mxu0 0.0
    %3443 = vmatprep.subr.mxu0 0.0
    %3444 = vmatpush2.msra.mxu0 0.0
    %3445 = vmatprep.subr.mxu0 0.0
    %3446 = vmatpush2.msra.mxu0 0.0
    %3447 = vmatprep.subr.mxu0 0.0
    %3448 = vmatpush2.msra.mxu0 0.0
    %3449 = vmatprep.subr.mxu0 0.0
    %3450 = vmatpush2.msra.mxu0 0.0
    %3451 = vmatprep.subr.mxu0 0.0
    %3452 = vmatpush2.msra.mxu0 0.0
    %3453 = vmatprep.subr.mxu0 0.0
    %3454 = vmatpush2.msra.mxu0 0.0
    %3455 = vmatprep.subr.mxu0 0.0
    %3456 = vmatpush2.msra.mxu0 0.0
    %3457 = vmatprep.subr.mxu0 0.0
    %3458 = vmatpush2.msra.mxu0 0.0
    %3459 = vmatprep.subr.mxu0 0.0
    %3460 = vmatpush2.msra.mxu0 0.0
    %3461 = vmatprep.subr.mxu0 0.0
    %3462 = vmatpush2.msra.mxu0 0.0
    %3463 = vmatprep.subr.mxu0 0.0
    %3464 = vmatpush2.msra.mxu0 0.0
    %3465 = vmatprep.mubr.f32.mxu0 0.0
    %3466 = vmatmul.mubr.f32.gmra.mxu0 %v3325
    %v3467 = vpop.f32.mrf.mxu0
    %v3468 = vadd.f32 0.0, %v3467
    %v3469 = vpop.f32.mrf.mxu0
    %3470 = vdwg.mxu0
    %v3471 = vadd.f32 %v3326, %v3397
    %v3472 = vadd.f32 %v3327, %v3399
    %v3473 = vadd.f32 %v3328, %v3468
    %3474 = vmatprep.subr.mxu0 0.0
    %3475 = vmatpush1.msra.mxu0 %v2562
    %3476 = vmatprep.subr.mxu0 0.0
    %3477 = vmatpush1.msra.mxu0 %v2561
    %3478 = vmatprep.subr.mxu0 0.0
    %3479 = vmatpush1.msra.mxu0 %v2560
    %3480 = vmatprep.subr.mxu0 0.0
    %3481 = vmatpush1.msra.mxu0 %v2559
    %3482 = vmatprep.subr.mxu0 0.0
    %3483 = vmatpush1.msra.mxu0 %v2558
    %3484 = vmatprep.subr.mxu0 0.0
    %3485 = vmatpush1.msra.mxu0 %v2557
    %3486 = vmatprep.subr.mxu0 0.0
    %3487 = vmatpush1.msra.mxu0 %v2556
    %3488 = vmatprep.subr.mxu0 0.0
    %3489 = vmatpush1.msra.mxu0 %v2555
    %3490 = vmatprep.subr.mxu0 0.0
    %3491 = vmatpush1.msra.mxu0 %v2554
    %3492 = vmatprep.subr.mxu0 0.0
    %3493 = vmatpush1.msra.mxu0 %v2553
    %3494 = vmatprep.subr.mxu0 0.0
    %3495 = vmatpush1.msra.mxu0 %v2552
    %3496 = vmatprep.subr.mxu0 0.0
    %3497 = vmatpush1.msra.mxu0 %v2551
    %3498 = vmatprep.subr.mxu0 0.0
    %3499 = vmatpush1.msra.mxu0 %v2550
    %3500 = vmatprep.subr.mxu0 0.0
    %3501 = vmatpush1.msra.mxu0 %v2549
    %3502 = vmatprep.subr.mxu0 0.0
    %3503 = vmatpush1.msra.mxu0 %v2548
    %3504 = vmatprep.subr.mxu0 0.0
    %3505 = vmatpush1.msra.mxu0 %v2547
    %3506 = vmatprep.subr.mxu0 0.0
    %3507 = vmatpush2.msra.mxu0 0.0
    %3508 = vmatprep.subr.mxu0 0.0
    %3509 = vmatpush2.msra.mxu0 0.0
    %3510 = vmatprep.subr.mxu0 0.0
    %3511 = vmatpush2.msra.mxu0 0.0
    %3512 = vmatprep.subr.mxu0 0.0
    %3513 = vmatpush2.msra.mxu0 0.0
    %3514 = vmatprep.subr.mxu0 0.0
    %3515 = vmatpush2.msra.mxu0 0.0
    %3516 = vmatprep.subr.mxu0 0.0
    %3517 = vmatpush2.msra.mxu0 0.0
    %3518 = vmatprep.subr.mxu0 0.0
    %3519 = vmatpush2.msra.mxu0 0.0
    %3520 = vmatprep.subr.mxu0 0.0
    %3521 = vmatpush2.msra.mxu0 0.0
    %3522 = vmatprep.subr.mxu0 0.0
    %3523 = vmatpush2.msra.mxu0 0.0
    %3524 = vmatprep.subr.mxu0 0.0
    %3525 = vmatpush2.msra.mxu0 0.0
    %3526 = vmatprep.subr.mxu0 0.0
    %3527 = vmatpush2.msra.mxu0 0.0
    %3528 = vmatprep.subr.mxu0 0.0
    %3529 = vmatpush2.msra.mxu0 0.0
    %3530 = vmatprep.subr.mxu0 0.0
    %3531 = vmatpush2.msra.mxu0 0.0
    %3532 = vmatprep.subr.mxu0 0.0
    %3533 = vmatpush2.msra.mxu0 0.0
    %3534 = vmatprep.subr.mxu0 0.0
    %3535 = vmatpush2.msra.mxu0 0.0
    %3536 = vmatprep.subr.mxu0 0.0
    %3537 = vmatpush2.msra.mxu0 0.0
    %3538 = vmatprep.mubr.f32.mxu0 0.0
    %3539 = vmatmul.mubr.f32.gmra.mxu0 %v3325
    %v3540 = vpop.f32.mrf.mxu0
    %v3541 = vadd.f32 0.0, %v3540
    %v3542 = vpop.f32.mrf.mxu0
    %3543 = vdwg.mxu0
    %v3544 = vadd.f32 %v3329, %v3541
    %v3545 = vmul.f32 %v3471, 0.5
    %v3546 = vmul.f32 %v3472, 0.5
    %v3547 = vmul.f32 %v3473, 0.5
    %v3548 = vtanh.pop %v3545
    %v3549 = vtanh.pop %v3546
    %v3550 = vtanh.pop %v3547
    %v3551 = vmul.f32 %v3548, 0.5
    %v3552 = vmul.f32 %v3549, 0.5
    %v3553 = vmul.f32 %v3550, 0.5
    %v3554 = vadd.f32 %v3551, 0.5
    %v3555 = vadd.f32 %v3552, 0.5
    %v3556 = vadd.f32 %v3553, 0.5
    %v3557 = vtanh.pop %v3544
    %v3558 = vmul.f32 %v3555, %v3323
    %v3559 = vmul.f32 %v3554, %v3557
    %v3560 = vadd.f32 %v3558, %v3559
    %v3561 = vtanh.pop %v3560
    %v3562 = vmul.f32 %v3556, %v3561
    %v3563 = vld [vmem:[%s1233] sm:$0xff]
    %v3564 = vld [vmem:[%s1233 + $0x8] sm:$0xff]
    %v3565 = vld [vmem:[%s1233 + $0x10] sm:$0xff]
    %v3566 = vld [vmem:[%s1233 + $0x18] sm:$0xff]
    %3567 = vmatprep.subr.mxu0 %v2544
    %3568 = vmatpush1.msra.mxu0 %v2543
    %3569 = vmatprep.subr.mxu0 %v2541
    %3570 = vmatpush1.msra.mxu0 %v2540
    %3571 = vmatprep.subr.mxu0 %v2538
    %3572 = vmatpush1.msra.mxu0 %v2537
    %3573 = vmatprep.subr.mxu0 %v2535
    %3574 = vmatpush1.msra.mxu0 %v2534
    %3575 = vmatprep.subr.mxu0 %v2532
    %3576 = vmatpush1.msra.mxu0 %v2531
    %3577 = vmatprep.subr.mxu0 %v2529
    %3578 = vmatpush1.msra.mxu0 %v2528
    %3579 = vmatprep.subr.mxu0 %v2526
    %3580 = vmatpush1.msra.mxu0 %v2525
    %3581 = vmatprep.subr.mxu0 %v2523
    %3582 = vmatpush1.msra.mxu0 %v2522
    %3583 = vmatprep.subr.mxu0 %v2520
    %3584 = vmatpush1.msra.mxu0 %v2519
    %3585 = vmatprep.subr.mxu0 %v2517
    %3586 = vmatpush1.msra.mxu0 %v2516
    %3587 = vmatprep.subr.mxu0 %v2514
    %3588 = vmatpush1.msra.mxu0 %v2513
    %3589 = vmatprep.subr.mxu0 %v2511
    %3590 = vmatpush1.msra.mxu0 %v2510
    %3591 = vmatprep.subr.mxu0 %v2508
    %3592 = vmatpush1.msra.mxu0 %v2507
    %3593 = vmatprep.subr.mxu0 %v2505
    %3594 = vmatpush1.msra.mxu0 %v2504
    %3595 = vmatprep.subr.mxu0 %v2502
    %3596 = vmatpush1.msra.mxu0 %v2501
    %3597 = vmatprep.subr.mxu0 %v2499
    %3598 = vmatpush1.msra.mxu0 %v2498
    %3599 = vmatprep.subr.mxu0 0.0
    %3600 = vmatpush2.msra.mxu0 0.0
    %3601 = vmatprep.subr.mxu0 0.0
    %3602 = vmatpush2.msra.mxu0 0.0
    %3603 = vmatprep.subr.mxu0 0.0
    %3604 = vmatpush2.msra.mxu0 0.0
    %3605 = vmatprep.subr.mxu0 0.0
    %3606 = vmatpush2.msra.mxu0 0.0
    %3607 = vmatprep.subr.mxu0 0.0
    %3608 = vmatpush2.msra.mxu0 0.0
    %3609 = vmatprep.subr.mxu0 0.0
    %3610 = vmatpush2.msra.mxu0 0.0
    %3611 = vmatprep.subr.mxu0 0.0
    %3612 = vmatpush2.msra.mxu0 0.0
    %3613 = vmatprep.subr.mxu0 0.0
    %3614 = vmatpush2.msra.mxu0 0.0
    %3615 = vmatprep.subr.mxu0 0.0
    %3616 = vmatpush2.msra.mxu0 0.0
    %3617 = vmatprep.subr.mxu0 0.0
    %3618 = vmatpush2.msra.mxu0 0.0
    %3619 = vmatprep.subr.mxu0 0.0
    %3620 = vmatpush2.msra.mxu0 0.0
    %3621 = vmatprep.subr.mxu0 0.0
    %3622 = vmatpush2.msra.mxu0 0.0
    %3623 = vmatprep.subr.mxu0 0.0
    %3624 = vmatpush2.msra.mxu0 0.0
    %3625 = vmatprep.subr.mxu0 0.0
    %3626 = vmatpush2.msra.mxu0 0.0
    %3627 = vmatprep.subr.mxu0 0.0
    %3628 = vmatpush2.msra.mxu0 0.0
    %3629 = vmatprep.subr.mxu0 0.0
    %3630 = vmatpush2.msra.mxu0 0.0
    %3631 = vmatprep.mubr.f32.mxu0 0.0
    %3632 = vmatmul.mubr.f32.gmra.mxu0 %v3562
    %v3633 = vpop.f32.mrf.mxu0
    %v3634 = vadd.f32 0.0, %v3633
    %v3635 = vpop.f32.mrf.mxu0
    %v3636 = vadd.f32 0.0, %v3635
    %3637 = vdwg.mxu0
    %3638 = vmatprep.subr.mxu0 0.0
    %3639 = vmatpush1.msra.mxu0 %v2545
    %3640 = vmatprep.subr.mxu0 0.0
    %3641 = vmatpush1.msra.mxu0 %v2542
    %3642 = vmatprep.subr.mxu0 0.0
    %3643 = vmatpush1.msra.mxu0 %v2539
    %3644 = vmatprep.subr.mxu0 0.0
    %3645 = vmatpush1.msra.mxu0 %v2536
    %3646 = vmatprep.subr.mxu0 0.0
    %3647 = vmatpush1.msra.mxu0 %v2533
    %3648 = vmatprep.subr.mxu0 0.0
    %3649 = vmatpush1.msra.mxu0 %v2530
    %3650 = vmatprep.subr.mxu0 0.0
    %3651 = vmatpush1.msra.mxu0 %v2527
    %3652 = vmatprep.subr.mxu0 0.0
    %3653 = vmatpush1.msra.mxu0 %v2524
    %3654 = vmatprep.subr.mxu0 0.0
    %3655 = vmatpush1.msra.mxu0 %v2521
    %3656 = vmatprep.subr.mxu0 0.0
    %3657 = vmatpush1.msra.mxu0 %v2518
    %3658 = vmatprep.subr.mxu0 0.0
    %3659 = vmatpush1.msra.mxu0 %v2515
    %3660 = vmatprep.subr.mxu0 0.0
    %3661 = vmatpush1.msra.mxu0 %v2512
    %3662 = vmatprep.subr.mxu0 0.0
    %3663 = vmatpush1.msra.mxu0 %v2509
    %3664 = vmatprep.subr.mxu0 0.0
    %3665 = vmatpush1.msra.mxu0 %v2506
    %3666 = vmatprep.subr.mxu0 0.0
    %3667 = vmatpush1.msra.mxu0 %v2503
    %3668 = vmatprep.subr.mxu0 0.0
    %3669 = vmatpush1.msra.mxu0 %v2500
    %3670 = vmatprep.subr.mxu0 0.0
    %3671 = vmatpush2.msra.mxu0 0.0
    %3672 = vmatprep.subr.mxu0 0.0
    %3673 = vmatpush2.msra.mxu0 0.0
    %3674 = vmatprep.subr.mxu0 0.0
    %3675 = vmatpush2.msra.mxu0 0.0
    %3676 = vmatprep.subr.mxu0 0.0
    %3677 = vmatpush2.msra.mxu0 0.0
    %3678 = vmatprep.subr.mxu0 0.0
    %3679 = vmatpush2.msra.mxu0 0.0
    %3680 = vmatprep.subr.mxu0 0.0
    %3681 = vmatpush2.msra.mxu0 0.0
    %3682 = vmatprep.subr.mxu0 0.0
    %3683 = vmatpush2.msra.mxu0 0.0
    %3684 = vmatprep.subr.mxu0 0.0
    %3685 = vmatpush2.msra.mxu0 0.0
    %3686 = vmatprep.subr.mxu0 0.0
    %3687 = vmatpush2.msra.mxu0 0.0
    %3688 = vmatprep.subr.mxu0 0.0
    %3689 = vmatpush2.msra.mxu0 0.0
    %3690 = vmatprep.subr.mxu0 0.0
    %3691 = vmatpush2.msra.mxu0 0.0
    %3692 = vmatprep.subr.mxu0 0.0
    %3693 = vmatpush2.msra.mxu0 0.0
    %3694 = vmatprep.subr.mxu0 0.0
    %3695 = vmatpush2.msra.mxu0 0.0
    %3696 = vmatprep.subr.mxu0 0.0
    %3697 = vmatpush2.msra.mxu0 0.0
    %3698 = vmatprep.subr.mxu0 0.0
    %3699 = vmatpush2.msra.mxu0 0.0
    %3700 = vmatprep.subr.mxu0 0.0
    %3701 = vmatpush2.msra.mxu0 0.0
    %3702 = vmatprep.mubr.f32.mxu0 0.0
    %3703 = vmatmul.mubr.f32.gmra.mxu0 %v3562
    %v3704 = vpop.f32.mrf.mxu0
    %v3705 = vadd.f32 0.0, %v3704
    %v3706 = vpop.f32.mrf.mxu0
    %3707 = vdwg.mxu0
    %v3708 = vadd.f32 %v3563, %v3634
    %v3709 = vadd.f32 %v3564, %v3636
    %v3710 = vadd.f32 %v3565, %v3705
    %3711 = vmatprep.subr.mxu0 0.0
    %3712 = vmatpush1.msra.mxu0 %v2562
    %3713 = vmatprep.subr.mxu0 0.0
    %3714 = vmatpush1.msra.mxu0 %v2561
    %3715 = vmatprep.subr.mxu0 0.0
    %3716 = vmatpush1.msra.mxu0 %v2560
    %3717 = vmatprep.subr.mxu0 0.0
    %3718 = vmatpush1.msra.mxu0 %v2559
    %3719 = vmatprep.subr.mxu0 0.0
    %3720 = vmatpush1.msra.mxu0 %v2558
    %3721 = vmatprep.subr.mxu0 0.0
    %3722 = vmatpush1.msra.mxu0 %v2557
    %3723 = vmatprep.subr.mxu0 0.0
    %3724 = vmatpush1.msra.mxu0 %v2556
    %3725 = vmatprep.subr.mxu0 0.0
    %3726 = vmatpush1.msra.mxu0 %v2555
    %3727 = vmatprep.subr.mxu0 0.0
    %3728 = vmatpush1.msra.mxu0 %v2554
    %3729 = vmatprep.subr.mxu0 0.0
    %3730 = vmatpush1.msra.mxu0 %v2553
    %3731 = vmatprep.subr.mxu0 0.0
    %3732 = vmatpush1.msra.mxu0 %v2552
    %3733 = vmatprep.subr.mxu0 0.0
    %3734 = vmatpush1.msra.mxu0 %v2551
    %3735 = vmatprep.subr.mxu0 0.0
    %3736 = vmatpush1.msra.mxu0 %v2550
    %3737 = vmatprep.subr.mxu0 0.0
    %3738 = vmatpush1.msra.mxu0 %v2549
    %3739 = vmatprep.subr.mxu0 0.0
    %3740 = vmatpush1.msra.mxu0 %v2548
    %3741 = vmatprep.subr.mxu0 0.0
    %3742 = vmatpush1.msra.mxu0 %v2547
    %3743 = vmatprep.subr.mxu0 0.0
    %3744 = vmatpush2.msra.mxu0 0.0
    %3745 = vmatprep.subr.mxu0 0.0
    %3746 = vmatpush2.msra.mxu0 0.0
    %3747 = vmatprep.subr.mxu0 0.0
    %3748 = vmatpush2.msra.mxu0 0.0
    %3749 = vmatprep.subr.mxu0 0.0
    %3750 = vmatpush2.msra.mxu0 0.0
    %3751 = vmatprep.subr.mxu0 0.0
    %3752 = vmatpush2.msra.mxu0 0.0
    %3753 = vmatprep.subr.mxu0 0.0
    %3754 = vmatpush2.msra.mxu0 0.0
    %3755 = vmatprep.subr.mxu0 0.0
    %3756 = vmatpush2.msra.mxu0 0.0
    %3757 = vmatprep.subr.mxu0 0.0
    %3758 = vmatpush2.msra.mxu0 0.0
    %3759 = vmatprep.subr.mxu0 0.0
    %3760 = vmatpush2.msra.mxu0 0.0
    %3761 = vmatprep.subr.mxu0 0.0
    %3762 = vmatpush2.msra.mxu0 0.0
    %3763 = vmatprep.subr.mxu0 0.0
    %3764 = vmatpush2.msra.mxu0 0.0
    %3765 = vmatprep.subr.mxu0 0.0
    %3766 = vmatpush2.msra.mxu0 0.0
    %3767 = vmatprep.subr.mxu0 0.0
    %3768 = vmatpush2.msra.mxu0 0.0
    %3769 = vmatprep.subr.mxu0 0.0
    %3770 = vmatpush2.msra.mxu0 0.0
    %3771 = vmatprep.subr.mxu0 0.0
    %3772 = vmatpush2.msra.mxu0 0.0
    %3773 = vmatprep.subr.mxu0 0.0
    %3774 = vmatpush2.msra.mxu0 0.0
    %3775 = vmatprep.mubr.f32.mxu0 0.0
    %3776 = vmatmul.mubr.f32.gmra.mxu0 %v3562
    %v3777 = vpop.f32.mrf.mxu0
    %v3778 = vadd.f32 0.0, %v3777
    %v3779 = vpop.f32.mrf.mxu0
    %3780 = vdwg.mxu0
    %v3781 = vadd.f32 %v3566, %v3778
    %v3782 = vmul.f32 %v3708, 0.5
    %v3783 = vmul.f32 %v3709, 0.5
    %v3784 = vmul.f32 %v3710, 0.5
    %v3785 = vtanh.pop %v3782
    %v3786 = vtanh.pop %v3783
    %v3787 = vtanh.pop %v3784
    %v3788 = vmul.f32 %v3785, 0.5
    %v3789 = vmul.f32 %v3786, 0.5
    %v3790 = vmul.f32 %v3787, 0.5
    %v3791 = vadd.f32 %v3788, 0.5
    %v3792 = vadd.f32 %v3789, 0.5
    %v3793 = vadd.f32 %v3790, 0.5
    %v3794 = vtanh.pop %v3781
    %v3795 = vmul.f32 %v3792, %v3560
    %v3796 = vmul.f32 %v3791, %v3794
    %v3797 = vadd.f32 %v3795, %v3796
    %v3798 = vtanh.pop %v3797
    %v3799 = vmul.f32 %v3793, %v3798
    %v3800 = vld [vmem:[%s1473] sm:$0xff]
    %v3801 = vld [vmem:[%s1473 + $0x8] sm:$0xff]
    %v3802 = vld [vmem:[%s1473 + $0x10] sm:$0xff]
    %v3803 = vld [vmem:[%s1473 + $0x18] sm:$0xff]
    %3804 = vmatprep.subr.mxu0 %v2544
    %3805 = vmatpush1.msra.mxu0 %v2543
    %3806 = vmatprep.subr.mxu0 %v2541
    %3807 = vmatpush1.msra.mxu0 %v2540
    %3808 = vmatprep.subr.mxu0 %v2538
    %3809 = vmatpush1.msra.mxu0 %v2537
    %3810 = vmatprep.subr.mxu0 %v2535
    %3811 = vmatpush1.msra.mxu0 %v2534
    %3812 = vmatprep.subr.mxu0 %v2532
    %3813 = vmatpush1.msra.mxu0 %v2531
    %3814 = vmatprep.subr.mxu0 %v2529
    %3815 = vmatpush1.msra.mxu0 %v2528
    %3816 = vmatprep.subr.mxu0 %v2526
    %3817 = vmatpush1.msra.mxu0 %v2525
    %3818 = vmatprep.subr.mxu0 %v2523
    %3819 = vmatpush1.msra.mxu0 %v2522
    %3820 = vmatprep.subr.mxu0 %v2520
    %3821 = vmatpush1.msra.mxu0 %v2519
    %3822 = vmatprep.subr.mxu0 %v2517
    %3823 = vmatpush1.msra.mxu0 %v2516
    %3824 = vmatprep.subr.mxu0 %v2514
    %3825 = vmatpush1.msra.mxu0 %v2513
    %3826 = vmatprep.subr.mxu0 %v2511
    %3827 = vmatpush1.msra.mxu0 %v2510
    %3828 = vmatprep.subr.mxu0 %v2508
    %3829 = vmatpush1.msra.mxu0 %v2507
    %3830 = vmatprep.subr.mxu0 %v2505
    %3831 = vmatpush1.msra.mxu0 %v2504
    %3832 = vmatprep.subr.mxu0 %v2502
    %3833 = vmatpush1.msra.mxu0 %v2501
    %3834 = vmatprep.subr.mxu0 %v2499
    %3835 = vmatpush1.msra.mxu0 %v2498
    %3836 = vmatprep.subr.mxu0 0.0
    %3837 = vmatpush2.msra.mxu0 0.0
    %3838 = vmatprep.subr.mxu0 0.0
    %3839 = vmatpush2.msra.mxu0 0.0
    %3840 = vmatprep.subr.mxu0 0.0
    %3841 = vmatpush2.msra.mxu0 0.0
    %3842 = vmatprep.subr.mxu0 0.0
    %3843 = vmatpush2.msra.mxu0 0.0
    %3844 = vmatprep.subr.mxu0 0.0
    %3845 = vmatpush2.msra.mxu0 0.0
    %3846 = vmatprep.subr.mxu0 0.0
    %3847 = vmatpush2.msra.mxu0 0.0
    %3848 = vmatprep.subr.mxu0 0.0
    %3849 = vmatpush2.msra.mxu0 0.0
    %3850 = vmatprep.subr.mxu0 0.0
    %3851 = vmatpush2.msra.mxu0 0.0
    %3852 = vmatprep.subr.mxu0 0.0
    %3853 = vmatpush2.msra.mxu0 0.0
    %3854 = vmatprep.subr.mxu0 0.0
    %3855 = vmatpush2.msra.mxu0 0.0
    %3856 = vmatprep.subr.mxu0 0.0
    %3857 = vmatpush2.msra.mxu0 0.0
    %3858 = vmatprep.subr.mxu0 0.0
    %3859 = vmatpush2.msra.mxu0 0.0
    %3860 = vmatprep.subr.mxu0 0.0
    %3861 = vmatpush2.msra.mxu0 0.0
    %3862 = vmatprep.subr.mxu0 0.0
    %3863 = vmatpush2.msra.mxu0 0.0
    %3864 = vmatprep.subr.mxu0 0.0
    %3865 = vmatpush2.msra.mxu0 0.0
    %3866 = vmatprep.subr.mxu0 0.0
    %3867 = vmatpush2.msra.mxu0 0.0
    %3868 = vmatprep.mubr.f32.mxu0 0.0
    %3869 = vmatmul.mubr.f32.gmra.mxu0 %v3799
    %v3870 = vpop.f32.mrf.mxu0
    %v3871 = vadd.f32 0.0, %v3870
    %v3872 = vpop.f32.mrf.mxu0
    %v3873 = vadd.f32 0.0, %v3872
    %3874 = vdwg.mxu0
    %3875 = vmatprep.subr.mxu0 0.0
    %3876 = vmatpush1.msra.mxu0 %v2545
    %3877 = vmatprep.subr.mxu0 0.0
    %3878 = vmatpush1.msra.mxu0 %v2542
    %3879 = vmatprep.subr.mxu0 0.0
    %3880 = vmatpush1.msra.mxu0 %v2539
    %3881 = vmatprep.subr.mxu0 0.0
    %3882 = vmatpush1.msra.mxu0 %v2536
    %3883 = vmatprep.subr.mxu0 0.0
    %3884 = vmatpush1.msra.mxu0 %v2533
    %3885 = vmatprep.subr.mxu0 0.0
    %3886 = vmatpush1.msra.mxu0 %v2530
    %3887 = vmatprep.subr.mxu0 0.0
    %3888 = vmatpush1.msra.mxu0 %v2527
    %3889 = vmatprep.subr.mxu0 0.0
    %3890 = vmatpush1.msra.mxu0 %v2524
    %3891 = vmatprep.subr.mxu0 0.0
    %3892 = vmatpush1.msra.mxu0 %v2521
    %3893 = vmatprep.subr.mxu0 0.0
    %3894 = vmatpush1.msra.mxu0 %v2518
    %3895 = vmatprep.subr.mxu0 0.0
    %3896 = vmatpush1.msra.mxu0 %v2515
    %3897 = vmatprep.subr.mxu0 0.0
    %3898 = vmatpush1.msra.mxu0 %v2512
    %3899 = vmatprep.subr.mxu0 0.0
    %3900 = vmatpush1.msra.mxu0 %v2509
    %3901 = vmatprep.subr.mxu0 0.0
    %3902 = vmatpush1.msra.mxu0 %v2506
    %3903 = vmatprep.subr.mxu0 0.0
    %3904 = vmatpush1.msra.mxu0 %v2503
    %3905 = vmatprep.subr.mxu0 0.0
    %3906 = vmatpush1.msra.mxu0 %v2500
    %3907 = vmatprep.subr.mxu0 0.0
    %3908 = vmatpush2.msra.mxu0 0.0
    %3909 = vmatprep.subr.mxu0 0.0
    %3910 = vmatpush2.msra.mxu0 0.0
    %3911 = vmatprep.subr.mxu0 0.0
    %3912 = vmatpush2.msra.mxu0 0.0
    %3913 = vmatprep.subr.mxu0 0.0
    %3914 = vmatpush2.msra.mxu0 0.0
    %3915 = vmatprep.subr.mxu0 0.0
    %3916 = vmatpush2.msra.mxu0 0.0
    %3917 = vmatprep.subr.mxu0 0.0
    %3918 = vmatpush2.msra.mxu0 0.0
    %3919 = vmatprep.subr.mxu0 0.0
    %3920 = vmatpush2.msra.mxu0 0.0
    %3921 = vmatprep.subr.mxu0 0.0
    %3922 = vmatpush2.msra.mxu0 0.0
    %3923 = vmatprep.subr.mxu0 0.0
    %3924 = vmatpush2.msra.mxu0 0.0
    %3925 = vmatprep.subr.mxu0 0.0
    %3926 = vmatpush2.msra.mxu0 0.0
    %3927 = vmatprep.subr.mxu0 0.0
    %3928 = vmatpush2.msra.mxu0 0.0
    %3929 = vmatprep.subr.mxu0 0.0
    %3930 = vmatpush2.msra.mxu0 0.0
    %3931 = vmatprep.subr.mxu0 0.0
    %3932 = vmatpush2.msra.mxu0 0.0
    %3933 = vmatprep.subr.mxu0 0.0
    %3934 = vmatpush2.msra.mxu0 0.0
    %3935 = vmatprep.subr.mxu0 0.0
    %3936 = vmatpush2.msra.mxu0 0.0
    %3937 = vmatprep.subr.mxu0 0.0
    %3938 = vmatpush2.msra.mxu0 0.0
    %3939 = vmatprep.mubr.f32.mxu0 0.0
    %3940 = vmatmul.mubr.f32.gmra.mxu0 %v3799
    %v3941 = vpop.f32.mrf.mxu0
    %v3942 = vadd.f32 0.0, %v3941
    %v3943 = vpop.f32.mrf.mxu0
    %3944 = vdwg.mxu0
    %v3945 = vadd.f32 %v3800, %v3871
    %v3946 = vadd.f32 %v3801, %v3873
    %v3947 = vadd.f32 %v3802, %v3942
    %3948 = vmatprep.subr.mxu0 0.0
    %3949 = vmatpush1.msra.mxu0 %v2562
    %3950 = vmatprep.subr.mxu0 0.0
    %3951 = vmatpush1.msra.mxu0 %v2561
    %3952 = vmatprep.subr.mxu0 0.0
    %3953 = vmatpush1.msra.mxu0 %v2560
    %3954 = vmatprep.subr.mxu0 0.0
    %3955 = vmatpush1.msra.mxu0 %v2559
    %3956 = vmatprep.subr.mxu0 0.0
    %3957 = vmatpush1.msra.mxu0 %v2558
    %3958 = vmatprep.subr.mxu0 0.0
    %3959 = vmatpush1.msra.mxu0 %v2557
    %3960 = vmatprep.subr.mxu0 0.0
    %3961 = vmatpush1.msra.mxu0 %v2556
    %3962 = vmatprep.subr.mxu0 0.0
    %3963 = vmatpush1.msra.mxu0 %v2555
    %3964 = vmatprep.subr.mxu0 0.0
    %3965 = vmatpush1.msra.mxu0 %v2554
    %3966 = vmatprep.subr.mxu0 0.0
    %3967 = vmatpush1.msra.mxu0 %v2553
    %3968 = vmatprep.subr.mxu0 0.0
    %3969 = vmatpush1.msra.mxu0 %v2552
    %3970 = vmatprep.subr.mxu0 0.0
    %3971 = vmatpush1.msra.mxu0 %v2551
    %3972 = vmatprep.subr.mxu0 0.0
    %3973 = vmatpush1.msra.mxu0 %v2550
    %3974 = vmatprep.subr.mxu0 0.0
    %3975 = vmatpush1.msra.mxu0 %v2549
    %3976 = vmatprep.subr.mxu0 0.0
    %3977 = vmatpush1.msra.mxu0 %v2548
    %3978 = vmatprep.subr.mxu0 0.0
    %3979 = vmatpush1.msra.mxu0 %v2547
    %3980 = vmatprep.subr.mxu0 0.0
    %3981 = vmatpush2.msra.mxu0 0.0
    %3982 = vmatprep.subr.mxu0 0.0
    %3983 = vmatpush2.msra.mxu0 0.0
    %3984 = vmatprep.subr.mxu0 0.0
    %3985 = vmatpush2.msra.mxu0 0.0
    %3986 = vmatprep.subr.mxu0 0.0
    %3987 = vmatpush2.msra.mxu0 0.0
    %3988 = vmatprep.subr.mxu0 0.0
    %3989 = vmatpush2.msra.mxu0 0.0
    %3990 = vmatprep.subr.mxu0 0.0
    %3991 = vmatpush2.msra.mxu0 0.0
    %3992 = vmatprep.subr.mxu0 0.0
    %3993 = vmatpush2.msra.mxu0 0.0
    %3994 = vmatprep.subr.mxu0 0.0
    %3995 = vmatpush2.msra.mxu0 0.0
    %3996 = vmatprep.subr.mxu0 0.0
    %3997 = vmatpush2.msra.mxu0 0.0
    %3998 = vmatprep.subr.mxu0 0.0
    %3999 = vmatpush2.msra.mxu0 0.0
    %4000 = vmatprep.subr.mxu0 0.0
    %4001 = vmatpush2.msra.mxu0 0.0
    %4002 = vmatprep.subr.mxu0 0.0
    %4003 = vmatpush2.msra.mxu0 0.0
    %4004 = vmatprep.subr.mxu0 0.0
    %4005 = vmatpush2.msra.mxu0 0.0
    %4006 = vmatprep.subr.mxu0 0.0
    %4007 = vmatpush2.msra.mxu0 0.0
    %4008 = vmatprep.subr.mxu0 0.0
    %4009 = vmatpush2.msra.mxu0 0.0
    %4010 = vmatprep.subr.mxu0 0.0
    %4011 = vmatpush2.msra.mxu0 0.0
    %4012 = vmatprep.mubr.f32.mxu0 0.0
    %4013 = vmatmul.mubr.f32.gmra.mxu0 %v3799
    %v4014 = vpop.f32.mrf.mxu0
    %v4015 = vadd.f32 0.0, %v4014
    %v4016 = vpop.f32.mrf.mxu0
    %4017 = vdwg.mxu0
    %v4018 = vadd.f32 %v3803, %v4015
    %v4019 = vmul.f32 %v3945, 0.5
    %v4020 = vmul.f32 %v3946, 0.5
    %v4021 = vmul.f32 %v3947, 0.5
    %v4022 = vtanh.pop %v4019
    %v4023 = vtanh.pop %v4020
    %v4024 = vtanh.pop %v4021
    %v4025 = vmul.f32 %v4022, 0.5
    %v4026 = vmul.f32 %v4023, 0.5
    %v4027 = vmul.f32 %v4024, 0.5
    %v4028 = vadd.f32 %v4025, 0.5
    %v4029 = vadd.f32 %v4026, 0.5
    %v4030 = vadd.f32 %v4027, 0.5
    %v4031 = vtanh.pop %v4018
    %v4032 = vmul.f32 %v4029, %v3797
    %v4033 = vmul.f32 %v4028, %v4031
    %v4034 = vadd.f32 %v4032, %v4033
    %v4035 = vtanh.pop %v4034
    %v4036 = vmul.f32 %v4030, %v4035
    %v4037 = vld [vmem:[%s1713] sm:$0xff]
    %v4038 = vld [vmem:[%s1713 + $0x8] sm:$0xff]
    %v4039 = vld [vmem:[%s1713 + $0x10] sm:$0xff]
    %v4040 = vld [vmem:[%s1713 + $0x18] sm:$0xff]
    %4041 = vmatprep.subr.mxu0 %v2544
    %4042 = vmatpush1.msra.mxu0 %v2543
    %4043 = vmatprep.subr.mxu0 %v2541
    %4044 = vmatpush1.msra.mxu0 %v2540
    %4045 = vmatprep.subr.mxu0 %v2538
    %4046 = vmatpush1.msra.mxu0 %v2537
    %4047 = vmatprep.subr.mxu0 %v2535
    %4048 = vmatpush1.msra.mxu0 %v2534
    %4049 = vmatprep.subr.mxu0 %v2532
    %4050 = vmatpush1.msra.mxu0 %v2531
    %4051 = vmatprep.subr.mxu0 %v2529
    %4052 = vmatpush1.msra.mxu0 %v2528
    %4053 = vmatprep.subr.mxu0 %v2526
    %4054 = vmatpush1.msra.mxu0 %v2525
    %4055 = vmatprep.subr.mxu0 %v2523
    %4056 = vmatpush1.msra.mxu0 %v2522
    %4057 = vmatprep.subr.mxu0 %v2520
    %4058 = vmatpush1.msra.mxu0 %v2519
    %4059 = vmatprep.subr.mxu0 %v2517
    %4060 = vmatpush1.msra.mxu0 %v2516
    %4061 = vmatprep.subr.mxu0 %v2514
    %4062 = vmatpush1.msra.mxu0 %v2513
    %4063 = vmatprep.subr.mxu0 %v2511
    %4064 = vmatpush1.msra.mxu0 %v2510
    %4065 = vmatprep.subr.mxu0 %v2508
    %4066 = vmatpush1.msra.mxu0 %v2507
    %4067 = vmatprep.subr.mxu0 %v2505
    %4068 = vmatpush1.msra.mxu0 %v2504
    %4069 = vmatprep.subr.mxu0 %v2502
    %4070 = vmatpush1.msra.mxu0 %v2501
    %4071 = vmatprep.subr.mxu0 %v2499
    %4072 = vmatpush1.msra.mxu0 %v2498
    %4073 = vmatprep.subr.mxu0 0.0
    %4074 = vmatpush2.msra.mxu0 0.0
    %4075 = vmatprep.subr.mxu0 0.0
    %4076 = vmatpush2.msra.mxu0 0.0
    %4077 = vmatprep.subr.mxu0 0.0
    %4078 = vmatpush2.msra.mxu0 0.0
    %4079 = vmatprep.subr.mxu0 0.0
    %4080 = vmatpush2.msra.mxu0 0.0
    %4081 = vmatprep.subr.mxu0 0.0
    %4082 = vmatpush2.msra.mxu0 0.0
    %4083 = vmatprep.subr.mxu0 0.0
    %4084 = vmatpush2.msra.mxu0 0.0
    %4085 = vmatprep.subr.mxu0 0.0
    %4086 = vmatpush2.msra.mxu0 0.0
    %4087 = vmatprep.subr.mxu0 0.0
    %4088 = vmatpush2.msra.mxu0 0.0
    %4089 = vmatprep.subr.mxu0 0.0
    %4090 = vmatpush2.msra.mxu0 0.0
    %4091 = vmatprep.subr.mxu0 0.0
    %4092 = vmatpush2.msra.mxu0 0.0
    %4093 = vmatprep.subr.mxu0 0.0
    %4094 = vmatpush2.msra.mxu0 0.0
    %4095 = vmatprep.subr.mxu0 0.0
    %4096 = vmatpush2.msra.mxu0 0.0
    %4097 = vmatprep.subr.mxu0 0.0
    %4098 = vmatpush2.msra.mxu0 0.0
    %4099 = vmatprep.subr.mxu0 0.0
    %4100 = vmatpush2.msra.mxu0 0.0
    %4101 = vmatprep.subr.mxu0 0.0
    %4102 = vmatpush2.msra.mxu0 0.0
    %4103 = vmatprep.subr.mxu0 0.0
    %4104 = vmatpush2.msra.mxu0 0.0
    %4105 = vmatprep.mubr.f32.mxu0 0.0
    %4106 = vmatmul.mubr.f32.gmra.mxu0 %v4036
    %v4107 = vpop.f32.mrf.mxu0
    %v4108 = vadd.f32 0.0, %v4107
    %v4109 = vpop.f32.mrf.mxu0
    %v4110 = vadd.f32 0.0, %v4109
    %4111 = vdwg.mxu0
    %4112 = vmatprep.subr.mxu0 0.0
    %4113 = vmatpush1.msra.mxu0 %v2545
    %4114 = vmatprep.subr.mxu0 0.0
    %4115 = vmatpush1.msra.mxu0 %v2542
    %4116 = vmatprep.subr.mxu0 0.0
    %4117 = vmatpush1.msra.mxu0 %v2539
    %4118 = vmatprep.subr.mxu0 0.0
    %4119 = vmatpush1.msra.mxu0 %v2536
    %4120 = vmatprep.subr.mxu0 0.0
    %4121 = vmatpush1.msra.mxu0 %v2533
    %4122 = vmatprep.subr.mxu0 0.0
    %4123 = vmatpush1.msra.mxu0 %v2530
    %4124 = vmatprep.subr.mxu0 0.0
    %4125 = vmatpush1.msra.mxu0 %v2527
    %4126 = vmatprep.subr.mxu0 0.0
    %4127 = vmatpush1.msra.mxu0 %v2524
    %4128 = vmatprep.subr.mxu0 0.0
    %4129 = vmatpush1.msra.mxu0 %v2521
    %4130 = vmatprep.subr.mxu0 0.0
    %4131 = vmatpush1.msra.mxu0 %v2518
    %4132 = vmatprep.subr.mxu0 0.0
    %4133 = vmatpush1.msra.mxu0 %v2515
    %4134 = vmatprep.subr.mxu0 0.0
    %4135 = vmatpush1.msra.mxu0 %v2512
    %4136 = vmatprep.subr.mxu0 0.0
    %4137 = vmatpush1.msra.mxu0 %v2509
    %4138 = vmatprep.subr.mxu0 0.0
    %4139 = vmatpush1.msra.mxu0 %v2506
    %4140 = vmatprep.subr.mxu0 0.0
    %4141 = vmatpush1.msra.mxu0 %v2503
    %4142 = vmatprep.subr.mxu0 0.0
    %4143 = vmatpush1.msra.mxu0 %v2500
    %4144 = vmatprep.subr.mxu0 0.0
    %4145 = vmatpush2.msra.mxu0 0.0
    %4146 = vmatprep.subr.mxu0 0.0
    %4147 = vmatpush2.msra.mxu0 0.0
    %4148 = vmatprep.subr.mxu0 0.0
    %4149 = vmatpush2.msra.mxu0 0.0
    %4150 = vmatprep.subr.mxu0 0.0
    %4151 = vmatpush2.msra.mxu0 0.0
    %4152 = vmatprep.subr.mxu0 0.0
    %4153 = vmatpush2.msra.mxu0 0.0
    %4154 = vmatprep.subr.mxu0 0.0
    %4155 = vmatpush2.msra.mxu0 0.0
    %4156 = vmatprep.subr.mxu0 0.0
    %4157 = vmatpush2.msra.mxu0 0.0
    %4158 = vmatprep.subr.mxu0 0.0
    %4159 = vmatpush2.msra.mxu0 0.0
    %4160 = vmatprep.subr.mxu0 0.0
    %4161 = vmatpush2.msra.mxu0 0.0
    %4162 = vmatprep.subr.mxu0 0.0
    %4163 = vmatpush2.msra.mxu0 0.0
    %4164 = vmatprep.subr.mxu0 0.0
    %4165 = vmatpush2.msra.mxu0 0.0
    %4166 = vmatprep.subr.mxu0 0.0
    %4167 = vmatpush2.msra.mxu0 0.0
    %4168 = vmatprep.subr.mxu0 0.0
    %4169 = vmatpush2.msra.mxu0 0.0
    %4170 = vmatprep.subr.mxu0 0.0
    %4171 = vmatpush2.msra.mxu0 0.0
    %4172 = vmatprep.subr.mxu0 0.0
    %4173 = vmatpush2.msra.mxu0 0.0
    %4174 = vmatprep.subr.mxu0 0.0
    %4175 = vmatpush2.msra.mxu0 0.0
    %4176 = vmatprep.mubr.f32.mxu0 0.0
    %4177 = vmatmul.mubr.f32.gmra.mxu0 %v4036
    %v4178 = vpop.f32.mrf.mxu0
    %v4179 = vadd.f32 0.0, %v4178
    %v4180 = vpop.f32.mrf.mxu0
    %4181 = vdwg.mxu0
    %v4182 = vadd.f32 %v4037, %v4108
    %v4183 = vadd.f32 %v4038, %v4110
    %v4184 = vadd.f32 %v4039, %v4179
    %4185 = vmatprep.subr.mxu0 0.0
    %4186 = vmatpush1.msra.mxu0 %v2562
    %4187 = vmatprep.subr.mxu0 0.0
    %4188 = vmatpush1.msra.mxu0 %v2561
    %4189 = vmatprep.subr.mxu0 0.0
    %4190 = vmatpush1.msra.mxu0 %v2560
    %4191 = vmatprep.subr.mxu0 0.0
    %4192 = vmatpush1.msra.mxu0 %v2559
    %4193 = vmatprep.subr.mxu0 0.0
    %4194 = vmatpush1.msra.mxu0 %v2558
    %4195 = vmatprep.subr.mxu0 0.0
    %4196 = vmatpush1.msra.mxu0 %v2557
    %4197 = vmatprep.subr.mxu0 0.0
    %4198 = vmatpush1.msra.mxu0 %v2556
    %4199 = vmatprep.subr.mxu0 0.0
    %4200 = vmatpush1.msra.mxu0 %v2555
    %4201 = vmatprep.subr.mxu0 0.0
    %4202 = vmatpush1.msra.mxu0 %v2554
    %4203 = vmatprep.subr.mxu0 0.0
    %4204 = vmatpush1.msra.mxu0 %v2553
    %4205 = vmatprep.subr.mxu0 0.0
    %4206 = vmatpush1.msra.mxu0 %v2552
    %4207 = vmatprep.subr.mxu0 0.0
    %4208 = vmatpush1.msra.mxu0 %v2551
    %4209 = vmatprep.subr.mxu0 0.0
    %4210 = vmatpush1.msra.mxu0 %v2550
    %4211 = vmatprep.subr.mxu0 0.0
    %4212 = vmatpush1.msra.mxu0 %v2549
    %4213 = vmatprep.subr.mxu0 0.0
    %4214 = vmatpush1.msra.mxu0 %v2548
    %4215 = vmatprep.subr.mxu0 0.0
    %4216 = vmatpush1.msra.mxu0 %v2547
    %4217 = vmatprep.subr.mxu0 0.0
    %4218 = vmatpush2.msra.mxu0 0.0
    %4219 = vmatprep.subr.mxu0 0.0
    %4220 = vmatpush2.msra.mxu0 0.0
    %4221 = vmatprep.subr.mxu0 0.0
    %4222 = vmatpush2.msra.mxu0 0.0
    %4223 = vmatprep.subr.mxu0 0.0
    %4224 = vmatpush2.msra.mxu0 0.0
    %4225 = vmatprep.subr.mxu0 0.0
    %4226 = vmatpush2.msra.mxu0 0.0
    %4227 = vmatprep.subr.mxu0 0.0
    %4228 = vmatpush2.msra.mxu0 0.0
    %4229 = vmatprep.subr.mxu0 0.0
    %4230 = vmatpush2.msra.mxu0 0.0
    %4231 = vmatprep.subr.mxu0 0.0
    %4232 = vmatpush2.msra.mxu0 0.0
    %4233 = vmatprep.subr.mxu0 0.0
    %4234 = vmatpush2.msra.mxu0 0.0
    %4235 = vmatprep.subr.mxu0 0.0
    %4236 = vmatpush2.msra.mxu0 0.0
    %4237 = vmatprep.subr.mxu0 0.0
    %4238 = vmatpush2.msra.mxu0 0.0
    %4239 = vmatprep.subr.mxu0 0.0
    %4240 = vmatpush2.msra.mxu0 0.0
    %4241 = vmatprep.subr.mxu0 0.0
    %4242 = vmatpush2.msra.mxu0 0.0
    %4243 = vmatprep.subr.mxu0 0.0
    %4244 = vmatpush2.msra.mxu0 0.0
    %4245 = vmatprep.subr.mxu0 0.0
    %4246 = vmatpush2.msra.mxu0 0.0
    %4247 = vmatprep.subr.mxu0 0.0
    %4248 = vmatpush2.msra.mxu0 0.0
    %4249 = vmatprep.mubr.f32.mxu0 0.0
    %4250 = vmatmul.mubr.f32.gmra.mxu0 %v4036
    %v4251 = vpop.f32.mrf.mxu0
    %v4252 = vadd.f32 0.0, %v4251
    %v4253 = vpop.f32.mrf.mxu0
    %4254 = vdwg.mxu0
    %v4255 = vadd.f32 %v4040, %v4252
    %v4256 = vmul.f32 %v4182, 0.5
    %v4257 = vmul.f32 %v4183, 0.5
    %v4258 = vmul.f32 %v4184, 0.5
    %v4259 = vtanh.pop %v4256
    %v4260 = vtanh.pop %v4257
    %v4261 = vtanh.pop %v4258
    %v4262 = vmul.f32 %v4259, 0.5
    %v4263 = vmul.f32 %v4260, 0.5
    %v4264 = vmul.f32 %v4261, 0.5
    %v4265 = vadd.f32 %v4262, 0.5
    %v4266 = vadd.f32 %v4263, 0.5
    %v4267 = vadd.f32 %v4264, 0.5
    %v4268 = vtanh.pop %v4255
    %v4269 = vmul.f32 %v4266, %v4034
    %v4270 = vmul.f32 %v4265, %v4268
    %v4271 = vadd.f32 %v4269, %v4270
    %v4272 = vtanh.pop %v4271
    %v4273 = vmul.f32 %v4267, %v4272
    %v4274 = vld [vmem:[%s1953] sm:$0xff]
    %v4275 = vld [vmem:[%s1953 + $0x8] sm:$0xff]
    %v4276 = vld [vmem:[%s1953 + $0x10] sm:$0xff]
    %v4277 = vld [vmem:[%s1953 + $0x18] sm:$0xff]
    %4278 = vmatprep.subr.mxu0 %v2544
    %4279 = vmatpush1.msra.mxu0 %v2543
    %4280 = vmatprep.subr.mxu0 %v2541
    %4281 = vmatpush1.msra.mxu0 %v2540
    %4282 = vmatprep.subr.mxu0 %v2538
    %4283 = vmatpush1.msra.mxu0 %v2537
    %4284 = vmatprep.subr.mxu0 %v2535
    %4285 = vmatpush1.msra.mxu0 %v2534
    %4286 = vmatprep.subr.mxu0 %v2532
    %4287 = vmatpush1.msra.mxu0 %v2531
    %4288 = vmatprep.subr.mxu0 %v2529
    %4289 = vmatpush1.msra.mxu0 %v2528
    %4290 = vmatprep.subr.mxu0 %v2526
    %4291 = vmatpush1.msra.mxu0 %v2525
    %4292 = vmatprep.subr.mxu0 %v2523
    %4293 = vmatpush1.msra.mxu0 %v2522
    %4294 = vmatprep.subr.mxu0 %v2520
    %4295 = vmatpush1.msra.mxu0 %v2519
    %4296 = vmatprep.subr.mxu0 %v2517
    %4297 = vmatpush1.msra.mxu0 %v2516
    %4298 = vmatprep.subr.mxu0 %v2514
    %4299 = vmatpush1.msra.mxu0 %v2513
    %4300 = vmatprep.subr.mxu0 %v2511
    %4301 = vmatpush1.msra.mxu0 %v2510
    %4302 = vmatprep.subr.mxu0 %v2508
    %4303 = vmatpush1.msra.mxu0 %v2507
    %4304 = vmatprep.subr.mxu0 %v2505
    %4305 = vmatpush1.msra.mxu0 %v2504
    %4306 = vmatprep.subr.mxu0 %v2502
    %4307 = vmatpush1.msra.mxu0 %v2501
    %4308 = vmatprep.subr.mxu0 %v2499
    %4309 = vmatpush1.msra.mxu0 %v2498
    %4310 = vmatprep.subr.mxu0 0.0
    %4311 = vmatpush2.msra.mxu0 0.0
    %4312 = vmatprep.subr.mxu0 0.0
    %4313 = vmatpush2.msra.mxu0 0.0
    %4314 = vmatprep.subr.mxu0 0.0
    %4315 = vmatpush2.msra.mxu0 0.0
    %4316 = vmatprep.subr.mxu0 0.0
    %4317 = vmatpush2.msra.mxu0 0.0
    %4318 = vmatprep.subr.mxu0 0.0
    %4319 = vmatpush2.msra.mxu0 0.0
    %4320 = vmatprep.subr.mxu0 0.0
    %4321 = vmatpush2.msra.mxu0 0.0
    %4322 = vmatprep.subr.mxu0 0.0
    %4323 = vmatpush2.msra.mxu0 0.0
    %4324 = vmatprep.subr.mxu0 0.0
    %4325 = vmatpush2.msra.mxu0 0.0
    %4326 = vmatprep.subr.mxu0 0.0
    %4327 = vmatpush2.msra.mxu0 0.0
    %4328 = vmatprep.subr.mxu0 0.0
    %4329 = vmatpush2.msra.mxu0 0.0
    %4330 = vmatprep.subr.mxu0 0.0
    %4331 = vmatpush2.msra.mxu0 0.0
    %4332 = vmatprep.subr.mxu0 0.0
    %4333 = vmatpush2.msra.mxu0 0.0
    %4334 = vmatprep.subr.mxu0 0.0
    %4335 = vmatpush2.msra.mxu0 0.0
    %4336 = vmatprep.subr.mxu0 0.0
    %4337 = vmatpush2.msra.mxu0 0.0
    %4338 = vmatprep.subr.mxu0 0.0
    %4339 = vmatpush2.msra.mxu0 0.0
    %4340 = vmatprep.subr.mxu0 0.0
    %4341 = vmatpush2.msra.mxu0 0.0
    %4342 = vmatprep.mubr.f32.mxu0 0.0
    %4343 = vmatmul.mubr.f32.gmra.mxu0 %v4273
    %v4344 = vpop.f32.mrf.mxu0
    %v4345 = vadd.f32 0.0, %v4344
    %v4346 = vpop.f32.mrf.mxu0
    %v4347 = vadd.f32 0.0, %v4346
    %4348 = vdwg.mxu0
    %4349 = vmatprep.subr.mxu0 0.0
    %4350 = vmatpush1.msra.mxu0 %v2545
    %4351 = vmatprep.subr.mxu0 0.0
    %4352 = vmatpush1.msra.mxu0 %v2542
    %4353 = vmatprep.subr.mxu0 0.0
    %4354 = vmatpush1.msra.mxu0 %v2539
    %4355 = vmatprep.subr.mxu0 0.0
    %4356 = vmatpush1.msra.mxu0 %v2536
    %4357 = vmatprep.subr.mxu0 0.0
    %4358 = vmatpush1.msra.mxu0 %v2533
    %4359 = vmatprep.subr.mxu0 0.0
    %4360 = vmatpush1.msra.mxu0 %v2530
    %4361 = vmatprep.subr.mxu0 0.0
    %4362 = vmatpush1.msra.mxu0 %v2527
    %4363 = vmatprep.subr.mxu0 0.0
    %4364 = vmatpush1.msra.mxu0 %v2524
    %4365 = vmatprep.subr.mxu0 0.0
    %4366 = vmatpush1.msra.mxu0 %v2521
    %4367 = vmatprep.subr.mxu0 0.0
    %4368 = vmatpush1.msra.mxu0 %v2518
    %4369 = vmatprep.subr.mxu0 0.0
    %4370 = vmatpush1.msra.mxu0 %v2515
    %4371 = vmatprep.subr.mxu0 0.0
    %4372 = vmatpush1.msra.mxu0 %v2512
    %4373 = vmatprep.subr.mxu0 0.0
    %4374 = vmatpush1.msra.mxu0 %v2509
    %4375 = vmatprep.subr.mxu0 0.0
    %4376 = vmatpush1.msra.mxu0 %v2506
    %4377 = vmatprep.subr.mxu0 0.0
    %4378 = vmatpush1.msra.mxu0 %v2503
    %4379 = vmatprep.subr.mxu0 0.0
    %4380 = vmatpush1.msra.mxu0 %v2500
    %4381 = vmatprep.subr.mxu0 0.0
    %4382 = vmatpush2.msra.mxu0 0.0
    %4383 = vmatprep.subr.mxu0 0.0
    %4384 = vmatpush2.msra.mxu0 0.0
    %4385 = vmatprep.subr.mxu0 0.0
    %4386 = vmatpush2.msra.mxu0 0.0
    %4387 = vmatprep.subr.mxu0 0.0
    %4388 = vmatpush2.msra.mxu0 0.0
    %4389 = vmatprep.subr.mxu0 0.0
    %4390 = vmatpush2.msra.mxu0 0.0
    %4391 = vmatprep.subr.mxu0 0.0
    %4392 = vmatpush2.msra.mxu0 0.0
    %4393 = vmatprep.subr.mxu0 0.0
    %4394 = vmatpush2.msra.mxu0 0.0
    %4395 = vmatprep.subr.mxu0 0.0
    %4396 = vmatpush2.msra.mxu0 0.0
    %4397 = vmatprep.subr.mxu0 0.0
    %4398 = vmatpush2.msra.mxu0 0.0
    %4399 = vmatprep.subr.mxu0 0.0
    %4400 = vmatpush2.msra.mxu0 0.0
    %4401 = vmatprep.subr.mxu0 0.0
    %4402 = vmatpush2.msra.mxu0 0.0
    %4403 = vmatprep.subr.mxu0 0.0
    %4404 = vmatpush2.msra.mxu0 0.0
    %4405 = vmatprep.subr.mxu0 0.0
    %4406 = vmatpush2.msra.mxu0 0.0
    %4407 = vmatprep.subr.mxu0 0.0
    %4408 = vmatpush2.msra.mxu0 0.0
    %4409 = vmatprep.subr.mxu0 0.0
    %4410 = vmatpush2.msra.mxu0 0.0
    %4411 = vmatprep.subr.mxu0 0.0
    %4412 = vmatpush2.msra.mxu0 0.0
    %4413 = vmatprep.mubr.f32.mxu0 0.0
    %4414 = vmatmul.mubr.f32.gmra.mxu0 %v4273
    %v4415 = vpop.f32.mrf.mxu0
    %v4416 = vadd.f32 0.0, %v4415
    %v4417 = vpop.f32.mrf.mxu0
    %4418 = vdwg.mxu0
    %v4419 = vadd.f32 %v4274, %v4345
    %v4420 = vadd.f32 %v4275, %v4347
    %v4421 = vadd.f32 %v4276, %v4416
    %4422 = vmatprep.subr.mxu0 0.0
    %4423 = vmatpush1.msra.mxu0 %v2562
    %4424 = vmatprep.subr.mxu0 0.0
    %4425 = vmatpush1.msra.mxu0 %v2561
    %4426 = vmatprep.subr.mxu0 0.0
    %4427 = vmatpush1.msra.mxu0 %v2560
    %4428 = vmatprep.subr.mxu0 0.0
    %4429 = vmatpush1.msra.mxu0 %v2559
    %4430 = vmatprep.subr.mxu0 0.0
    %4431 = vmatpush1.msra.mxu0 %v2558
    %4432 = vmatprep.subr.mxu0 0.0
    %4433 = vmatpush1.msra.mxu0 %v2557
    %4434 = vmatprep.subr.mxu0 0.0
    %4435 = vmatpush1.msra.mxu0 %v2556
    %4436 = vmatprep.subr.mxu0 0.0
    %4437 = vmatpush1.msra.mxu0 %v2555
    %4438 = vmatprep.subr.mxu0 0.0
    %4439 = vmatpush1.msra.mxu0 %v2554
    %4440 = vmatprep.subr.mxu0 0.0
    %4441 = vmatpush1.msra.mxu0 %v2553
    %4442 = vmatprep.subr.mxu0 0.0
    %4443 = vmatpush1.msra.mxu0 %v2552
    %4444 = vmatprep.subr.mxu0 0.0
    %4445 = vmatpush1.msra.mxu0 %v2551
    %4446 = vmatprep.subr.mxu0 0.0
    %4447 = vmatpush1.msra.mxu0 %v2550
    %4448 = vmatprep.subr.mxu0 0.0
    %4449 = vmatpush1.msra.mxu0 %v2549
    %4450 = vmatprep.subr.mxu0 0.0
    %4451 = vmatpush1.msra.mxu0 %v2548
    %4452 = vmatprep.subr.mxu0 0.0
    %4453 = vmatpush1.msra.mxu0 %v2547
    %4454 = vmatprep.subr.mxu0 0.0
    %4455 = vmatpush2.msra.mxu0 0.0
    %4456 = vmatprep.subr.mxu0 0.0
    %4457 = vmatpush2.msra.mxu0 0.0
    %4458 = vmatprep.subr.mxu0 0.0
    %4459 = vmatpush2.msra.mxu0 0.0
    %4460 = vmatprep.subr.mxu0 0.0
    %4461 = vmatpush2.msra.mxu0 0.0
    %4462 = vmatprep.subr.mxu0 0.0
    %4463 = vmatpush2.msra.mxu0 0.0
    %4464 = vmatprep.subr.mxu0 0.0
    %4465 = vmatpush2.msra.mxu0 0.0
    %4466 = vmatprep.subr.mxu0 0.0
    %4467 = vmatpush2.msra.mxu0 0.0
    %4468 = vmatprep.subr.mxu0 0.0
    %4469 = vmatpush2.msra.mxu0 0.0
    %4470 = vmatprep.subr.mxu0 0.0
    %4471 = vmatpush2.msra.mxu0 0.0
    %4472 = vmatprep.subr.mxu0 0.0
    %4473 = vmatpush2.msra.mxu0 0.0
    %4474 = vmatprep.subr.mxu0 0.0
    %4475 = vmatpush2.msra.mxu0 0.0
    %4476 = vmatprep.subr.mxu0 0.0
    %4477 = vmatpush2.msra.mxu0 0.0
    %4478 = vmatprep.subr.mxu0 0.0
    %4479 = vmatpush2.msra.mxu0 0.0
    %4480 = vmatprep.subr.mxu0 0.0
    %4481 = vmatpush2.msra.mxu0 0.0
    %4482 = vmatprep.subr.mxu0 0.0
    %4483 = vmatpush2.msra.mxu0 0.0
    %4484 = vmatprep.subr.mxu0 0.0
    %4485 = vmatpush2.msra.mxu0 0.0
    %4486 = vmatprep.mubr.f32.mxu0 0.0
    %4487 = vmatmul.mubr.f32.gmra.mxu0 %v4273
    %v4488 = vpop.f32.mrf.mxu0
    %v4489 = vadd.f32 0.0, %v4488
    %v4490 = vpop.f32.mrf.mxu0
    %4491 = vdwg.mxu0
    %v4492 = vadd.f32 %v4277, %v4489
    %v4493 = vmul.f32 %v4419, 0.5
    %v4494 = vmul.f32 %v4420, 0.5
    %v4495 = vmul.f32 %v4421, 0.5
    %v4496 = vtanh.pop %v4493
    %v4497 = vtanh.pop %v4494
    %v4498 = vtanh.pop %v4495
    %v4499 = vmul.f32 %v4496, 0.5
    %v4500 = vmul.f32 %v4497, 0.5
    %v4501 = vmul.f32 %v4498, 0.5
    %v4502 = vadd.f32 %v4499, 0.5
    %v4503 = vadd.f32 %v4500, 0.5
    %v4504 = vadd.f32 %v4501, 0.5
    %v4505 = vtanh.pop %v4492
    %v4506 = vmul.f32 %v4503, %v4271
    %v4507 = vmul.f32 %v4502, %v4505
    %v4508 = vadd.f32 %v4506, %v4507
    %v4509 = vtanh.pop %v4508
    %v4510 = vmul.f32 %v4504, %v4509
    %v4511 = vld [vmem:[%s2193] sm:$0xff]
    %v4512 = vld [vmem:[%s2193 + $0x8] sm:$0xff]
    %v4513 = vld [vmem:[%s2193 + $0x10] sm:$0xff]
    %v4514 = vld [vmem:[%s2193 + $0x18] sm:$0xff]
    %4515 = vmatprep.subr.mxu0 %v2544
    %4516 = vmatpush1.msra.mxu0 %v2543
    %4517 = vmatprep.subr.mxu0 %v2541
    %4518 = vmatpush1.msra.mxu0 %v2540
    %4519 = vmatprep.subr.mxu0 %v2538
    %4520 = vmatpush1.msra.mxu0 %v2537
    %4521 = vmatprep.subr.mxu0 %v2535
    %4522 = vmatpush1.msra.mxu0 %v2534
    %4523 = vmatprep.subr.mxu0 %v2532
    %4524 = vmatpush1.msra.mxu0 %v2531
    %4525 = vmatprep.subr.mxu0 %v2529
    %4526 = vmatpush1.msra.mxu0 %v2528
    %4527 = vmatprep.subr.mxu0 %v2526
    %4528 = vmatpush1.msra.mxu0 %v2525
    %4529 = vmatprep.subr.mxu0 %v2523
    %4530 = vmatpush1.msra.mxu0 %v2522
    %4531 = vmatprep.subr.mxu0 %v2520
    %4532 = vmatpush1.msra.mxu0 %v2519
    %4533 = vmatprep.subr.mxu0 %v2517
    %4534 = vmatpush1.msra.mxu0 %v2516
    %4535 = vmatprep.subr.mxu0 %v2514
    %4536 = vmatpush1.msra.mxu0 %v2513
    %4537 = vmatprep.subr.mxu0 %v2511
    %4538 = vmatpush1.msra.mxu0 %v2510
    %4539 = vmatprep.subr.mxu0 %v2508
    %4540 = vmatpush1.msra.mxu0 %v2507
    %4541 = vmatprep.subr.mxu0 %v2505
    %4542 = vmatpush1.msra.mxu0 %v2504
    %4543 = vmatprep.subr.mxu0 %v2502
    %4544 = vmatpush1.msra.mxu0 %v2501
    %4545 = vmatprep.subr.mxu0 %v2499
    %4546 = vmatpush1.msra.mxu0 %v2498
    %4547 = vmatprep.subr.mxu0 0.0
    %4548 = vmatpush2.msra.mxu0 0.0
    %4549 = vmatprep.subr.mxu0 0.0
    %4550 = vmatpush2.msra.mxu0 0.0
    %4551 = vmatprep.subr.mxu0 0.0
    %4552 = vmatpush2.msra.mxu0 0.0
    %4553 = vmatprep.subr.mxu0 0.0
    %4554 = vmatpush2.msra.mxu0 0.0
    %4555 = vmatprep.subr.mxu0 0.0
    %4556 = vmatpush2.msra.mxu0 0.0
    %4557 = vmatprep.subr.mxu0 0.0
    %4558 = vmatpush2.msra.mxu0 0.0
    %4559 = vmatprep.subr.mxu0 0.0
    %4560 = vmatpush2.msra.mxu0 0.0
    %4561 = vmatprep.subr.mxu0 0.0
    %4562 = vmatpush2.msra.mxu0 0.0
    %4563 = vmatprep.subr.mxu0 0.0
    %4564 = vmatpush2.msra.mxu0 0.0
    %4565 = vmatprep.subr.mxu0 0.0
    %4566 = vmatpush2.msra.mxu0 0.0
    %4567 = vmatprep.subr.mxu0 0.0
    %4568 = vmatpush2.msra.mxu0 0.0
    %4569 = vmatprep.subr.mxu0 0.0
    %4570 = vmatpush2.msra.mxu0 0.0
    %4571 = vmatprep.subr.mxu0 0.0
    %4572 = vmatpush2.msra.mxu0 0.0
    %4573 = vmatprep.subr.mxu0 0.0
    %4574 = vmatpush2.msra.mxu0 0.0
    %4575 = vmatprep.subr.mxu0 0.0
    %4576 = vmatpush2.msra.mxu0 0.0
    %4577 = vmatprep.subr.mxu0 0.0
    %4578 = vmatpush2.msra.mxu0 0.0
    %4579 = vmatprep.mubr.f32.mxu0 0.0
    %4580 = vmatmul.mubr.f32.gmra.mxu0 %v4510
    %v4581 = vpop.f32.mrf.mxu0
    %v4582 = vadd.f32 0.0, %v4581
    %v4583 = vpop.f32.mrf.mxu0
    %v4584 = vadd.f32 0.0, %v4583
    %4585 = vdwg.mxu0
    %4586 = vmatprep.subr.mxu0 0.0
    %4587 = vmatpush1.msra.mxu0 %v2545
    %4588 = vmatprep.subr.mxu0 0.0
    %4589 = vmatpush1.msra.mxu0 %v2542
    %4590 = vmatprep.subr.mxu0 0.0
    %4591 = vmatpush1.msra.mxu0 %v2539
    %4592 = vmatprep.subr.mxu0 0.0
    %4593 = vmatpush1.msra.mxu0 %v2536
    %4594 = vmatprep.subr.mxu0 0.0
    %4595 = vmatpush1.msra.mxu0 %v2533
    %4596 = vmatprep.subr.mxu0 0.0
    %4597 = vmatpush1.msra.mxu0 %v2530
    %4598 = vmatprep.subr.mxu0 0.0
    %4599 = vmatpush1.msra.mxu0 %v2527
    %4600 = vmatprep.subr.mxu0 0.0
    %4601 = vmatpush1.msra.mxu0 %v2524
    %4602 = vmatprep.subr.mxu0 0.0
    %4603 = vmatpush1.msra.mxu0 %v2521
    %4604 = vmatprep.subr.mxu0 0.0
    %4605 = vmatpush1.msra.mxu0 %v2518
    %4606 = vmatprep.subr.mxu0 0.0
    %4607 = vmatpush1.msra.mxu0 %v2515
    %4608 = vmatprep.subr.mxu0 0.0
    %4609 = vmatpush1.msra.mxu0 %v2512
    %4610 = vmatprep.subr.mxu0 0.0
    %4611 = vmatpush1.msra.mxu0 %v2509
    %4612 = vmatprep.subr.mxu0 0.0
    %4613 = vmatpush1.msra.mxu0 %v2506
    %4614 = vmatprep.subr.mxu0 0.0
    %4615 = vmatpush1.msra.mxu0 %v2503
    %4616 = vmatprep.subr.mxu0 0.0
    %4617 = vmatpush1.msra.mxu0 %v2500
    %4618 = vmatprep.subr.mxu0 0.0
    %4619 = vmatpush2.msra.mxu0 0.0
    %4620 = vmatprep.subr.mxu0 0.0
    %4621 = vmatpush2.msra.mxu0 0.0
    %4622 = vmatprep.subr.mxu0 0.0
    %4623 = vmatpush2.msra.mxu0 0.0
    %4624 = vmatprep.subr.mxu0 0.0
    %4625 = vmatpush2.msra.mxu0 0.0
    %4626 = vmatprep.subr.mxu0 0.0
    %4627 = vmatpush2.msra.mxu0 0.0
    %4628 = vmatprep.subr.mxu0 0.0
    %4629 = vmatpush2.msra.mxu0 0.0
    %4630 = vmatprep.subr.mxu0 0.0
    %4631 = vmatpush2.msra.mxu0 0.0
    %4632 = vmatprep.subr.mxu0 0.0
    %4633 = vmatpush2.msra.mxu0 0.0
    %4634 = vmatprep.subr.mxu0 0.0
    %4635 = vmatpush2.msra.mxu0 0.0
    %4636 = vmatprep.subr.mxu0 0.0
    %4637 = vmatpush2.msra.mxu0 0.0
    %4638 = vmatprep.subr.mxu0 0.0
    %4639 = vmatpush2.msra.mxu0 0.0
    %4640 = vmatprep.subr.mxu0 0.0
    %4641 = vmatpush2.msra.mxu0 0.0
    %4642 = vmatprep.subr.mxu0 0.0
    %4643 = vmatpush2.msra.mxu0 0.0
    %4644 = vmatprep.subr.mxu0 0.0
    %4645 = vmatpush2.msra.mxu0 0.0
    %4646 = vmatprep.subr.mxu0 0.0
    %4647 = vmatpush2.msra.mxu0 0.0
    %4648 = vmatprep.subr.mxu0 0.0
    %4649 = vmatpush2.msra.mxu0 0.0
    %4650 = vmatprep.mubr.f32.mxu0 0.0
    %4651 = vmatmul.mubr.f32.gmra.mxu0 %v4510
    %v4652 = vpop.f32.mrf.mxu0
    %v4653 = vadd.f32 0.0, %v4652
    %v4654 = vpop.f32.mrf.mxu0
    %4655 = vdwg.mxu0
    %v4656 = vadd.f32 %v4511, %v4582
    %v4657 = vadd.f32 %v4512, %v4584
    %v4658 = vadd.f32 %v4513, %v4653
    %4659 = vmatprep.subr.mxu0 0.0
    %4660 = vmatpush1.msra.mxu0 %v2562
    %4661 = vmatprep.subr.mxu0 0.0
    %4662 = vmatpush1.msra.mxu0 %v2561
    %4663 = vmatprep.subr.mxu0 0.0
    %4664 = vmatpush1.msra.mxu0 %v2560
    %4665 = vmatprep.subr.mxu0 0.0
    %4666 = vmatpush1.msra.mxu0 %v2559
    %4667 = vmatprep.subr.mxu0 0.0
    %4668 = vmatpush1.msra.mxu0 %v2558
    %4669 = vmatprep.subr.mxu0 0.0
    %4670 = vmatpush1.msra.mxu0 %v2557
    %4671 = vmatprep.subr.mxu0 0.0
    %4672 = vmatpush1.msra.mxu0 %v2556
    %4673 = vmatprep.subr.mxu0 0.0
    %4674 = vmatpush1.msra.mxu0 %v2555
    %4675 = vmatprep.subr.mxu0 0.0
    %4676 = vmatpush1.msra.mxu0 %v2554
    %4677 = vmatprep.subr.mxu0 0.0
    %4678 = vmatpush1.msra.mxu0 %v2553
    %4679 = vmatprep.subr.mxu0 0.0
    %4680 = vmatpush1.msra.mxu0 %v2552
    %4681 = vmatprep.subr.mxu0 0.0
    %4682 = vmatpush1.msra.mxu0 %v2551
    %4683 = vmatprep.subr.mxu0 0.0
    %4684 = vmatpush1.msra.mxu0 %v2550
    %4685 = vmatprep.subr.mxu0 0.0
    %4686 = vmatpush1.msra.mxu0 %v2549
    %4687 = vmatprep.subr.mxu0 0.0
    %4688 = vmatpush1.msra.mxu0 %v2548
    %4689 = vmatprep.subr.mxu0 0.0
    %4690 = vmatpush1.msra.mxu0 %v2547
    %4691 = vmatprep.subr.mxu0 0.0
    %4692 = vmatpush2.msra.mxu0 0.0
    %4693 = vmatprep.subr.mxu0 0.0
    %4694 = vmatpush2.msra.mxu0 0.0
    %4695 = vmatprep.subr.mxu0 0.0
    %4696 = vmatpush2.msra.mxu0 0.0
    %4697 = vmatprep.subr.mxu0 0.0
    %4698 = vmatpush2.msra.mxu0 0.0
    %4699 = vmatprep.subr.mxu0 0.0
    %4700 = vmatpush2.msra.mxu0 0.0
    %4701 = vmatprep.subr.mxu0 0.0
    %4702 = vmatpush2.msra.mxu0 0.0
    %4703 = vmatprep.subr.mxu0 0.0
    %4704 = vmatpush2.msra.mxu0 0.0
    %4705 = vmatprep.subr.mxu0 0.0
    %4706 = vmatpush2.msra.mxu0 0.0
    %4707 = vmatprep.subr.mxu0 0.0
    %4708 = vmatpush2.msra.mxu0 0.0
    %4709 = vmatprep.subr.mxu0 0.0
    %4710 = vmatpush2.msra.mxu0 0.0
    %4711 = vmatprep.subr.mxu0 0.0
    %4712 = vmatpush2.msra.mxu0 0.0
    %4713 = vmatprep.subr.mxu0 0.0
    %4714 = vmatpush2.msra.mxu0 0.0
    %4715 = vmatprep.subr.mxu0 0.0
    %4716 = vmatpush2.msra.mxu0 0.0
    %4717 = vmatprep.subr.mxu0 0.0
    %4718 = vmatpush2.msra.mxu0 0.0
    %4719 = vmatprep.subr.mxu0 0.0
    %4720 = vmatpush2.msra.mxu0 0.0
    %4721 = vmatprep.subr.mxu0 0.0
    %4722 = vmatpush2.msra.mxu0 0.0
    %4723 = vmatprep.mubr.f32.mxu0 0.0
    %4724 = vmatmul.mubr.f32.gmra.mxu0 %v4510
    %v4725 = vpop.f32.mrf.mxu0
    %v4726 = vadd.f32 0.0, %v4725
    %v4727 = vpop.f32.mrf.mxu0
    %4728 = vdwg.mxu0
    %v4729 = vadd.f32 %v4514, %v4726
    %v4730 = vmul.f32 %v4656, 0.5
    %v4731 = vmul.f32 %v4657, 0.5
    %v4732 = vmul.f32 %v4658, 0.5
    %v4733 = vtanh.pop %v4730
    %v4734 = vtanh.pop %v4731
    %v4735 = vtanh.pop %v4732
    %v4736 = vmul.f32 %v4733, 0.5
    %v4737 = vmul.f32 %v4734, 0.5
    %v4738 = vmul.f32 %v4735, 0.5
    %v4739 = vadd.f32 %v4736, 0.5
    %v4740 = vadd.f32 %v4737, 0.5
    %v4741 = vadd.f32 %v4738, 0.5
    %v4742 = vtanh.pop %v4729
    %v4743 = vmul.f32 %v4740, %v4508
    %v4744 = vmul.f32 %v4739, %v4742
    %v4745 = vadd.f32 %v4743, %v4744
    %v4746 = vtanh.pop %v4745
    %v4747 = vmul.f32 %v4741, %v4746
    %v4748 = vld [vmem:[%s6] sm:$0x1]
    %v4750 = vlaneseq
    %v4751 = vshrl.u32 %v4750, 7
    %v4752 = vsub.s32 0, %v4751
    %v4753 = vrot.slane %v4748, %v4752
    %v4755 = vmul.f32 %v4747, %v4753
    %4756 = vadd.xlane.f32.xlu0 %v4755
    %v4757 = vpop.xlane.xlu0 %4756
    %v4758 = vld [vmem:[#allocation4] sm:$0x1]
    %v4760 = vlaneseq
    %v4761 = vshrl.u32 %v4760, 7
    %v4762 = vsub.s32 0, %v4761
    %v4763 = vrot.slane %v4758, %v4762
    %v4765 = vadd.f32 %v4757, %v4763
    %vm4766 = vcmask 7168
    %4767 = vst.msk [vmem:[%s8] sm:$0xff] %vm4766, %v4765
    // Predicated region
    $region54: #{tpu_custom_call.1} parent=1 // pred_check
      _
    $region55: #{tpu_custom_call.1} parent=1 // pred_check_branch
      %4769 = sbr.rel (0) target = $region57
    $region56: #{tpu_custom_call.1} parent=1 // pred_region
      _
    $region57: #{tpu_custom_call.1} parent=1 // pred_fallthru
      _
    // Predicated region
    $region58: #{tpu_custom_call.1} parent=1 // pred_check
      _
    $region59: #{tpu_custom_call.1} parent=1 // pred_check_branch
      %4771 = sbr.rel (0) target = $region61
    $region60: #{tpu_custom_call.1} parent=1 // pred_region
      _
    $region61: #{tpu_custom_call.1} parent=1 // pred_fallthru
      _
    %4772 = vsyncpa [#allocation6], 1
    %4773 = vsyncpa [#allocation8], 1
    %4774 = vsyncpa [#allocation11], 1

</llo_original>
